<compile_context>
chip_gen: v7x
topology: tpu7x:2x2x1
jax: 0.10.0
libtpu: 0.0.40
codegen_flags: <defaults>
</compile_context>

<pallas_src>
import functools

import jax
import jax.numpy as jnp
from jax import lax
from jax.experimental import pallas as pl
from jax.experimental.pallas import tpu as pltpu


# ----------------------------- small config ---------------------------------
NUM_LAYERS = 2
NUM_HEADS = 4
VOCAB_SIZE = 256
HIDDEN = 64
MAX_SEQ_LEN = 16
LN_EPS = 1e-5

BATCH = 2
SEQ = 8


# ------------------------------ kernel helpers -------------------------------
def _layer_norm(x, gamma, beta, eps):
    # x: (S, H) f32; gamma/beta: (H,) f32
    mean = jnp.mean(x, axis=-1, keepdims=True)
    var = jnp.mean(jnp.square(x - mean), axis=-1, keepdims=True)
    return (x - mean) * lax.rsqrt(var + eps) * gamma + beta


# ------------------------------ fused kernel ---------------------------------
def gpt2_fused_kernel(ids_ref, wte_ref, wte_t_ref, wpe_ref,
                      ln1g_ref, ln1b_ref, wqkv_ref, bqkv_ref, wo_ref, bo_ref,
                      ln2g_ref, ln2b_ref, w1_ref, b1_ref, w2_ref, b2_ref,
                      lnfg_ref, lnfb_ref,
                      out_ref,
                      *, num_layers, num_heads, seq, eps):
    f32 = jnp.float32
    bf16 = jnp.bfloat16
    vocab, hidden = wte_ref.shape
    dh = hidden // num_heads

    # ---- token embedding: one-hot (S, V) @ wte (V, H) on the MXU ----
    ids = ids_ref[...]                                        # (S, 1) int32
    vcol = lax.broadcasted_iota(jnp.int32, (seq, vocab), 1)
    tok_oh = (vcol == ids).astype(bf16)
    x = jnp.dot(tok_oh, wte_ref[...], preferred_element_type=f32)   # (S, H) f32

    # ---- position embedding (rows 0..S-1, pre-sliced in the wrapper) ----
    x = x + wpe_ref[...]                                      # f32

    # ---- causal additive mask (per grid step == per batch element) ----
    r = lax.broadcasted_iota(jnp.int32, (seq, seq), 0)
    c = lax.broadcasted_iota(jnp.int32, (seq, seq), 1)
    mask_bias = jnp.where(c <= r, f32(0.0), f32(-1e30))       # (S, S)

    # ---- decoder blocks: statically unrolled, weights stacked on axis 0 ----
    for l in range(num_layers):
        # --- attention: x + W_O(softmax(mask(QK^T / sqrt(dh))) V) ---
        xn = _layer_norm(x, ln1g_ref[l], ln1b_ref[l], eps)            # (S, H)
        # One fused lane-dense QKV projection (scale already folded into Q).
        qkv = jnp.dot(xn.astype(bf16), wqkv_ref[l],
                      preferred_element_type=f32) + bqkv_ref[l]       # (S, 3H)
        q = jnp.stack([qkv[:, 0 * hidden + h * dh: 0 * hidden + (h + 1) * dh]
                       for h in range(num_heads)]).astype(bf16)       # (nh,S,dh)
        k = jnp.stack([qkv[:, 1 * hidden + h * dh: 1 * hidden + (h + 1) * dh]
                       for h in range(num_heads)]).astype(bf16)
        v = jnp.stack([qkv[:, 2 * hidden + h * dh: 2 * hidden + (h + 1) * dh]
                       for h in range(num_heads)]).astype(bf16)
        s = jnp.einsum('hqd,hkd->hqk', q, k,
                       preferred_element_type=f32)                    # (nh,S,S)
        s = s + mask_bias[None]
        m = jnp.max(s, axis=-1, keepdims=True)
        e = jnp.exp(s - m)
        p = e * pl.reciprocal(jnp.sum(e, axis=-1, keepdims=True), approx=True)
        o = jnp.einsum('hqk,hkd->hqd', p.astype(bf16), v,
                       preferred_element_type=f32)                    # (nh,S,dh)
        # Merge heads along lanes and apply the original 2-D W_O.
        z = jnp.concatenate([o[h] for h in range(num_heads)], axis=-1)  # (S, H)
        x = x + jnp.dot(z.astype(bf16), wo_ref[l],
                        preferred_element_type=f32) + bo_ref[l]

        # --- MLP: x + W2(gelu(W1 ln2(x))) ---
        xn2 = _layer_norm(x, ln2g_ref[l], ln2b_ref[l], eps)
        h1 = jnp.dot(xn2.astype(bf16), w1_ref[l],
                     preferred_element_type=f32) + b1_ref[l]
        h1 = jax.nn.gelu(h1, approximate=True)   # GPT-2 "gelu_new" (tanh) GELU
        x = x + jnp.dot(h1.astype(bf16), w2_ref[l],
                        preferred_element_type=f32) + b2_ref[l]

    # ---- final LN + tied-embedding logits via pre-transposed wte_T (H, V) ----
    xf = _layer_norm(x, lnfg_ref[0], lnfb_ref[0], eps)
    out_ref[...] = jnp.dot(xf.astype(bf16), wte_t_ref[...],
                           preferred_element_type=f32)                # (S, V)
    # TODO(synk): at real vocab sizes, stream wte_T over a reduction grid axis
    # and replace the one-hot embedding matmul with a scalar-prefetch gather.


# ------------------------------- params --------------------------------------
def init_params(key):
    """Natural (torch-like) parameter layout; weights stored as (in, out)."""
    def dense(k, fan_in, fan_out):
        return jax.random.normal(k, (fan_in, fan_out), jnp.float32) * 0.02

    keys = jax.random.split(key, 2 + 4 * NUM_LAYERS)
    params = {
        "wte": jax.random.normal(keys[0], (VOCAB_SIZE, HIDDEN), jnp.float32) * 0.02,
        "wpe": jax.random.normal(keys[1], (MAX_SEQ_LEN, HIDDEN), jnp.float32) * 0.02,
        "ln_f_g": jnp.ones((HIDDEN,), jnp.float32),
        "ln_f_b": jnp.zeros((HIDDEN,), jnp.float32),
        "blocks": [],
    }
    for l in range(NUM_LAYERS):
        k0, k1, k2, k3 = keys[2 + 4 * l: 6 + 4 * l]
        params["blocks"].append(dict(
            ln1_g=jnp.ones((HIDDEN,), jnp.float32),
            ln1_b=jnp.zeros((HIDDEN,), jnp.float32),
            w_qkv=dense(k0, HIDDEN, 3 * HIDDEN),
            b_qkv=jnp.zeros((3 * HIDDEN,), jnp.float32),
            w_o=dense(k1, HIDDEN, HIDDEN),
            b_o=jnp.zeros((HIDDEN,), jnp.float32),
            ln2_g=jnp.ones((HIDDEN,), jnp.float32),
            ln2_b=jnp.zeros((HIDDEN,), jnp.float32),
            w1=dense(k2, HIDDEN, 4 * HIDDEN),
            b1=jnp.zeros((4 * HIDDEN,), jnp.float32),
            w2=dense(k3, 4 * HIDDEN, HIDDEN),
            b2=jnp.zeros((HIDDEN,), jnp.float32),
        ))
    return params


def pack_params(p):
    """One-time (free) layout plumbing: stack layers, fold the softmax scale
    into the Q projection, pre-transpose wte for the logits, cast matmul
    weights to bf16 (biases / LN params stay f32)."""
    L, H = NUM_LAYERS, HIDDEN
    dh = H // NUM_HEADS
    bf16 = jnp.bfloat16
    scale = 1.0 / float(dh) ** 0.5            # power of two -> exact fold

    def stack(name):
        return jnp.stack([blk[name] for blk in p["blocks"]])

    wqkv = stack("w_qkv")                      # (L, H, 3H), columns head-major
    bqkv = stack("b_qkv")                      # (L, 3H)
    q_scale = jnp.concatenate([jnp.full((H,), scale, jnp.float32),
                               jnp.ones((2 * H,), jnp.float32)])
    wqkv = wqkv * q_scale                      # scale only the Q columns
    bqkv = bqkv * q_scale

    return dict(
        wte=p["wte"].astype(bf16),             # (V, H) for the embedding gather
        wte_t=p["wte"].T.astype(bf16),         # (H, V) for the logits matmul
        wpe=p["wpe"],                          # f32 (elementwise add)
        ln1_g=stack("ln1_g"), ln1_b=stack("ln1_b"),
        w_qkv=wqkv.astype(bf16), b_qkv=bqkv,
        w_o=stack("w_o").astype(bf16), b_o=stack("b_o"),
        ln2_g=stack("ln2_g"), ln2_b=stack("ln2_b"),
        w1=stack("w1").astype(bf16), b1=stack("b1"),
        w2=stack("w2").astype(bf16), b2=stack("b2"),
        ln_f_g=p["ln_f_g"].reshape(1, H),
        ln_f_b=p["ln_f_b"].reshape(1, H),
    )


# ------------------------------- forward --------------------------------------
def gpt2_forward(token_ids, packed):
    # token_ids: (B, S) int -- or (S,) which is unsqueezed like the reference.
    if token_ids.ndim == 1:
        token_ids = token_ids[None, :]
    B, S = token_ids.shape
    ids = token_ids.reshape(B * S, 1).astype(jnp.int32)
    wpe_s = packed["wpe"][:S]                  # (S, H) f32, free wrapper slice

    kernel = functools.partial(
        gpt2_fused_kernel,
        num_layers=NUM_LAYERS, num_heads=NUM_HEADS, seq=S, eps=LN_EPS)

    args = (ids, packed["wte"], packed["wte_t"], wpe_s,
            packed["ln1_g"], packed["ln1_b"],
            packed["w_qkv"], packed["b_qkv"], packed["w_o"], packed["b_o"],
            packed["ln2_g"], packed["ln2_b"],
            packed["w1"], packed["b1"], packed["w2"], packed["b2"],
            packed["ln_f_g"], packed["ln_f_b"])

    vmem = pl.BlockSpec(memory_space=pltpu.MemorySpace.VMEM)  # whole array resident
    in_specs = [pl.BlockSpec((S, 1), lambda b: (b, 0))] + [vmem] * (len(args) - 1)
    out_specs = pl.BlockSpec((S, VOCAB_SIZE), lambda b: (b, 0))

    logits = pl.pallas_call(
        kernel,
        grid=(B,),                                            # one step per batch
        out_shape=jax.ShapeDtypeStruct((B * S, VOCAB_SIZE), jnp.float32),
        in_specs=in_specs,
        out_specs=out_specs,
        compiler_params=pltpu.CompilerParams(
            dimension_semantics=("parallel",),                # v7x: 2 TCs share batch
            vmem_limit_bytes=32 * 1024 * 1024),
    )(*args)
    return logits.reshape(B, S, VOCAB_SIZE)


if __name__ == "__main__":
    key = jax.random.PRNGKey(0)
    pkey, dkey = jax.random.split(key)
    params = pack_params(init_params(pkey))
    token_ids = jax.random.randint(dkey, (BATCH, SEQ), 0, VOCAB_SIZE, dtype=jnp.int32)

    logits = jax.jit(gpt2_forward)(token_ids, params)
    jax.block_until_ready(logits)
    assert logits.shape == (BATCH, SEQ, VOCAB_SIZE), logits.shape
    print("KERNEL_OK")
</pallas_src>

<mosaic_0001>
module attributes {stable_mosaic.version = 11 : i64} {
  func.func @gpt2_fused_kernel(%arg0: i32, %arg1: memref<8x1xi32, #tpu.memory_space<vmem>>, %arg2: memref<256x64xbf16, #tpu.memory_space<vmem>>, %arg3: memref<64x256xbf16, #tpu.memory_space<vmem>>, %arg4: memref<8x64xf32, #tpu.memory_space<vmem>>, %arg5: memref<2x64xf32, #tpu.memory_space<vmem>>, %arg6: memref<2x64xf32, #tpu.memory_space<vmem>>, %arg7: memref<2x64x192xbf16, #tpu.memory_space<vmem>>, %arg8: memref<2x192xf32, #tpu.memory_space<vmem>>, %arg9: memref<2x64x64xbf16, #tpu.memory_space<vmem>>, %arg10: memref<2x64xf32, #tpu.memory_space<vmem>>, %arg11: memref<2x64xf32, #tpu.memory_space<vmem>>, %arg12: memref<2x64xf32, #tpu.memory_space<vmem>>, %arg13: memref<2x64x256xbf16, #tpu.memory_space<vmem>>, %arg14: memref<2x256xf32, #tpu.memory_space<vmem>>, %arg15: memref<2x256x64xbf16, #tpu.memory_space<vmem>>, %arg16: memref<2x64xf32, #tpu.memory_space<vmem>>, %arg17: memref<1x64xf32, #tpu.memory_space<vmem>>, %arg18: memref<1x64xf32, #tpu.memory_space<vmem>>, %arg19: memref<8x256xf32, #tpu.memory_space<vmem>>) attributes {dimension_semantics = [#tpu.dimension_semantics<parallel>], iteration_bounds = array<i64: 2>, scalar_prefetch = 0 : i64, scratch_operands = 0 : i64, tpu.core_type = #tpu.core_type<tc>, window_params = [{transform_indices = @transform_0, window_bounds = array<i64: 8, 1>}, {pipeline_mode = #tpu.pipeline_mode<synchronous>, transform_indices = @transform_1, window_bounds = array<i64: 256, 64>}, {pipeline_mode = #tpu.pipeline_mode<synchronous>, transform_indices = @transform_2, window_bounds = array<i64: 64, 256>}, {pipeline_mode = #tpu.pipeline_mode<synchronous>, transform_indices = @transform_3, window_bounds = array<i64: 8, 64>}, {pipeline_mode = #tpu.pipeline_mode<synchronous>, transform_indices = @transform_4, window_bounds = array<i64: 2, 64>}, {pipeline_mode = #tpu.pipeline_mode<synchronous>, transform_indices = @transform_5, window_bounds = array<i64: 2, 64>}, {pipeline_mode = #tpu.pipeline_mode<synchronous>, transform_indices = @transform_6, window_bounds = array<i64: 2, 64, 192>}, {pipeline_mode = #tpu.pipeline_mode<synchronous>, transform_indices = @transform_7, window_bounds = array<i64: 2, 192>}, {pipeline_mode = #tpu.pipeline_mode<synchronous>, transform_indices = @transform_8, window_bounds = array<i64: 2, 64, 64>}, {pipeline_mode = #tpu.pipeline_mode<synchronous>, transform_indices = @transform_9, window_bounds = array<i64: 2, 64>}, {pipeline_mode = #tpu.pipeline_mode<synchronous>, transform_indices = @transform_10, window_bounds = array<i64: 2, 64>}, {pipeline_mode = #tpu.pipeline_mode<synchronous>, transform_indices = @transform_11, window_bounds = array<i64: 2, 64>}, {pipeline_mode = #tpu.pipeline_mode<synchronous>, transform_indices = @transform_12, window_bounds = array<i64: 2, 64, 256>}, {pipeline_mode = #tpu.pipeline_mode<synchronous>, transform_indices = @transform_13, window_bounds = array<i64: 2, 256>}, {pipeline_mode = #tpu.pipeline_mode<synchronous>, transform_indices = @transform_14, window_bounds = array<i64: 2, 256, 64>}, {pipeline_mode = #tpu.pipeline_mode<synchronous>, transform_indices = @transform_15, window_bounds = array<i64: 2, 64>}, {pipeline_mode = #tpu.pipeline_mode<synchronous>, transform_indices = @transform_16, window_bounds = array<i64: 1, 64>}, {pipeline_mode = #tpu.pipeline_mode<synchronous>, transform_indices = @transform_17, window_bounds = array<i64: 1, 64>}, {transform_indices = @transform_18, window_bounds = array<i64: 8, 256>}]} {
    %c0 = arith.constant 0 : index
    %c0_0 = arith.constant 0 : index
    %0 = vector.load %arg1[%c0, %c0_0] : memref<8x1xi32, #tpu.memory_space<vmem>>, vector<8x1xi32>
    %1 = tpu.iota {dimensions = array<i32: 1>} : vector<8x256xi32>
    %2 = vector.broadcast %0 : vector<8x1xi32> to vector<8x256xi32>
    %3 = arith.cmpi eq, %1, %2 : vector<8x256xi32>
    %4 = arith.extui %3 : vector<8x256xi1> to vector<8x256xi32>
    %5 = arith.sitofp %4 : vector<8x256xi32> to vector<8x256xf32>
    %6 = arith.truncf %5 : vector<8x256xf32> to vector<8x256xbf16>
    %c0_1 = arith.constant 0 : index
    %c0_2 = arith.constant 0 : index
    %7 = vector.load %arg2[%c0_1, %c0_2] : memref<256x64xbf16, #tpu.memory_space<vmem>>, vector<256x64xbf16>
    %cst = arith.constant dense<0.000000e+00> : vector<8x64xf32>
    %8 = tpu.matmul %6, %7, %cst {dimension_numbers = #tpu.dot_dimension_numbers<[1], [0], [0], [1], [0, 0, 1, 1], [], []>} : vector<8x256xbf16>, vector<256x64xbf16>, vector<8x64xf32> -> vector<8x64xf32>
    %c0_3 = arith.constant 0 : index
    %c0_4 = arith.constant 0 : index
    %9 = vector.load %arg4[%c0_3, %c0_4] : memref<8x64xf32, #tpu.memory_space<vmem>>, vector<8x64xf32>
    %10 = arith.addf %8, %9 : vector<8x64xf32>
    %11 = tpu.iota {dimensions = array<i32: 0>} : vector<8x8xi32>
    %12 = tpu.iota {dimensions = array<i32: 1>} : vector<8x8xi32>
    %13 = arith.cmpi sle, %12, %11 : vector<8x8xi32>
    %cst_5 = arith.constant 0.000000e+00 : f32
    %cst_6 = arith.constant -1.000000e+30 : f32
    %14 = vector.broadcast %cst_5 : f32 to vector<8x8xf32>
    %15 = vector.broadcast %cst_6 : f32 to vector<8x8xf32>
    %16 = arith.select %13, %14, %15 : vector<8x8xi1>, vector<8x8xf32>
    %c0_7 = arith.constant 0 : index
    %c0_8 = arith.constant 0 : index
    %17 = vector.load %arg5[%c0_7, %c0_8] : memref<2x64xf32, #tpu.memory_space<vmem>>, vector<1x64xf32>
    %18 = vector.shape_cast %17 : vector<1x64xf32> to vector<64xf32>
    %c0_9 = arith.constant 0 : index
    %c0_10 = arith.constant 0 : index
    %19 = vector.load %arg6[%c0_9, %c0_10] : memref<2x64xf32, #tpu.memory_space<vmem>>, vector<1x64xf32>
    %20 = vector.shape_cast %19 : vector<1x64xf32> to vector<64xf32>
    %cst_11 = arith.constant dense<0.000000e+00> : vector<8xf32>
    %21 = vector.multi_reduction <add>, %10, %cst_11 [1] : vector<8x64xf32> to vector<8xf32>
    %22 = vector.shape_cast %21 : vector<8xf32> to vector<8x1xf32>
    %cst_12 = arith.constant 6.400000e+01 : f32
    %23 = vector.broadcast %cst_12 : f32 to vector<8x1xf32>
    %24 = arith.divf %22, %23 : vector<8x1xf32>
    %25 = vector.broadcast %24 : vector<8x1xf32> to vector<8x64xf32>
    %26 = arith.subf %10, %25 : vector<8x64xf32>
    %27 = arith.mulf %26, %26 : vector<8x64xf32>
    %cst_13 = arith.constant dense<0.000000e+00> : vector<8xf32>
    %28 = vector.multi_reduction <add>, %27, %cst_13 [1] : vector<8x64xf32> to vector<8xf32>
    %29 = vector.shape_cast %28 : vector<8xf32> to vector<8x1xf32>
    %cst_14 = arith.constant 6.400000e+01 : f32
    %30 = vector.broadcast %cst_14 : f32 to vector<8x1xf32>
    %31 = arith.divf %29, %30 : vector<8x1xf32>
    %32 = vector.broadcast %24 : vector<8x1xf32> to vector<8x64xf32>
    %33 = arith.subf %10, %32 : vector<8x64xf32>
    %cst_15 = arith.constant 9.99999974E-6 : f32
    %34 = vector.broadcast %cst_15 : f32 to vector<8x1xf32>
    %35 = arith.addf %31, %34 : vector<8x1xf32>
    %36 = math.rsqrt %35 : vector<8x1xf32>
    %37 = vector.broadcast %36 : vector<8x1xf32> to vector<8x64xf32>
    %38 = arith.mulf %33, %37 : vector<8x64xf32>
    %39 = vector.shape_cast %18 : vector<64xf32> to vector<1x64xf32>
    %40 = vector.broadcast %39 : vector<1x64xf32> to vector<8x64xf32>
    %41 = arith.mulf %38, %40 : vector<8x64xf32>
    %42 = vector.shape_cast %20 : vector<64xf32> to vector<1x64xf32>
    %43 = vector.broadcast %42 : vector<1x64xf32> to vector<8x64xf32>
    %44 = arith.addf %41, %43 : vector<8x64xf32>
    %45 = arith.truncf %44 : vector<8x64xf32> to vector<8x64xbf16>
    %c0_16 = arith.constant 0 : index
    %c0_17 = arith.constant 0 : index
    %c0_18 = arith.constant 0 : index
    %46 = vector.load %arg7[%c0_16, %c0_17, %c0_18] : memref<2x64x192xbf16, #tpu.memory_space<vmem>>, vector<1x64x192xbf16>
    %47 = vector.shape_cast %46 : vector<1x64x192xbf16> to vector<64x192xbf16>
    %cst_19 = arith.constant dense<0.000000e+00> : vector<8x192xf32>
    %48 = tpu.matmul %45, %47, %cst_19 {dimension_numbers = #tpu.dot_dimension_numbers<[1], [0], [0], [1], [0, 0, 1, 1], [], []>} : vector<8x64xbf16>, vector<64x192xbf16>, vector<8x192xf32> -> vector<8x192xf32>
    %c0_20 = arith.constant 0 : index
    %c0_21 = arith.constant 0 : index
    %49 = vector.load %arg8[%c0_20, %c0_21] : memref<2x192xf32, #tpu.memory_space<vmem>>, vector<1x192xf32>
    %50 = vector.shape_cast %49 : vector<1x192xf32> to vector<192xf32>
    %51 = vector.shape_cast %50 : vector<192xf32> to vector<1x192xf32>
    %52 = vector.broadcast %51 : vector<1x192xf32> to vector<8x192xf32>
    %53 = arith.addf %48, %52 : vector<8x192xf32>
    %54 = vector.extract_strided_slice %53 {offsets = [0, 0], sizes = [8, 16], strides = [1, 1]} : vector<8x192xf32> to vector<8x16xf32>
    %55 = vector.extract_strided_slice %53 {offsets = [0, 16], sizes = [8, 16], strides = [1, 1]} : vector<8x192xf32> to vector<8x16xf32>
    %56 = vector.extract_strided_slice %53 {offsets = [0, 32], sizes = [8, 16], strides = [1, 1]} : vector<8x192xf32> to vector<8x16xf32>
    %57 = vector.extract_strided_slice %53 {offsets = [0, 48], sizes = [8, 16], strides = [1, 1]} : vector<8x192xf32> to vector<8x16xf32>
    %58 = vector.shape_cast %54 : vector<8x16xf32> to vector<1x8x16xf32>
    %59 = vector.shape_cast %55 : vector<8x16xf32> to vector<1x8x16xf32>
    %60 = vector.shape_cast %56 : vector<8x16xf32> to vector<1x8x16xf32>
    %61 = vector.shape_cast %57 : vector<8x16xf32> to vector<1x8x16xf32>
    %62 = tpu.concatenate %58, %59, %60, %61 in 0 : vector<1x8x16xf32>, vector<1x8x16xf32>, vector<1x8x16xf32>, vector<1x8x16xf32> -> vector<4x8x16xf32>
    %63 = arith.truncf %62 : vector<4x8x16xf32> to vector<4x8x16xbf16>
    %64 = vector.extract_strided_slice %53 {offsets = [0, 64], sizes = [8, 16], strides = [1, 1]} : vector<8x192xf32> to vector<8x16xf32>
    %65 = vector.extract_strided_slice %53 {offsets = [0, 80], sizes = [8, 16], strides = [1, 1]} : vector<8x192xf32> to vector<8x16xf32>
    %66 = vector.extract_strided_slice %53 {offsets = [0, 96], sizes = [8, 16], strides = [1, 1]} : vector<8x192xf32> to vector<8x16xf32>
    %67 = vector.extract_strided_slice %53 {offsets = [0, 112], sizes = [8, 16], strides = [1, 1]} : vector<8x192xf32> to vector<8x16xf32>
    %68 = vector.shape_cast %64 : vector<8x16xf32> to vector<1x8x16xf32>
    %69 = vector.shape_cast %65 : vector<8x16xf32> to vector<1x8x16xf32>
    %70 = vector.shape_cast %66 : vector<8x16xf32> to vector<1x8x16xf32>
    %71 = vector.shape_cast %67 : vector<8x16xf32> to vector<1x8x16xf32>
    %72 = tpu.concatenate %68, %69, %70, %71 in 0 : vector<1x8x16xf32>, vector<1x8x16xf32>, vector<1x8x16xf32>, vector<1x8x16xf32> -> vector<4x8x16xf32>
    %73 = arith.truncf %72 : vector<4x8x16xf32> to vector<4x8x16xbf16>
    %74 = vector.extract_strided_slice %53 {offsets = [0, 128], sizes = [8, 16], strides = [1, 1]} : vector<8x192xf32> to vector<8x16xf32>
    %75 = vector.extract_strided_slice %53 {offsets = [0, 144], sizes = [8, 16], strides = [1, 1]} : vector<8x192xf32> to vector<8x16xf32>
    %76 = vector.extract_strided_slice %53 {offsets = [0, 160], sizes = [8, 16], strides = [1, 1]} : vector<8x192xf32> to vector<8x16xf32>
    %77 = vector.extract_strided_slice %53 {offsets = [0, 176], sizes = [8, 16], strides = [1, 1]} : vector<8x192xf32> to vector<8x16xf32>
    %78 = vector.shape_cast %74 : vector<8x16xf32> to vector<1x8x16xf32>
    %79 = vector.shape_cast %75 : vector<8x16xf32> to vector<1x8x16xf32>
    %80 = vector.shape_cast %76 : vector<8x16xf32> to vector<1x8x16xf32>
    %81 = vector.shape_cast %77 : vector<8x16xf32> to vector<1x8x16xf32>
    %82 = tpu.concatenate %78, %79, %80, %81 in 0 : vector<1x8x16xf32>, vector<1x8x16xf32>, vector<1x8x16xf32>, vector<1x8x16xf32> -> vector<4x8x16xf32>
    %83 = arith.truncf %82 : vector<4x8x16xf32> to vector<4x8x16xbf16>
    "tpu.trace_start"() <{level = 10 : i32, message = "hqd,hkd->hqk"}> : () -> ()
    %cst_22 = arith.constant dense<0.000000e+00> : vector<4x8x8xf32>
    %84 = tpu.matmul %63, %73, %cst_22 {dimension_numbers = #tpu.dot_dimension_numbers<[2], [2], [1], [1], [0, 0, 0, 1, 1, 1], [0], [0]>} : vector<4x8x16xbf16>, vector<4x8x16xbf16>, vector<4x8x8xf32> -> vector<4x8x8xf32>
    "tpu.trace_stop"() : () -> ()
    %85 = vector.shape_cast %16 : vector<8x8xf32> to vector<1x8x8xf32>
    %86 = vector.broadcast %85 : vector<1x8x8xf32> to vector<4x8x8xf32>
    %87 = arith.addf %84, %86 : vector<4x8x8xf32>
    %cst_23 = arith.constant dense<0xFF800000> : vector<4x8xf32>
    %88 = vector.multi_reduction <maximumf>, %87, %cst_23 [2] : vector<4x8x8xf32> to vector<4x8xf32>
    %89 = vector.shape_cast %88 : vector<4x8xf32> to vector<4x8x1xf32>
    %90 = vector.broadcast %89 : vector<4x8x1xf32> to vector<4x8x8xf32>
    %91 = arith.subf %87, %90 : vector<4x8x8xf32>
    %92 = math.exp %91 : vector<4x8x8xf32>
    %cst_24 = arith.constant dense<0.000000e+00> : vector<4x8xf32>
    %93 = vector.multi_reduction <add>, %92, %cst_24 [2] : vector<4x8x8xf32> to vector<4x8xf32>
    %94 = vector.shape_cast %93 : vector<4x8xf32> to vector<4x8x1xf32>
    %95 = tpu.reciprocal %94 {approx = true} : vector<4x8x1xf32> -> vector<4x8x1xf32>
    %96 = vector.broadcast %95 : vector<4x8x1xf32> to vector<4x8x8xf32>
    %97 = arith.mulf %92, %96 : vector<4x8x8xf32>
    %98 = arith.truncf %97 : vector<4x8x8xf32> to vector<4x8x8xbf16>
    "tpu.trace_start"() <{level = 10 : i32, message = "hqk,hkd->hqd"}> : () -> ()
    %cst_25 = arith.constant dense<0.000000e+00> : vector<4x8x16xf32>
    %99 = tpu.matmul %98, %83, %cst_25 {dimension_numbers = #tpu.dot_dimension_numbers<[2], [1], [1], [2], [0, 0, 0, 1, 1, 2], [0], [0]>} : vector<4x8x8xbf16>, vector<4x8x16xbf16>, vector<4x8x16xf32> -> vector<4x8x16xf32>
    "tpu.trace_stop"() : () -> ()
    %100 = vector.extract_strided_slice %99 {offsets = [0, 0, 0], sizes = [1, 8, 16], strides = [1, 1, 1]} : vector<4x8x16xf32> to vector<1x8x16xf32>
    %101 = vector.shape_cast %100 : vector<1x8x16xf32> to vector<8x16xf32>
    %102 = vector.extract_strided_slice %99 {offsets = [1, 0, 0], sizes = [1, 8, 16], strides = [1, 1, 1]} : vector<4x8x16xf32> to vector<1x8x16xf32>
    %103 = vector.shape_cast %102 : vector<1x8x16xf32> to vector<8x16xf32>
    %104 = vector.extract_strided_slice %99 {offsets = [2, 0, 0], sizes = [1, 8, 16], strides = [1, 1, 1]} : vector<4x8x16xf32> to vector<1x8x16xf32>
    %105 = vector.shape_cast %104 : vector<1x8x16xf32> to vector<8x16xf32>
    %106 = vector.extract_strided_slice %99 {offsets = [3, 0, 0], sizes = [1, 8, 16], strides = [1, 1, 1]} : vector<4x8x16xf32> to vector<1x8x16xf32>
    %107 = vector.shape_cast %106 : vector<1x8x16xf32> to vector<8x16xf32>
    %108 = tpu.concatenate %101, %103, %105, %107 in 1 : vector<8x16xf32>, vector<8x16xf32>, vector<8x16xf32>, vector<8x16xf32> -> vector<8x64xf32>
    %109 = arith.truncf %108 : vector<8x64xf32> to vector<8x64xbf16>
    %c0_26 = arith.constant 0 : index
    %c0_27 = arith.constant 0 : index
    %c0_28 = arith.constant 0 : index
    %110 = vector.load %arg9[%c0_26, %c0_27, %c0_28] : memref<2x64x64xbf16, #tpu.memory_space<vmem>>, vector<1x64x64xbf16>
    %111 = vector.shape_cast %110 : vector<1x64x64xbf16> to vector<64x64xbf16>
    %cst_29 = arith.constant dense<0.000000e+00> : vector<8x64xf32>
    %112 = tpu.matmul %109, %111, %cst_29 {dimension_numbers = #tpu.dot_dimension_numbers<[1], [0], [0], [1], [0, 0, 1, 1], [], []>} : vector<8x64xbf16>, vector<64x64xbf16>, vector<8x64xf32> -> vector<8x64xf32>
    %113 = arith.addf %10, %112 : vector<8x64xf32>
    %c0_30 = arith.constant 0 : index
    %c0_31 = arith.constant 0 : index
    %114 = vector.load %arg10[%c0_30, %c0_31] : memref<2x64xf32, #tpu.memory_space<vmem>>, vector<1x64xf32>
    %115 = vector.shape_cast %114 : vector<1x64xf32> to vector<64xf32>
    %116 = vector.shape_cast %115 : vector<64xf32> to vector<1x64xf32>
    %117 = vector.broadcast %116 : vector<1x64xf32> to vector<8x64xf32>
    %118 = arith.addf %113, %117 : vector<8x64xf32>
    %c0_32 = arith.constant 0 : index
    %c0_33 = arith.constant 0 : index
    %119 = vector.load %arg11[%c0_32, %c0_33] : memref<2x64xf32, #tpu.memory_space<vmem>>, vector<1x64xf32>
    %120 = vector.shape_cast %119 : vector<1x64xf32> to vector<64xf32>
    %c0_34 = arith.constant 0 : index
    %c0_35 = arith.constant 0 : index
    %121 = vector.load %arg12[%c0_34, %c0_35] : memref<2x64xf32, #tpu.memory_space<vmem>>, vector<1x64xf32>
    %122 = vector.shape_cast %121 : vector<1x64xf32> to vector<64xf32>
    %cst_36 = arith.constant dense<0.000000e+00> : vector<8xf32>
    %123 = vector.multi_reduction <add>, %118, %cst_36 [1] : vector<8x64xf32> to vector<8xf32>
    %124 = vector.shape_cast %123 : vector<8xf32> to vector<8x1xf32>
    %cst_37 = arith.constant 6.400000e+01 : f32
    %125 = vector.broadcast %cst_37 : f32 to vector<8x1xf32>
    %126 = arith.divf %124, %125 : vector<8x1xf32>
    %127 = vector.broadcast %126 : vector<8x1xf32> to vector<8x64xf32>
    %128 = arith.subf %118, %127 : vector<8x64xf32>
    %129 = arith.mulf %128, %128 : vector<8x64xf32>
    %cst_38 = arith.constant dense<0.000000e+00> : vector<8xf32>
    %130 = vector.multi_reduction <add>, %129, %cst_38 [1] : vector<8x64xf32> to vector<8xf32>
    %131 = vector.shape_cast %130 : vector<8xf32> to vector<8x1xf32>
    %cst_39 = arith.constant 6.400000e+01 : f32
    %132 = vector.broadcast %cst_39 : f32 to vector<8x1xf32>
    %133 = arith.divf %131, %132 : vector<8x1xf32>
    %134 = vector.broadcast %126 : vector<8x1xf32> to vector<8x64xf32>
    %135 = arith.subf %118, %134 : vector<8x64xf32>
    %cst_40 = arith.constant 9.99999974E-6 : f32
    %136 = vector.broadcast %cst_40 : f32 to vector<8x1xf32>
    %137 = arith.addf %133, %136 : vector<8x1xf32>
    %138 = math.rsqrt %137 : vector<8x1xf32>
    %139 = vector.broadcast %138 : vector<8x1xf32> to vector<8x64xf32>
    %140 = arith.mulf %135, %139 : vector<8x64xf32>
    %141 = vector.shape_cast %120 : vector<64xf32> to vector<1x64xf32>
    %142 = vector.broadcast %141 : vector<1x64xf32> to vector<8x64xf32>
    %143 = arith.mulf %140, %142 : vector<8x64xf32>
    %144 = vector.shape_cast %122 : vector<64xf32> to vector<1x64xf32>
    %145 = vector.broadcast %144 : vector<1x64xf32> to vector<8x64xf32>
    %146 = arith.addf %143, %145 : vector<8x64xf32>
    %147 = arith.truncf %146 : vector<8x64xf32> to vector<8x64xbf16>
    %c0_41 = arith.constant 0 : index
    %c0_42 = arith.constant 0 : index
    %c0_43 = arith.constant 0 : index
    %148 = vector.load %arg13[%c0_41, %c0_42, %c0_43] : memref<2x64x256xbf16, #tpu.memory_space<vmem>>, vector<1x64x256xbf16>
    %149 = vector.shape_cast %148 : vector<1x64x256xbf16> to vector<64x256xbf16>
    %cst_44 = arith.constant dense<0.000000e+00> : vector<8x256xf32>
    %150 = tpu.matmul %147, %149, %cst_44 {dimension_numbers = #tpu.dot_dimension_numbers<[1], [0], [0], [1], [0, 0, 1, 1], [], []>} : vector<8x64xbf16>, vector<64x256xbf16>, vector<8x256xf32> -> vector<8x256xf32>
    %c0_45 = arith.constant 0 : index
    %c0_46 = arith.constant 0 : index
    %151 = vector.load %arg14[%c0_45, %c0_46] : memref<2x256xf32, #tpu.memory_space<vmem>>, vector<1x256xf32>
    %152 = vector.shape_cast %151 : vector<1x256xf32> to vector<256xf32>
    %153 = vector.shape_cast %152 : vector<256xf32> to vector<1x256xf32>
    %154 = vector.broadcast %153 : vector<1x256xf32> to vector<8x256xf32>
    %155 = arith.addf %150, %154 : vector<8x256xf32>
    %156 = arith.mulf %155, %155 : vector<8x256xf32>
    %157 = arith.mulf %155, %156 : vector<8x256xf32>
    %cst_47 = arith.constant 4.471500e-02 : f32
    %158 = vector.broadcast %cst_47 : f32 to vector<8x256xf32>
    %159 = arith.mulf %158, %157 : vector<8x256xf32>
    %160 = arith.addf %155, %159 : vector<8x256xf32>
    %cst_48 = arith.constant 0.797884583 : f32
    %161 = vector.broadcast %cst_48 : f32 to vector<8x256xf32>
    %162 = arith.mulf %161, %160 : vector<8x256xf32>
    %163 = math.tanh %162 : vector<8x256xf32>
    %cst_49 = arith.constant 1.000000e+00 : f32
    %164 = vector.broadcast %cst_49 : f32 to vector<8x256xf32>
    %165 = arith.addf %164, %163 : vector<8x256xf32>
    %cst_50 = arith.constant 5.000000e-01 : f32
    %166 = vector.broadcast %cst_50 : f32 to vector<8x256xf32>
    %167 = arith.mulf %166, %165 : vector<8x256xf32>
    %168 = arith.mulf %155, %167 : vector<8x256xf32>
    %169 = arith.truncf %168 : vector<8x256xf32> to vector<8x256xbf16>
    %c0_51 = arith.constant 0 : index
    %c0_52 = arith.constant 0 : index
    %c0_53 = arith.constant 0 : index
    %170 = vector.load %arg15[%c0_51, %c0_52, %c0_53] : memref<2x256x64xbf16, #tpu.memory_space<vmem>>, vector<1x256x64xbf16>
    %171 = vector.shape_cast %170 : vector<1x256x64xbf16> to vector<256x64xbf16>
    %cst_54 = arith.constant dense<0.000000e+00> : vector<8x64xf32>
    %172 = tpu.matmul %169, %171, %cst_54 {dimension_numbers = #tpu.dot_dimension_numbers<[1], [0], [0], [1], [0, 0, 1, 1], [], []>} : vector<8x256xbf16>, vector<256x64xbf16>, vector<8x64xf32> -> vector<8x64xf32>
    %173 = arith.addf %118, %172 : vector<8x64xf32>
    %c0_55 = arith.constant 0 : index
    %c0_56 = arith.constant 0 : index
    %174 = vector.load %arg16[%c0_55, %c0_56] : memref<2x64xf32, #tpu.memory_space<vmem>>, vector<1x64xf32>
    %175 = vector.shape_cast %174 : vector<1x64xf32> to vector<64xf32>
    %176 = vector.shape_cast %175 : vector<64xf32> to vector<1x64xf32>
    %177 = vector.broadcast %176 : vector<1x64xf32> to vector<8x64xf32>
    %178 = arith.addf %173, %177 : vector<8x64xf32>
    %c1 = arith.constant 1 : index
    %c0_57 = arith.constant 0 : index
    %179 = vector.load %arg5[%c1, %c0_57] : memref<2x64xf32, #tpu.memory_space<vmem>>, vector<1x64xf32>
    %180 = vector.shape_cast %179 : vector<1x64xf32> to vector<64xf32>
    %c1_58 = arith.constant 1 : index
    %c0_59 = arith.constant 0 : index
    %181 = vector.load %arg6[%c1_58, %c0_59] : memref<2x64xf32, #tpu.memory_space<vmem>>, vector<1x64xf32>
    %182 = vector.shape_cast %181 : vector<1x64xf32> to vector<64xf32>
    %cst_60 = arith.constant dense<0.000000e+00> : vector<8xf32>
    %183 = vector.multi_reduction <add>, %178, %cst_60 [1] : vector<8x64xf32> to vector<8xf32>
    %184 = vector.shape_cast %183 : vector<8xf32> to vector<8x1xf32>
    %cst_61 = arith.constant 6.400000e+01 : f32
    %185 = vector.broadcast %cst_61 : f32 to vector<8x1xf32>
    %186 = arith.divf %184, %185 : vector<8x1xf32>
    %187 = vector.broadcast %186 : vector<8x1xf32> to vector<8x64xf32>
    %188 = arith.subf %178, %187 : vector<8x64xf32>
    %189 = arith.mulf %188, %188 : vector<8x64xf32>
    %cst_62 = arith.constant dense<0.000000e+00> : vector<8xf32>
    %190 = vector.multi_reduction <add>, %189, %cst_62 [1] : vector<8x64xf32> to vector<8xf32>
    %191 = vector.shape_cast %190 : vector<8xf32> to vector<8x1xf32>
    %cst_63 = arith.constant 6.400000e+01 : f32
    %192 = vector.broadcast %cst_63 : f32 to vector<8x1xf32>
    %193 = arith.divf %191, %192 : vector<8x1xf32>
    %194 = vector.broadcast %186 : vector<8x1xf32> to vector<8x64xf32>
    %195 = arith.subf %178, %194 : vector<8x64xf32>
    %cst_64 = arith.constant 9.99999974E-6 : f32
    %196 = vector.broadcast %cst_64 : f32 to vector<8x1xf32>
    %197 = arith.addf %193, %196 : vector<8x1xf32>
    %198 = math.rsqrt %197 : vector<8x1xf32>
    %199 = vector.broadcast %198 : vector<8x1xf32> to vector<8x64xf32>
    %200 = arith.mulf %195, %199 : vector<8x64xf32>
    %201 = vector.shape_cast %180 : vector<64xf32> to vector<1x64xf32>
    %202 = vector.broadcast %201 : vector<1x64xf32> to vector<8x64xf32>
    %203 = arith.mulf %200, %202 : vector<8x64xf32>
    %204 = vector.shape_cast %182 : vector<64xf32> to vector<1x64xf32>
    %205 = vector.broadcast %204 : vector<1x64xf32> to vector<8x64xf32>
    %206 = arith.addf %203, %205 : vector<8x64xf32>
    %207 = arith.truncf %206 : vector<8x64xf32> to vector<8x64xbf16>
    %c1_65 = arith.constant 1 : index
    %c0_66 = arith.constant 0 : index
    %c0_67 = arith.constant 0 : index
    %208 = vector.load %arg7[%c1_65, %c0_66, %c0_67] : memref<2x64x192xbf16, #tpu.memory_space<vmem>>, vector<1x64x192xbf16>
    %209 = vector.shape_cast %208 : vector<1x64x192xbf16> to vector<64x192xbf16>
    %cst_68 = arith.constant dense<0.000000e+00> : vector<8x192xf32>
    %210 = tpu.matmul %207, %209, %cst_68 {dimension_numbers = #tpu.dot_dimension_numbers<[1], [0], [0], [1], [0, 0, 1, 1], [], []>} : vector<8x64xbf16>, vector<64x192xbf16>, vector<8x192xf32> -> vector<8x192xf32>
    %c1_69 = arith.constant 1 : index
    %c0_70 = arith.constant 0 : index
    %211 = vector.load %arg8[%c1_69, %c0_70] : memref<2x192xf32, #tpu.memory_space<vmem>>, vector<1x192xf32>
    %212 = vector.shape_cast %211 : vector<1x192xf32> to vector<192xf32>
    %213 = vector.shape_cast %212 : vector<192xf32> to vector<1x192xf32>
    %214 = vector.broadcast %213 : vector<1x192xf32> to vector<8x192xf32>
    %215 = arith.addf %210, %214 : vector<8x192xf32>
    %216 = vector.extract_strided_slice %215 {offsets = [0, 0], sizes = [8, 16], strides = [1, 1]} : vector<8x192xf32> to vector<8x16xf32>
    %217 = vector.extract_strided_slice %215 {offsets = [0, 16], sizes = [8, 16], strides = [1, 1]} : vector<8x192xf32> to vector<8x16xf32>
    %218 = vector.extract_strided_slice %215 {offsets = [0, 32], sizes = [8, 16], strides = [1, 1]} : vector<8x192xf32> to vector<8x16xf32>
    %219 = vector.extract_strided_slice %215 {offsets = [0, 48], sizes = [8, 16], strides = [1, 1]} : vector<8x192xf32> to vector<8x16xf32>
    %220 = vector.shape_cast %216 : vector<8x16xf32> to vector<1x8x16xf32>
    %221 = vector.shape_cast %217 : vector<8x16xf32> to vector<1x8x16xf32>
    %222 = vector.shape_cast %218 : vector<8x16xf32> to vector<1x8x16xf32>
    %223 = vector.shape_cast %219 : vector<8x16xf32> to vector<1x8x16xf32>
    %224 = tpu.concatenate %220, %221, %222, %223 in 0 : vector<1x8x16xf32>, vector<1x8x16xf32>, vector<1x8x16xf32>, vector<1x8x16xf32> -> vector<4x8x16xf32>
    %225 = arith.truncf %224 : vector<4x8x16xf32> to vector<4x8x16xbf16>
    %226 = vector.extract_strided_slice %215 {offsets = [0, 64], sizes = [8, 16], strides = [1, 1]} : vector<8x192xf32> to vector<8x16xf32>
    %227 = vector.extract_strided_slice %215 {offsets = [0, 80], sizes = [8, 16], strides = [1, 1]} : vector<8x192xf32> to vector<8x16xf32>
    %228 = vector.extract_strided_slice %215 {offsets = [0, 96], sizes = [8, 16], strides = [1, 1]} : vector<8x192xf32> to vector<8x16xf32>
    %229 = vector.extract_strided_slice %215 {offsets = [0, 112], sizes = [8, 16], strides = [1, 1]} : vector<8x192xf32> to vector<8x16xf32>
    %230 = vector.shape_cast %226 : vector<8x16xf32> to vector<1x8x16xf32>
    %231 = vector.shape_cast %227 : vector<8x16xf32> to vector<1x8x16xf32>
    %232 = vector.shape_cast %228 : vector<8x16xf32> to vector<1x8x16xf32>
    %233 = vector.shape_cast %229 : vector<8x16xf32> to vector<1x8x16xf32>
    %234 = tpu.concatenate %230, %231, %232, %233 in 0 : vector<1x8x16xf32>, vector<1x8x16xf32>, vector<1x8x16xf32>, vector<1x8x16xf32> -> vector<4x8x16xf32>
    %235 = arith.truncf %234 : vector<4x8x16xf32> to vector<4x8x16xbf16>
    %236 = vector.extract_strided_slice %215 {offsets = [0, 128], sizes = [8, 16], strides = [1, 1]} : vector<8x192xf32> to vector<8x16xf32>
    %237 = vector.extract_strided_slice %215 {offsets = [0, 144], sizes = [8, 16], strides = [1, 1]} : vector<8x192xf32> to vector<8x16xf32>
    %238 = vector.extract_strided_slice %215 {offsets = [0, 160], sizes = [8, 16], strides = [1, 1]} : vector<8x192xf32> to vector<8x16xf32>
    %239 = vector.extract_strided_slice %215 {offsets = [0, 176], sizes = [8, 16], strides = [1, 1]} : vector<8x192xf32> to vector<8x16xf32>
    %240 = vector.shape_cast %236 : vector<8x16xf32> to vector<1x8x16xf32>
    %241 = vector.shape_cast %237 : vector<8x16xf32> to vector<1x8x16xf32>
    %242 = vector.shape_cast %238 : vector<8x16xf32> to vector<1x8x16xf32>
    %243 = vector.shape_cast %239 : vector<8x16xf32> to vector<1x8x16xf32>
    %244 = tpu.concatenate %240, %241, %242, %243 in 0 : vector<1x8x16xf32>, vector<1x8x16xf32>, vector<1x8x16xf32>, vector<1x8x16xf32> -> vector<4x8x16xf32>
    %245 = arith.truncf %244 : vector<4x8x16xf32> to vector<4x8x16xbf16>
    "tpu.trace_start"() <{level = 10 : i32, message = "hqd,hkd->hqk"}> : () -> ()
    %cst_71 = arith.constant dense<0.000000e+00> : vector<4x8x8xf32>
    %246 = tpu.matmul %225, %235, %cst_71 {dimension_numbers = #tpu.dot_dimension_numbers<[2], [2], [1], [1], [0, 0, 0, 1, 1, 1], [0], [0]>} : vector<4x8x16xbf16>, vector<4x8x16xbf16>, vector<4x8x8xf32> -> vector<4x8x8xf32>
    "tpu.trace_stop"() : () -> ()
    %247 = vector.shape_cast %16 : vector<8x8xf32> to vector<1x8x8xf32>
    %248 = vector.broadcast %247 : vector<1x8x8xf32> to vector<4x8x8xf32>
    %249 = arith.addf %246, %248 : vector<4x8x8xf32>
    %cst_72 = arith.constant dense<0xFF800000> : vector<4x8xf32>
    %250 = vector.multi_reduction <maximumf>, %249, %cst_72 [2] : vector<4x8x8xf32> to vector<4x8xf32>
    %251 = vector.shape_cast %250 : vector<4x8xf32> to vector<4x8x1xf32>
    %252 = vector.broadcast %251 : vector<4x8x1xf32> to vector<4x8x8xf32>
    %253 = arith.subf %249, %252 : vector<4x8x8xf32>
    %254 = math.exp %253 : vector<4x8x8xf32>
    %cst_73 = arith.constant dense<0.000000e+00> : vector<4x8xf32>
    %255 = vector.multi_reduction <add>, %254, %cst_73 [2] : vector<4x8x8xf32> to vector<4x8xf32>
    %256 = vector.shape_cast %255 : vector<4x8xf32> to vector<4x8x1xf32>
    %257 = tpu.reciprocal %256 {approx = true} : vector<4x8x1xf32> -> vector<4x8x1xf32>
    %258 = vector.broadcast %257 : vector<4x8x1xf32> to vector<4x8x8xf32>
    %259 = arith.mulf %254, %258 : vector<4x8x8xf32>
    %260 = arith.truncf %259 : vector<4x8x8xf32> to vector<4x8x8xbf16>
    "tpu.trace_start"() <{level = 10 : i32, message = "hqk,hkd->hqd"}> : () -> ()
    %cst_74 = arith.constant dense<0.000000e+00> : vector<4x8x16xf32>
    %261 = tpu.matmul %260, %245, %cst_74 {dimension_numbers = #tpu.dot_dimension_numbers<[2], [1], [1], [2], [0, 0, 0, 1, 1, 2], [0], [0]>} : vector<4x8x8xbf16>, vector<4x8x16xbf16>, vector<4x8x16xf32> -> vector<4x8x16xf32>
    "tpu.trace_stop"() : () -> ()
    %262 = vector.extract_strided_slice %261 {offsets = [0, 0, 0], sizes = [1, 8, 16], strides = [1, 1, 1]} : vector<4x8x16xf32> to vector<1x8x16xf32>
    %263 = vector.shape_cast %262 : vector<1x8x16xf32> to vector<8x16xf32>
    %264 = vector.extract_strided_slice %261 {offsets = [1, 0, 0], sizes = [1, 8, 16], strides = [1, 1, 1]} : vector<4x8x16xf32> to vector<1x8x16xf32>
    %265 = vector.shape_cast %264 : vector<1x8x16xf32> to vector<8x16xf32>
    %266 = vector.extract_strided_slice %261 {offsets = [2, 0, 0], sizes = [1, 8, 16], strides = [1, 1, 1]} : vector<4x8x16xf32> to vector<1x8x16xf32>
    %267 = vector.shape_cast %266 : vector<1x8x16xf32> to vector<8x16xf32>
    %268 = vector.extract_strided_slice %261 {offsets = [3, 0, 0], sizes = [1, 8, 16], strides = [1, 1, 1]} : vector<4x8x16xf32> to vector<1x8x16xf32>
    %269 = vector.shape_cast %268 : vector<1x8x16xf32> to vector<8x16xf32>
    %270 = tpu.concatenate %263, %265, %267, %269 in 1 : vector<8x16xf32>, vector<8x16xf32>, vector<8x16xf32>, vector<8x16xf32> -> vector<8x64xf32>
    %271 = arith.truncf %270 : vector<8x64xf32> to vector<8x64xbf16>
    %c1_75 = arith.constant 1 : index
    %c0_76 = arith.constant 0 : index
    %c0_77 = arith.constant 0 : index
    %272 = vector.load %arg9[%c1_75, %c0_76, %c0_77] : memref<2x64x64xbf16, #tpu.memory_space<vmem>>, vector<1x64x64xbf16>
    %273 = vector.shape_cast %272 : vector<1x64x64xbf16> to vector<64x64xbf16>
    %cst_78 = arith.constant dense<0.000000e+00> : vector<8x64xf32>
    %274 = tpu.matmul %271, %273, %cst_78 {dimension_numbers = #tpu.dot_dimension_numbers<[1], [0], [0], [1], [0, 0, 1, 1], [], []>} : vector<8x64xbf16>, vector<64x64xbf16>, vector<8x64xf32> -> vector<8x64xf32>
    %275 = arith.addf %178, %274 : vector<8x64xf32>
    %c1_79 = arith.constant 1 : index
    %c0_80 = arith.constant 0 : index
    %276 = vector.load %arg10[%c1_79, %c0_80] : memref<2x64xf32, #tpu.memory_space<vmem>>, vector<1x64xf32>
    %277 = vector.shape_cast %276 : vector<1x64xf32> to vector<64xf32>
    %278 = vector.shape_cast %277 : vector<64xf32> to vector<1x64xf32>
    %279 = vector.broadcast %278 : vector<1x64xf32> to vector<8x64xf32>
    %280 = arith.addf %275, %279 : vector<8x64xf32>
    %c1_81 = arith.constant 1 : index
    %c0_82 = arith.constant 0 : index
    %281 = vector.load %arg11[%c1_81, %c0_82] : memref<2x64xf32, #tpu.memory_space<vmem>>, vector<1x64xf32>
    %282 = vector.shape_cast %281 : vector<1x64xf32> to vector<64xf32>
    %c1_83 = arith.constant 1 : index
    %c0_84 = arith.constant 0 : index
    %283 = vector.load %arg12[%c1_83, %c0_84] : memref<2x64xf32, #tpu.memory_space<vmem>>, vector<1x64xf32>
    %284 = vector.shape_cast %283 : vector<1x64xf32> to vector<64xf32>
    %cst_85 = arith.constant dense<0.000000e+00> : vector<8xf32>
    %285 = vector.multi_reduction <add>, %280, %cst_85 [1] : vector<8x64xf32> to vector<8xf32>
    %286 = vector.shape_cast %285 : vector<8xf32> to vector<8x1xf32>
    %cst_86 = arith.constant 6.400000e+01 : f32
    %287 = vector.broadcast %cst_86 : f32 to vector<8x1xf32>
    %288 = arith.divf %286, %287 : vector<8x1xf32>
    %289 = vector.broadcast %288 : vector<8x1xf32> to vector<8x64xf32>
    %290 = arith.subf %280, %289 : vector<8x64xf32>
    %291 = arith.mulf %290, %290 : vector<8x64xf32>
    %cst_87 = arith.constant dense<0.000000e+00> : vector<8xf32>
    %292 = vector.multi_reduction <add>, %291, %cst_87 [1] : vector<8x64xf32> to vector<8xf32>
    %293 = vector.shape_cast %292 : vector<8xf32> to vector<8x1xf32>
    %cst_88 = arith.constant 6.400000e+01 : f32
    %294 = vector.broadcast %cst_88 : f32 to vector<8x1xf32>
    %295 = arith.divf %293, %294 : vector<8x1xf32>
    %296 = vector.broadcast %288 : vector<8x1xf32> to vector<8x64xf32>
    %297 = arith.subf %280, %296 : vector<8x64xf32>
    %cst_89 = arith.constant 9.99999974E-6 : f32
    %298 = vector.broadcast %cst_89 : f32 to vector<8x1xf32>
    %299 = arith.addf %295, %298 : vector<8x1xf32>
    %300 = math.rsqrt %299 : vector<8x1xf32>
    %301 = vector.broadcast %300 : vector<8x1xf32> to vector<8x64xf32>
    %302 = arith.mulf %297, %301 : vector<8x64xf32>
    %303 = vector.shape_cast %282 : vector<64xf32> to vector<1x64xf32>
    %304 = vector.broadcast %303 : vector<1x64xf32> to vector<8x64xf32>
    %305 = arith.mulf %302, %304 : vector<8x64xf32>
    %306 = vector.shape_cast %284 : vector<64xf32> to vector<1x64xf32>
    %307 = vector.broadcast %306 : vector<1x64xf32> to vector<8x64xf32>
    %308 = arith.addf %305, %307 : vector<8x64xf32>
    %309 = arith.truncf %308 : vector<8x64xf32> to vector<8x64xbf16>
    %c1_90 = arith.constant 1 : index
    %c0_91 = arith.constant 0 : index
    %c0_92 = arith.constant 0 : index
    %310 = vector.load %arg13[%c1_90, %c0_91, %c0_92] : memref<2x64x256xbf16, #tpu.memory_space<vmem>>, vector<1x64x256xbf16>
    %311 = vector.shape_cast %310 : vector<1x64x256xbf16> to vector<64x256xbf16>
    %cst_93 = arith.constant dense<0.000000e+00> : vector<8x256xf32>
    %312 = tpu.matmul %309, %311, %cst_93 {dimension_numbers = #tpu.dot_dimension_numbers<[1], [0], [0], [1], [0, 0, 1, 1], [], []>} : vector<8x64xbf16>, vector<64x256xbf16>, vector<8x256xf32> -> vector<8x256xf32>
    %c1_94 = arith.constant 1 : index
    %c0_95 = arith.constant 0 : index
    %313 = vector.load %arg14[%c1_94, %c0_95] : memref<2x256xf32, #tpu.memory_space<vmem>>, vector<1x256xf32>
    %314 = vector.shape_cast %313 : vector<1x256xf32> to vector<256xf32>
    %315 = vector.shape_cast %314 : vector<256xf32> to vector<1x256xf32>
    %316 = vector.broadcast %315 : vector<1x256xf32> to vector<8x256xf32>
    %317 = arith.addf %312, %316 : vector<8x256xf32>
    %318 = arith.mulf %317, %317 : vector<8x256xf32>
    %319 = arith.mulf %317, %318 : vector<8x256xf32>
    %cst_96 = arith.constant 4.471500e-02 : f32
    %320 = vector.broadcast %cst_96 : f32 to vector<8x256xf32>
    %321 = arith.mulf %320, %319 : vector<8x256xf32>
    %322 = arith.addf %317, %321 : vector<8x256xf32>
    %cst_97 = arith.constant 0.797884583 : f32
    %323 = vector.broadcast %cst_97 : f32 to vector<8x256xf32>
    %324 = arith.mulf %323, %322 : vector<8x256xf32>
    %325 = math.tanh %324 : vector<8x256xf32>
    %cst_98 = arith.constant 1.000000e+00 : f32
    %326 = vector.broadcast %cst_98 : f32 to vector<8x256xf32>
    %327 = arith.addf %326, %325 : vector<8x256xf32>
    %cst_99 = arith.constant 5.000000e-01 : f32
    %328 = vector.broadcast %cst_99 : f32 to vector<8x256xf32>
    %329 = arith.mulf %328, %327 : vector<8x256xf32>
    %330 = arith.mulf %317, %329 : vector<8x256xf32>
    %331 = arith.truncf %330 : vector<8x256xf32> to vector<8x256xbf16>
    %c1_100 = arith.constant 1 : index
    %c0_101 = arith.constant 0 : index
    %c0_102 = arith.constant 0 : index
    %332 = vector.load %arg15[%c1_100, %c0_101, %c0_102] : memref<2x256x64xbf16, #tpu.memory_space<vmem>>, vector<1x256x64xbf16>
    %333 = vector.shape_cast %332 : vector<1x256x64xbf16> to vector<256x64xbf16>
    %cst_103 = arith.constant dense<0.000000e+00> : vector<8x64xf32>
    %334 = tpu.matmul %331, %333, %cst_103 {dimension_numbers = #tpu.dot_dimension_numbers<[1], [0], [0], [1], [0, 0, 1, 1], [], []>} : vector<8x256xbf16>, vector<256x64xbf16>, vector<8x64xf32> -> vector<8x64xf32>
    %335 = arith.addf %280, %334 : vector<8x64xf32>
    %c1_104 = arith.constant 1 : index
    %c0_105 = arith.constant 0 : index
    %336 = vector.load %arg16[%c1_104, %c0_105] : memref<2x64xf32, #tpu.memory_space<vmem>>, vector<1x64xf32>
    %337 = vector.shape_cast %336 : vector<1x64xf32> to vector<64xf32>
    %338 = vector.shape_cast %337 : vector<64xf32> to vector<1x64xf32>
    %339 = vector.broadcast %338 : vector<1x64xf32> to vector<8x64xf32>
    %340 = arith.addf %335, %339 : vector<8x64xf32>
    %c0_106 = arith.constant 0 : index
    %c0_107 = arith.constant 0 : index
    %341 = vector.load %arg17[%c0_106, %c0_107] : memref<1x64xf32, #tpu.memory_space<vmem>>, vector<1x64xf32>
    %342 = vector.shape_cast %341 : vector<1x64xf32> to vector<64xf32>
    %c0_108 = arith.constant 0 : index
    %c0_109 = arith.constant 0 : index
    %343 = vector.load %arg18[%c0_108, %c0_109] : memref<1x64xf32, #tpu.memory_space<vmem>>, vector<1x64xf32>
    %344 = vector.shape_cast %343 : vector<1x64xf32> to vector<64xf32>
    %cst_110 = arith.constant dense<0.000000e+00> : vector<8xf32>
    %345 = vector.multi_reduction <add>, %340, %cst_110 [1] : vector<8x64xf32> to vector<8xf32>
    %346 = vector.shape_cast %345 : vector<8xf32> to vector<8x1xf32>
    %cst_111 = arith.constant 6.400000e+01 : f32
    %347 = vector.broadcast %cst_111 : f32 to vector<8x1xf32>
    %348 = arith.divf %346, %347 : vector<8x1xf32>
    %349 = vector.broadcast %348 : vector<8x1xf32> to vector<8x64xf32>
    %350 = arith.subf %340, %349 : vector<8x64xf32>
    %351 = arith.mulf %350, %350 : vector<8x64xf32>
    %cst_112 = arith.constant dense<0.000000e+00> : vector<8xf32>
    %352 = vector.multi_reduction <add>, %351, %cst_112 [1] : vector<8x64xf32> to vector<8xf32>
    %353 = vector.shape_cast %352 : vector<8xf32> to vector<8x1xf32>
    %cst_113 = arith.constant 6.400000e+01 : f32
    %354 = vector.broadcast %cst_113 : f32 to vector<8x1xf32>
    %355 = arith.divf %353, %354 : vector<8x1xf32>
    %356 = vector.broadcast %348 : vector<8x1xf32> to vector<8x64xf32>
    %357 = arith.subf %340, %356 : vector<8x64xf32>
    %cst_114 = arith.constant 9.99999974E-6 : f32
    %358 = vector.broadcast %cst_114 : f32 to vector<8x1xf32>
    %359 = arith.addf %355, %358 : vector<8x1xf32>
    %360 = math.rsqrt %359 : vector<8x1xf32>
    %361 = vector.broadcast %360 : vector<8x1xf32> to vector<8x64xf32>
    %362 = arith.mulf %357, %361 : vector<8x64xf32>
    %363 = vector.shape_cast %342 : vector<64xf32> to vector<1x64xf32>
    %364 = vector.broadcast %363 : vector<1x64xf32> to vector<8x64xf32>
    %365 = arith.mulf %362, %364 : vector<8x64xf32>
    %366 = vector.shape_cast %344 : vector<64xf32> to vector<1x64xf32>
    %367 = vector.broadcast %366 : vector<1x64xf32> to vector<8x64xf32>
    %368 = arith.addf %365, %367 : vector<8x64xf32>
    %369 = arith.truncf %368 : vector<8x64xf32> to vector<8x64xbf16>
    %c0_115 = arith.constant 0 : index
    %c0_116 = arith.constant 0 : index
    %370 = vector.load %arg3[%c0_115, %c0_116] : memref<64x256xbf16, #tpu.memory_space<vmem>>, vector<64x256xbf16>
    %cst_117 = arith.constant dense<0.000000e+00> : vector<8x256xf32>
    %371 = tpu.matmul %369, %370, %cst_117 {dimension_numbers = #tpu.dot_dimension_numbers<[1], [0], [0], [1], [0, 0, 1, 1], [], []>} : vector<8x64xbf16>, vector<64x256xbf16>, vector<8x256xf32> -> vector<8x256xf32>
    %c0_118 = arith.constant 0 : index
    %c0_119 = arith.constant 0 : index
    %372 = vector.load %arg19[%c0_118, %c0_119] : memref<8x256xf32, #tpu.memory_space<vmem>>, vector<8x256xf32>
    tpu.vector_store %arg19[%c0_118, %c0_119], %371 {strides = array<i32>} : memref<8x256xf32, #tpu.memory_space<vmem>>, vector<8x256xf32>,
    return
  }
  func.func @transform_0(%arg0: i32) -> (i32, i32) {
    %c0_i32 = arith.constant 0 : i32
    %c0_i32_0 = arith.constant 0 : i32
    return %arg0, %c0_i32 : i32, i32
  }
  func.func @transform_1(%arg0: i32) -> (i32, i32) {
    %c0_i32 = arith.constant 0 : i32
    %c0_i32_0 = arith.constant 0 : i32
    %c0_i32_1 = arith.constant 0 : i32
    return %c0_i32, %c0_i32_0 : i32, i32
  }
  func.func @transform_2(%arg0: i32) -> (i32, i32) {
    %c0_i32 = arith.constant 0 : i32
    %c0_i32_0 = arith.constant 0 : i32
    %c0_i32_1 = arith.constant 0 : i32
    return %c0_i32, %c0_i32_0 : i32, i32
  }
  func.func @transform_3(%arg0: i32) -> (i32, i32) {
    %c0_i32 = arith.constant 0 : i32
    %c0_i32_0 = arith.constant 0 : i32
    %c0_i32_1 = arith.constant 0 : i32
    return %c0_i32, %c0_i32_0 : i32, i32
  }
  func.func @transform_4(%arg0: i32) -> (i32, i32) {
    %c0_i32 = arith.constant 0 : i32
    %c0_i32_0 = arith.constant 0 : i32
    %c0_i32_1 = arith.constant 0 : i32
    return %c0_i32, %c0_i32_0 : i32, i32
  }
  func.func @transform_5(%arg0: i32) -> (i32, i32) {
    %c0_i32 = arith.constant 0 : i32
    %c0_i32_0 = arith.constant 0 : i32
    %c0_i32_1 = arith.constant 0 : i32
    return %c0_i32, %c0_i32_0 : i32, i32
  }
  func.func @transform_6(%arg0: i32) -> (i32, i32, i32) {
    %c0_i32 = arith.constant 0 : i32
    %c0_i32_0 = arith.constant 0 : i32
    %c0_i32_1 = arith.constant 0 : i32
    %c0_i32_2 = arith.constant 0 : i32
    return %c0_i32, %c0_i32_0, %c0_i32_1 : i32, i32, i32
  }
  func.func @transform_7(%arg0: i32) -> (i32, i32) {
    %c0_i32 = arith.constant 0 : i32
    %c0_i32_0 = arith.constant 0 : i32
    %c0_i32_1 = arith.constant 0 : i32
    return %c0_i32, %c0_i32_0 : i32, i32
  }
  func.func @transform_8(%arg0: i32) -> (i32, i32, i32) {
    %c0_i32 = arith.constant 0 : i32
    %c0_i32_0 = arith.constant 0 : i32
    %c0_i32_1 = arith.constant 0 : i32
    %c0_i32_2 = arith.constant 0 : i32
    return %c0_i32, %c0_i32_0, %c0_i32_1 : i32, i32, i32
  }
  func.func @transform_9(%arg0: i32) -> (i32, i32) {
    %c0_i32 = arith.constant 0 : i32
    %c0_i32_0 = arith.constant 0 : i32
    %c0_i32_1 = arith.constant 0 : i32
    return %c0_i32, %c0_i32_0 : i32, i32
  }
  func.func @transform_10(%arg0: i32) -> (i32, i32) {
    %c0_i32 = arith.constant 0 : i32
    %c0_i32_0 = arith.constant 0 : i32
    %c0_i32_1 = arith.constant 0 : i32
    return %c0_i32, %c0_i32_0 : i32, i32
  }
  func.func @transform_11(%arg0: i32) -> (i32, i32) {
    %c0_i32 = arith.constant 0 : i32
    %c0_i32_0 = arith.constant 0 : i32
    %c0_i32_1 = arith.constant 0 : i32
    return %c0_i32, %c0_i32_0 : i32, i32
  }
  func.func @transform_12(%arg0: i32) -> (i32, i32, i32) {
    %c0_i32 = arith.constant 0 : i32
    %c0_i32_0 = arith.constant 0 : i32
    %c0_i32_1 = arith.constant 0 : i32
    %c0_i32_2 = arith.constant 0 : i32
    return %c0_i32, %c0_i32_0, %c0_i32_1 : i32, i32, i32
  }
  func.func @transform_13(%arg0: i32) -> (i32, i32) {
    %c0_i32 = arith.constant 0 : i32
    %c0_i32_0 = arith.constant 0 : i32
    %c0_i32_1 = arith.constant 0 : i32
    return %c0_i32, %c0_i32_0 : i32, i32
  }
  func.func @transform_14(%arg0: i32) -> (i32, i32, i32) {
    %c0_i32 = arith.constant 0 : i32
    %c0_i32_0 = arith.constant 0 : i32
    %c0_i32_1 = arith.constant 0 : i32
    %c0_i32_2 = arith.constant 0 : i32
    return %c0_i32, %c0_i32_0, %c0_i32_1 : i32, i32, i32
  }
  func.func @transform_15(%arg0: i32) -> (i32, i32) {
    %c0_i32 = arith.constant 0 : i32
    %c0_i32_0 = arith.constant 0 : i32
    %c0_i32_1 = arith.constant 0 : i32
    return %c0_i32, %c0_i32_0 : i32, i32
  }
  func.func @transform_16(%arg0: i32) -> (i32, i32) {
    %c0_i32 = arith.constant 0 : i32
    %c0_i32_0 = arith.constant 0 : i32
    %c0_i32_1 = arith.constant 0 : i32
    return %c0_i32, %c0_i32_0 : i32, i32
  }
  func.func @transform_17(%arg0: i32) -> (i32, i32) {
    %c0_i32 = arith.constant 0 : i32
    %c0_i32_0 = arith.constant 0 : i32
    %c0_i32_1 = arith.constant 0 : i32
    return %c0_i32, %c0_i32_0 : i32, i32
  }
  func.func @transform_18(%arg0: i32) -> (i32, i32) {
    %c0_i32 = arith.constant 0 : i32
    %c0_i32_0 = arith.constant 0 : i32
    return %arg0, %c0_i32 : i32, i32
  }
}

</mosaic_0001>

<llo_original>
// kernel: gpt2_forward.1
$region0: #{gpt2_forward.1}
  #allocation0 [shape = 'u32[]', space=smem, size = 0x4, offset = 0x4, fixed_abs, tag = 'smem constant byte address 0x4 - core index']
  #allocation1 [shape = 'u32[144,128]{1,0:T(1,128)}', space=vmem, size = 0x12000, scoped, tag = 'internal scratch']
  %s0 = inlined_call_operand.vmem [shape: s32[16,1], index: 0, kind: input, shape index: {}]
  %s1 = inlined_call_operand.vmem [shape: bf16[256,64], index: 1, kind: input, shape index: {}]
  %s2 = inlined_call_operand.vmem [shape: bf16[64,256], index: 2, kind: input, shape index: {}]
  %s3 = inlined_call_operand.vmem [shape: f32[8,64], index: 3, kind: input, shape index: {}]
  %s4 = inlined_call_operand.vmem [shape: f32[2,64], index: 4, kind: input, shape index: {}]
  %s5 = inlined_call_operand.vmem [shape: f32[2,64], index: 5, kind: input, shape index: {}]
  %s6 = inlined_call_operand.vmem [shape: bf16[2,64,192], index: 6, kind: input, shape index: {}]
  %s7 = inlined_call_operand.vmem [shape: f32[2,192], index: 7, kind: input, shape index: {}]
  %s8 = inlined_call_operand.vmem [shape: bf16[2,64,64], index: 8, kind: input, shape index: {}]
  %s9 = inlined_call_operand.vmem [shape: f32[2,64], index: 9, kind: input, shape index: {}]
  %s10 = inlined_call_operand.vmem [shape: f32[2,64], index: 10, kind: input, shape index: {}]
  %s11 = inlined_call_operand.vmem [shape: f32[2,64], index: 11, kind: input, shape index: {}]
  %s12 = inlined_call_operand.vmem [shape: bf16[2,64,256], index: 12, kind: input, shape index: {}]
  %s13 = inlined_call_operand.vmem [shape: f32[2,256], index: 13, kind: input, shape index: {}]
  %s14 = inlined_call_operand.vmem [shape: bf16[2,256,64], index: 14, kind: input, shape index: {}]
  %s15 = inlined_call_operand.vmem [shape: f32[2,64], index: 15, kind: input, shape index: {}]
  %s16 = inlined_call_operand.vmem [shape: f32[1,64], index: 16, kind: input, shape index: {}]
  %s17 = inlined_call_operand.vmem [shape: f32[1,64], index: 17, kind: input, shape index: {}]
  %s18 = inlined_call_operand.hbm [shape: f32[16,256], index: 18, kind: output, shape index: {}]
  %s19 = sld [smem:[#allocation0]]
  $region105: #{gpt2_forward.1} parent=0
    _
  %s21 = ssub.s32 1, %s19
  %s22 = scalar_select 0, %s21, %s19
  $region1: #{gpt2_forward.1} parent=0
    #allocation2 [shape = 'u8[16384]{0}', space=vmem, size = 0x4000, scoped, tag = 'output window, operand 0']
    #allocation3 [shape = 's32[2]{0}', space=sflag, size = 0x8, scoped, tag = 'scoped memory for gpt2_forward.1']
    %23 = vsyncpa [#allocation3], 0
    %s24 = scalar_lea.sflag [#allocation3], 1
    %25 = vsyncpa %s24, 0
    loop: start=0, step=1, limit=4
    $region2: #{gpt2_forward.1} parent=1 // loop_pre_header
      _
    $region3: #{gpt2_forward.1} parent=1 // loop_header
      %s27 = sphi 0, %s31
      %p28 = scmp.ge.s32.totalorder %s27, 4
      %s37 = sphi 0, %s39
      %s40 = sphi 0, %s37
      %s41 = sphi 0, %s40
      %s57 = sphi 0, %s41
      %s61 = sphi 0, %s61
      %s63 = sphi 0, %s61
      %s64 = sphi 0, %s63
      %s78 = sphi 0, %s64
      %s82 = sphi 0, %s82
      %s84 = sphi 0, %s82
      %s85 = sphi 0, %s84
      %s99 = sphi 0, %s85
      %s103 = sphi 0, %s103
      %s105 = sphi 0, %s103
      %s106 = sphi 0, %s105
      %s120 = sphi 0, %s106
      %s124 = sphi 0, %s124
      %s126 = sphi 0, %s124
      %s127 = sphi 0, %s126
      %s141 = sphi 0, %s127
      %s145 = sphi 0, %s145
      %s147 = sphi 0, %s145
      %s148 = sphi 0, %s147
      %s162 = sphi 0, %s148
      %s166 = sphi 0, %s166
      %s168 = sphi 0, %s166
      %s169 = sphi 0, %s168
      %s183 = sphi 0, %s169
      %s187 = sphi 0, %s187
      %s189 = sphi 0, %s187
      %s190 = sphi 0, %s189
      %s204 = sphi 0, %s190
      %s208 = sphi 0, %s208
      %s210 = sphi 0, %s208
      %s211 = sphi 0, %s210
      %s225 = sphi 0, %s211
      %s229 = sphi 0, %s229
      %s231 = sphi 0, %s229
      %s232 = sphi 0, %s231
      %s246 = sphi 0, %s232
      %s250 = sphi 0, %s250
      %s252 = sphi 0, %s250
      %s253 = sphi 0, %s252
      %s267 = sphi 0, %s253
      %s271 = sphi 0, %s271
      %s273 = sphi 0, %s271
      %s274 = sphi 0, %s273
      %s288 = sphi 0, %s274
      %s292 = sphi 0, %s292
      %s294 = sphi 0, %s292
      %s295 = sphi 0, %s294
      %s309 = sphi 0, %s295
      %s313 = sphi 0, %s313
      %s315 = sphi 0, %s313
      %s316 = sphi 0, %s315
      %s330 = sphi 0, %s316
      %s334 = sphi 0, %s334
      %s336 = sphi 0, %s334
      %s337 = sphi 0, %s336
      %s351 = sphi 0, %s337
      %s355 = sphi 0, %s355
      %s357 = sphi 0, %s355
      %s358 = sphi 0, %s357
      %s372 = sphi 0, %s358
      %s376 = sphi 0, %s376
      %s378 = sphi 0, %s376
      %s379 = sphi 0, %s378
      %s393 = sphi 0, %s379
      %s397 = sphi 0, %s397
      %s399 = sphi 0, %s397
      %s400 = sphi 0, %s399
      %s414 = sphi 0, %s400
      %s420 = sphi 0, %s422
      %s423 = sphi 0, %s420
      %s424 = sphi 0, %s423
      %s440 = sphi 0, %s424
    $region4: #{gpt2_forward.1} parent=1 // loop_header_branch
      %30 = sbr.rel (%p28) target = $region8
    $region5: #{gpt2_forward.1} parent=1 // loop_body
      %s32 = ssub.s32 %s27, 1
      %s33 = ssub.s32 %s27, 2
      %s34 = sadd.s32 %s27, 1
      %s35 = ssub.s32 %s27, %s34
      %p36 = scmp.eq.s32.totalorder %s35, 0
      %s38 = sadd.s32 %s37, 1
      %s39 = scalar_select %p36, %s37, %s38
      %p42 = pneg %p36
      %p43 = scmp.eq.s32.totalorder %s27, 1
      %p44 = por %p42, %p43
      %p45 = scmp.ne.s32.totalorder %s37, %s40
      %p46 = scmp.eq.s32.totalorder %s27, 0
      %p47 = por %p45, %p46
      %p48 = scmp.ne.s32.totalorder %s37, %s40
      %p49 = scmp.eq.s32.totalorder %s32, 1
      %p50 = por %p48, %p49
      %p51 = scmp.ne.s32.totalorder %s40, %s41
      %p52 = scmp.eq.s32.totalorder %s32, 0
      %p53 = por %p51, %p52
      %p54 = scmp.ne.s32.totalorder %s40, %s41
      %p55 = scmp.eq.s32.totalorder %s33, 1
      %p56 = por %p54, %p55
      %p58 = scmp.ne.s32.totalorder %s41, %s57
      %p59 = scmp.eq.s32.totalorder %s33, 0
      %p60 = por %p58, %p59
      %s62 = sadd.s32 %s61, 1
      %p65 = scmp.eq.s32.totalorder %s27, 1
      %p66 = scmp.ne.s32.totalorder %s61, %s63
      %p67 = scmp.eq.s32.totalorder %s27, 0
      %p68 = por %p66, %p67
      %p69 = scmp.ne.s32.totalorder %s61, %s63
      %p70 = scmp.eq.s32.totalorder %s32, 1
      %p71 = por %p69, %p70
      %p72 = scmp.ne.s32.totalorder %s63, %s64
      %p73 = scmp.eq.s32.totalorder %s32, 0
      %p74 = por %p72, %p73
      %p75 = scmp.ne.s32.totalorder %s63, %s64
      %p76 = scmp.eq.s32.totalorder %s33, 1
      %p77 = por %p75, %p76
      %p79 = scmp.ne.s32.totalorder %s64, %s78
      %p80 = scmp.eq.s32.totalorder %s33, 0
      %p81 = por %p79, %p80
      %s83 = sadd.s32 %s82, 1
      %p86 = scmp.eq.s32.totalorder %s27, 1
      %p87 = scmp.ne.s32.totalorder %s82, %s84
      %p88 = scmp.eq.s32.totalorder %s27, 0
      %p89 = por %p87, %p88
      %p90 = scmp.ne.s32.totalorder %s82, %s84
      %p91 = scmp.eq.s32.totalorder %s32, 1
      %p92 = por %p90, %p91
      %p93 = scmp.ne.s32.totalorder %s84, %s85
      %p94 = scmp.eq.s32.totalorder %s32, 0
      %p95 = por %p93, %p94
      %p96 = scmp.ne.s32.totalorder %s84, %s85
      %p97 = scmp.eq.s32.totalorder %s33, 1
      %p98 = por %p96, %p97
      %p100 = scmp.ne.s32.totalorder %s85, %s99
      %p101 = scmp.eq.s32.totalorder %s33, 0
      %p102 = por %p100, %p101
      %s104 = sadd.s32 %s103, 1
      %p107 = scmp.eq.s32.totalorder %s27, 1
      %p108 = scmp.ne.s32.totalorder %s103, %s105
      %p109 = scmp.eq.s32.totalorder %s27, 0
      %p110 = por %p108, %p109
      %p111 = scmp.ne.s32.totalorder %s103, %s105
      %p112 = scmp.eq.s32.totalorder %s32, 1
      %p113 = por %p111, %p112
      %p114 = scmp.ne.s32.totalorder %s105, %s106
      %p115 = scmp.eq.s32.totalorder %s32, 0
      %p116 = por %p114, %p115
      %p117 = scmp.ne.s32.totalorder %s105, %s106
      %p118 = scmp.eq.s32.totalorder %s33, 1
      %p119 = por %p117, %p118
      %p121 = scmp.ne.s32.totalorder %s106, %s120
      %p122 = scmp.eq.s32.totalorder %s33, 0
      %p123 = por %p121, %p122
      %s125 = sadd.s32 %s124, 1
      %p128 = scmp.eq.s32.totalorder %s27, 1
      %p129 = scmp.ne.s32.totalorder %s124, %s126
      %p130 = scmp.eq.s32.totalorder %s27, 0
      %p131 = por %p129, %p130
      %p132 = scmp.ne.s32.totalorder %s124, %s126
      %p133 = scmp.eq.s32.totalorder %s32, 1
      %p134 = por %p132, %p133
      %p135 = scmp.ne.s32.totalorder %s126, %s127
      %p136 = scmp.eq.s32.totalorder %s32, 0
      %p137 = por %p135, %p136
      %p138 = scmp.ne.s32.totalorder %s126, %s127
      %p139 = scmp.eq.s32.totalorder %s33, 1
      %p140 = por %p138, %p139
      %p142 = scmp.ne.s32.totalorder %s127, %s141
      %p143 = scmp.eq.s32.totalorder %s33, 0
      %p144 = por %p142, %p143
      %s146 = sadd.s32 %s145, 1
      %p149 = scmp.eq.s32.totalorder %s27, 1
      %p150 = scmp.ne.s32.totalorder %s145, %s147
      %p151 = scmp.eq.s32.totalorder %s27, 0
      %p152 = por %p150, %p151
      %p153 = scmp.ne.s32.totalorder %s145, %s147
      %p154 = scmp.eq.s32.totalorder %s32, 1
      %p155 = por %p153, %p154
      %p156 = scmp.ne.s32.totalorder %s147, %s148
      %p157 = scmp.eq.s32.totalorder %s32, 0
      %p158 = por %p156, %p157
      %p159 = scmp.ne.s32.totalorder %s147, %s148
      %p160 = scmp.eq.s32.totalorder %s33, 1
      %p161 = por %p159, %p160
      %p163 = scmp.ne.s32.totalorder %s148, %s162
      %p164 = scmp.eq.s32.totalorder %s33, 0
      %p165 = por %p163, %p164
      %s167 = sadd.s32 %s166, 1
      %p170 = scmp.eq.s32.totalorder %s27, 1
      %p171 = scmp.ne.s32.totalorder %s166, %s168
      %p172 = scmp.eq.s32.totalorder %s27, 0
      %p173 = por %p171, %p172
      %p174 = scmp.ne.s32.totalorder %s166, %s168
      %p175 = scmp.eq.s32.totalorder %s32, 1
      %p176 = por %p174, %p175
      %p177 = scmp.ne.s32.totalorder %s168, %s169
      %p178 = scmp.eq.s32.totalorder %s32, 0
      %p179 = por %p177, %p178
      %p180 = scmp.ne.s32.totalorder %s168, %s169
      %p181 = scmp.eq.s32.totalorder %s33, 1
      %p182 = por %p180, %p181
      %p184 = scmp.ne.s32.totalorder %s169, %s183
      %p185 = scmp.eq.s32.totalorder %s33, 0
      %p186 = por %p184, %p185
      %s188 = sadd.s32 %s187, 1
      %p191 = scmp.eq.s32.totalorder %s27, 1
      %p192 = scmp.ne.s32.totalorder %s187, %s189
      %p193 = scmp.eq.s32.totalorder %s27, 0
      %p194 = por %p192, %p193
      %p195 = scmp.ne.s32.totalorder %s187, %s189
      %p196 = scmp.eq.s32.totalorder %s32, 1
      %p197 = por %p195, %p196
      %p198 = scmp.ne.s32.totalorder %s189, %s190
      %p199 = scmp.eq.s32.totalorder %s32, 0
      %p200 = por %p198, %p199
      %p201 = scmp.ne.s32.totalorder %s189, %s190
      %p202 = scmp.eq.s32.totalorder %s33, 1
      %p203 = por %p201, %p202
      %p205 = scmp.ne.s32.totalorder %s190, %s204
      %p206 = scmp.eq.s32.totalorder %s33, 0
      %p207 = por %p205, %p206
      %s209 = sadd.s32 %s208, 1
      %p212 = scmp.eq.s32.totalorder %s27, 1
      %p213 = scmp.ne.s32.totalorder %s208, %s210
      %p214 = scmp.eq.s32.totalorder %s27, 0
      %p215 = por %p213, %p214
      %p216 = scmp.ne.s32.totalorder %s208, %s210
      %p217 = scmp.eq.s32.totalorder %s32, 1
      %p218 = por %p216, %p217
      %p219 = scmp.ne.s32.totalorder %s210, %s211
      %p220 = scmp.eq.s32.totalorder %s32, 0
      %p221 = por %p219, %p220
      %p222 = scmp.ne.s32.totalorder %s210, %s211
      %p223 = scmp.eq.s32.totalorder %s33, 1
      %p224 = por %p222, %p223
      %p226 = scmp.ne.s32.totalorder %s211, %s225
      %p227 = scmp.eq.s32.totalorder %s33, 0
      %p228 = por %p226, %p227
      %s230 = sadd.s32 %s229, 1
      %p233 = scmp.eq.s32.totalorder %s27, 1
      %p234 = scmp.ne.s32.totalorder %s229, %s231
      %p235 = scmp.eq.s32.totalorder %s27, 0
      %p236 = por %p234, %p235
      %p237 = scmp.ne.s32.totalorder %s229, %s231
      %p238 = scmp.eq.s32.totalorder %s32, 1
      %p239 = por %p237, %p238
      %p240 = scmp.ne.s32.totalorder %s231, %s232
      %p241 = scmp.eq.s32.totalorder %s32, 0
      %p242 = por %p240, %p241
      %p243 = scmp.ne.s32.totalorder %s231, %s232
      %p244 = scmp.eq.s32.totalorder %s33, 1
      %p245 = por %p243, %p244
      %p247 = scmp.ne.s32.totalorder %s232, %s246
      %p248 = scmp.eq.s32.totalorder %s33, 0
      %p249 = por %p247, %p248
      %s251 = sadd.s32 %s250, 1
      %p254 = scmp.eq.s32.totalorder %s27, 1
      %p255 = scmp.ne.s32.totalorder %s250, %s252
      %p256 = scmp.eq.s32.totalorder %s27, 0
      %p257 = por %p255, %p256
      %p258 = scmp.ne.s32.totalorder %s250, %s252
      %p259 = scmp.eq.s32.totalorder %s32, 1
      %p260 = por %p258, %p259
      %p261 = scmp.ne.s32.totalorder %s252, %s253
      %p262 = scmp.eq.s32.totalorder %s32, 0
      %p263 = por %p261, %p262
      %p264 = scmp.ne.s32.totalorder %s252, %s253
      %p265 = scmp.eq.s32.totalorder %s33, 1
      %p266 = por %p264, %p265
      %p268 = scmp.ne.s32.totalorder %s253, %s267
      %p269 = scmp.eq.s32.totalorder %s33, 0
      %p270 = por %p268, %p269
      %s272 = sadd.s32 %s271, 1
      %p275 = scmp.eq.s32.totalorder %s27, 1
      %p276 = scmp.ne.s32.totalorder %s271, %s273
      %p277 = scmp.eq.s32.totalorder %s27, 0
      %p278 = por %p276, %p277
      %p279 = scmp.ne.s32.totalorder %s271, %s273
      %p280 = scmp.eq.s32.totalorder %s32, 1
      %p281 = por %p279, %p280
      %p282 = scmp.ne.s32.totalorder %s273, %s274
      %p283 = scmp.eq.s32.totalorder %s32, 0
      %p284 = por %p282, %p283
      %p285 = scmp.ne.s32.totalorder %s273, %s274
      %p286 = scmp.eq.s32.totalorder %s33, 1
      %p287 = por %p285, %p286
      %p289 = scmp.ne.s32.totalorder %s274, %s288
      %p290 = scmp.eq.s32.totalorder %s33, 0
      %p291 = por %p289, %p290
      %s293 = sadd.s32 %s292, 1
      %p296 = scmp.eq.s32.totalorder %s27, 1
      %p297 = scmp.ne.s32.totalorder %s292, %s294
      %p298 = scmp.eq.s32.totalorder %s27, 0
      %p299 = por %p297, %p298
      %p300 = scmp.ne.s32.totalorder %s292, %s294
      %p301 = scmp.eq.s32.totalorder %s32, 1
      %p302 = por %p300, %p301
      %p303 = scmp.ne.s32.totalorder %s294, %s295
      %p304 = scmp.eq.s32.totalorder %s32, 0
      %p305 = por %p303, %p304
      %p306 = scmp.ne.s32.totalorder %s294, %s295
      %p307 = scmp.eq.s32.totalorder %s33, 1
      %p308 = por %p306, %p307
      %p310 = scmp.ne.s32.totalorder %s295, %s309
      %p311 = scmp.eq.s32.totalorder %s33, 0
      %p312 = por %p310, %p311
      %s314 = sadd.s32 %s313, 1
      %p317 = scmp.eq.s32.totalorder %s27, 1
      %p318 = scmp.ne.s32.totalorder %s313, %s315
      %p319 = scmp.eq.s32.totalorder %s27, 0
      %p320 = por %p318, %p319
      %p321 = scmp.ne.s32.totalorder %s313, %s315
      %p322 = scmp.eq.s32.totalorder %s32, 1
      %p323 = por %p321, %p322
      %p324 = scmp.ne.s32.totalorder %s315, %s316
      %p325 = scmp.eq.s32.totalorder %s32, 0
      %p326 = por %p324, %p325
      %p327 = scmp.ne.s32.totalorder %s315, %s316
      %p328 = scmp.eq.s32.totalorder %s33, 1
      %p329 = por %p327, %p328
      %p331 = scmp.ne.s32.totalorder %s316, %s330
      %p332 = scmp.eq.s32.totalorder %s33, 0
      %p333 = por %p331, %p332
      %s335 = sadd.s32 %s334, 1
      %p338 = scmp.eq.s32.totalorder %s27, 1
      %p339 = scmp.ne.s32.totalorder %s334, %s336
      %p340 = scmp.eq.s32.totalorder %s27, 0
      %p341 = por %p339, %p340
      %p342 = scmp.ne.s32.totalorder %s334, %s336
      %p343 = scmp.eq.s32.totalorder %s32, 1
      %p344 = por %p342, %p343
      %p345 = scmp.ne.s32.totalorder %s336, %s337
      %p346 = scmp.eq.s32.totalorder %s32, 0
      %p347 = por %p345, %p346
      %p348 = scmp.ne.s32.totalorder %s336, %s337
      %p349 = scmp.eq.s32.totalorder %s33, 1
      %p350 = por %p348, %p349
      %p352 = scmp.ne.s32.totalorder %s337, %s351
      %p353 = scmp.eq.s32.totalorder %s33, 0
      %p354 = por %p352, %p353
      %s356 = sadd.s32 %s355, 1
      %p359 = scmp.eq.s32.totalorder %s27, 1
      %p360 = scmp.ne.s32.totalorder %s355, %s357
      %p361 = scmp.eq.s32.totalorder %s27, 0
      %p362 = por %p360, %p361
      %p363 = scmp.ne.s32.totalorder %s355, %s357
      %p364 = scmp.eq.s32.totalorder %s32, 1
      %p365 = por %p363, %p364
      %p366 = scmp.ne.s32.totalorder %s357, %s358
      %p367 = scmp.eq.s32.totalorder %s32, 0
      %p368 = por %p366, %p367
      %p369 = scmp.ne.s32.totalorder %s357, %s358
      %p370 = scmp.eq.s32.totalorder %s33, 1
      %p371 = por %p369, %p370
      %p373 = scmp.ne.s32.totalorder %s358, %s372
      %p374 = scmp.eq.s32.totalorder %s33, 0
      %p375 = por %p373, %p374
      %s377 = sadd.s32 %s376, 1
      %p380 = scmp.eq.s32.totalorder %s27, 1
      %p381 = scmp.ne.s32.totalorder %s376, %s378
      %p382 = scmp.eq.s32.totalorder %s27, 0
      %p383 = por %p381, %p382
      %p384 = scmp.ne.s32.totalorder %s376, %s378
      %p385 = scmp.eq.s32.totalorder %s32, 1
      %p386 = por %p384, %p385
      %p387 = scmp.ne.s32.totalorder %s378, %s379
      %p388 = scmp.eq.s32.totalorder %s32, 0
      %p389 = por %p387, %p388
      %p390 = scmp.ne.s32.totalorder %s378, %s379
      %p391 = scmp.eq.s32.totalorder %s33, 1
      %p392 = por %p390, %p391
      %p394 = scmp.ne.s32.totalorder %s379, %s393
      %p395 = scmp.eq.s32.totalorder %s33, 0
      %p396 = por %p394, %p395
      %s398 = sadd.s32 %s397, 1
      %p401 = scmp.eq.s32.totalorder %s27, 1
      %p402 = scmp.ne.s32.totalorder %s397, %s399
      %p403 = scmp.eq.s32.totalorder %s27, 0
      %p404 = por %p402, %p403
      %p405 = scmp.ne.s32.totalorder %s397, %s399
      %p406 = scmp.eq.s32.totalorder %s32, 1
      %p407 = por %p405, %p406
      %p408 = scmp.ne.s32.totalorder %s399, %s400
      %p409 = scmp.eq.s32.totalorder %s32, 0
      %p410 = por %p408, %p409
      %p411 = scmp.ne.s32.totalorder %s399, %s400
      %p412 = scmp.eq.s32.totalorder %s33, 1
      %p413 = por %p411, %p412
      %p415 = scmp.ne.s32.totalorder %s400, %s414
      %p416 = scmp.eq.s32.totalorder %s33, 0
      %p417 = por %p415, %p416
      %s418 = ssub.s32 %s27, %s34
      %p419 = scmp.eq.s32.totalorder %s418, 0
      %s421 = sadd.s32 %s420, 1
      %s422 = scalar_select %p419, %s420, %s421
      %p425 = pneg %p419
      %p426 = scmp.eq.s32.totalorder %s27, 1
      %p427 = por %p425, %p426
      %p428 = scmp.ne.s32.totalorder %s420, %s423
      %p429 = scmp.eq.s32.totalorder %s27, 0
      %p430 = por %p428, %p429
      %p431 = scmp.ne.s32.totalorder %s420, %s423
      %p432 = scmp.eq.s32.totalorder %s32, 1
      %p433 = por %p431, %p432
      %p434 = scmp.ne.s32.totalorder %s423, %s424
      %p435 = scmp.eq.s32.totalorder %s32, 0
      %p436 = por %p434, %p435
      %p437 = scmp.ne.s32.totalorder %s423, %s424
      %p438 = scmp.eq.s32.totalorder %s33, 1
      %p439 = por %p437, %p438
      %p441 = scmp.ne.s32.totalorder %s424, %s440
      %p442 = scmp.eq.s32.totalorder %s33, 0
      %p443 = por %p441, %p442
      %p444 = scmp.le.s32.totalorder 1, %s27
      %p445 = scmp.lt.s32.totalorder %s27, 3
      %p446 = pnand %p444, %p445
      %p447 = pneg %p446
      // Predicated region
      $region9: #{gpt2_forward.1} parent=5 // pred_check
        _
      $region10: #{gpt2_forward.1} parent=5 // pred_check_branch
        %449 = sbr.rel (%p446) target = $region12
      $region11: #{gpt2_forward.1} parent=5 // pred_region
        %s450 = ssub.s32 %s27, 1
        // Predicated region
        $region13: #{gpt2_forward.1} parent=11 // pred_check
          %p451 = pneg %p74
        $region14: #{gpt2_forward.1} parent=11 // pred_check_branch
          %453 = sbr.rel (%p451) target = $region16
        $region15: #{gpt2_forward.1} parent=11 // pred_region
          _
        $region16: #{gpt2_forward.1} parent=11 // pred_fallthru
          _
        // Predicated region
        $region17: #{gpt2_forward.1} parent=11 // pred_check
          %p454 = pneg %p95
        $region18: #{gpt2_forward.1} parent=11 // pred_check_branch
          %456 = sbr.rel (%p454) target = $region20
        $region19: #{gpt2_forward.1} parent=11 // pred_region
          _
        $region20: #{gpt2_forward.1} parent=11 // pred_fallthru
          _
        // Predicated region
        $region21: #{gpt2_forward.1} parent=11 // pred_check
          %p457 = pneg %p116
        $region22: #{gpt2_forward.1} parent=11 // pred_check_branch
          %459 = sbr.rel (%p457) target = $region24
        $region23: #{gpt2_forward.1} parent=11 // pred_region
          _
        $region24: #{gpt2_forward.1} parent=11 // pred_fallthru
          _
        // Predicated region
        $region25: #{gpt2_forward.1} parent=11 // pred_check
          %p460 = pneg %p137
        $region26: #{gpt2_forward.1} parent=11 // pred_check_branch
          %462 = sbr.rel (%p460) target = $region28
        $region27: #{gpt2_forward.1} parent=11 // pred_region
          _
        $region28: #{gpt2_forward.1} parent=11 // pred_fallthru
          _
        // Predicated region
        $region29: #{gpt2_forward.1} parent=11 // pred_check
          %p463 = pneg %p158
        $region30: #{gpt2_forward.1} parent=11 // pred_check_branch
          %465 = sbr.rel (%p463) target = $region32
        $region31: #{gpt2_forward.1} parent=11 // pred_region
          _
        $region32: #{gpt2_forward.1} parent=11 // pred_fallthru
          _
        // Predicated region
        $region33: #{gpt2_forward.1} parent=11 // pred_check
          %p466 = pneg %p179
        $region34: #{gpt2_forward.1} parent=11 // pred_check_branch
          %468 = sbr.rel (%p466) target = $region36
        $region35: #{gpt2_forward.1} parent=11 // pred_region
          _
        $region36: #{gpt2_forward.1} parent=11 // pred_fallthru
          _
        // Predicated region
        $region37: #{gpt2_forward.1} parent=11 // pred_check
          %p469 = pneg %p200
        $region38: #{gpt2_forward.1} parent=11 // pred_check_branch
          %471 = sbr.rel (%p469) target = $region40
        $region39: #{gpt2_forward.1} parent=11 // pred_region
          _
        $region40: #{gpt2_forward.1} parent=11 // pred_fallthru
          _
        // Predicated region
        $region41: #{gpt2_forward.1} parent=11 // pred_check
          %p472 = pneg %p221
        $region42: #{gpt2_forward.1} parent=11 // pred_check_branch
          %474 = sbr.rel (%p472) target = $region44
        $region43: #{gpt2_forward.1} parent=11 // pred_region
          _
        $region44: #{gpt2_forward.1} parent=11 // pred_fallthru
          _
        // Predicated region
        $region45: #{gpt2_forward.1} parent=11 // pred_check
          %p475 = pneg %p242
        $region46: #{gpt2_forward.1} parent=11 // pred_check_branch
          %477 = sbr.rel (%p475) target = $region48
        $region47: #{gpt2_forward.1} parent=11 // pred_region
          _
        $region48: #{gpt2_forward.1} parent=11 // pred_fallthru
          _
        // Predicated region
        $region49: #{gpt2_forward.1} parent=11 // pred_check
          %p478 = pneg %p263
        $region50: #{gpt2_forward.1} parent=11 // pred_check_branch
          %480 = sbr.rel (%p478) target = $region52
        $region51: #{gpt2_forward.1} parent=11 // pred_region
          _
        $region52: #{gpt2_forward.1} parent=11 // pred_fallthru
          _
        // Predicated region
        $region53: #{gpt2_forward.1} parent=11 // pred_check
          %p481 = pneg %p284
        $region54: #{gpt2_forward.1} parent=11 // pred_check_branch
          %483 = sbr.rel (%p481) target = $region56
        $region55: #{gpt2_forward.1} parent=11 // pred_region
          _
        $region56: #{gpt2_forward.1} parent=11 // pred_fallthru
          _
        // Predicated region
        $region57: #{gpt2_forward.1} parent=11 // pred_check
          %p484 = pneg %p305
        $region58: #{gpt2_forward.1} parent=11 // pred_check_branch
          %486 = sbr.rel (%p484) target = $region60
        $region59: #{gpt2_forward.1} parent=11 // pred_region
          _
        $region60: #{gpt2_forward.1} parent=11 // pred_fallthru
          _
        // Predicated region
        $region61: #{gpt2_forward.1} parent=11 // pred_check
          %p487 = pneg %p326
        $region62: #{gpt2_forward.1} parent=11 // pred_check_branch
          %489 = sbr.rel (%p487) target = $region64
        $region63: #{gpt2_forward.1} parent=11 // pred_region
          _
        $region64: #{gpt2_forward.1} parent=11 // pred_fallthru
          _
        // Predicated region
        $region65: #{gpt2_forward.1} parent=11 // pred_check
          %p490 = pneg %p347
        $region66: #{gpt2_forward.1} parent=11 // pred_check_branch
          %492 = sbr.rel (%p490) target = $region68
        $region67: #{gpt2_forward.1} parent=11 // pred_region
          _
        $region68: #{gpt2_forward.1} parent=11 // pred_fallthru
          _
        // Predicated region
        $region69: #{gpt2_forward.1} parent=11 // pred_check
          %p493 = pneg %p368
        $region70: #{gpt2_forward.1} parent=11 // pred_check_branch
          %495 = sbr.rel (%p493) target = $region72
        $region71: #{gpt2_forward.1} parent=11 // pred_region
          _
        $region72: #{gpt2_forward.1} parent=11 // pred_fallthru
          _
        // Predicated region
        $region73: #{gpt2_forward.1} parent=11 // pred_check
          %p496 = pneg %p389
        $region74: #{gpt2_forward.1} parent=11 // pred_check_branch
          %498 = sbr.rel (%p496) target = $region76
        $region75: #{gpt2_forward.1} parent=11 // pred_region
          _
        $region76: #{gpt2_forward.1} parent=11 // pred_fallthru
          _
        // Predicated region
        $region77: #{gpt2_forward.1} parent=11 // pred_check
          %p499 = pneg %p410
        $region78: #{gpt2_forward.1} parent=11 // pred_check_branch
          %501 = sbr.rel (%p499) target = $region80
        $region79: #{gpt2_forward.1} parent=11 // pred_region
          _
        $region80: #{gpt2_forward.1} parent=11 // pred_fallthru
          _
      $region12: #{gpt2_forward.1} parent=5 // pred_fallthru
        _
      %p502 = scmp.lt.s32.totalorder %s27, 2
      // Predicated region
      $region81: #{gpt2_forward.1} parent=5 // pred_check
        %p503 = pneg %p502
      $region82: #{gpt2_forward.1} parent=5 // pred_check_branch
        %505 = sbr.rel (%p503) target = $region84
      $region83: #{gpt2_forward.1} parent=5 // pred_region
        // Predicated region
        $region85: #{gpt2_forward.1} parent=83 // pred_check
          %p506 = pneg %p47
        $region86: #{gpt2_forward.1} parent=83 // pred_check_branch
          %508 = sbr.rel (%p506) target = $region88
        $region87: #{gpt2_forward.1} parent=83 // pred_region
          %p509 = scmp.lt.s32.totalorder %s27, 1
          %s510 = scalar_select %p509, %s27, 1
          %s511 = smul.addr %s510, 8
          %s512 = scalar_lea.vmem %s0, %s511
        $region88: #{gpt2_forward.1} parent=83 // pred_fallthru
          _
      $region84: #{gpt2_forward.1} parent=5 // pred_fallthru
        _
      %p513 = scmp.le.s32.totalorder 1, %s27
      %p514 = scmp.lt.s32.totalorder %s27, 3
      %p515 = pnand %p513, %p514
      %p516 = pneg %p515
      // Predicated region
      $region89: #{gpt2_forward.1} parent=5 // pred_check
        _
      $region90: #{gpt2_forward.1} parent=5 // pred_check_branch
        %518 = sbr.rel (%p515) target = $region92
      $region91: #{gpt2_forward.1} parent=5 // pred_region
        %s519 = ssub.s32 %s27, 1
        %p520 = scmp.lt.s32.totalorder %s32, 1
        %s521 = scalar_select %p520, %s32, 1
        %s522 = smul.addr %s521, 8
        %s523 = scalar_lea.vmem %s0, %s522
        %p524 = pneg %p53
        %p525 = pneg %p50
        %p526 = pneg %p74
        %p527 = pneg %p71
        %p528 = pneg %p95
        %p529 = pneg %p92
        %p530 = pneg %p116
        %p531 = pneg %p113
        %p532 = pneg %p137
        %p533 = pneg %p134
        %p534 = pneg %p158
        %p535 = pneg %p155
        %p536 = pneg %p179
        %p537 = pneg %p176
        %p538 = pneg %p200
        %p539 = pneg %p197
        %p540 = pneg %p221
        %p541 = pneg %p218
        %p542 = pneg %p242
        %p543 = pneg %p239
        %p544 = pneg %p263
        %p545 = pneg %p260
        %p546 = pneg %p284
        %p547 = pneg %p281
        %p548 = pneg %p305
        %p549 = pneg %p302
        %p550 = pneg %p326
        %p551 = pneg %p323
        %p552 = pneg %p347
        %p553 = pneg %p344
        %p554 = pneg %p368
        %p555 = pneg %p365
        %p556 = pneg %p389
        %p557 = pneg %p386
        %p558 = pneg %p410
        %p559 = pneg %p407
        %p560 = pneg %p436
        %p561 = pneg %p433
        %s562 = sand.u32 %s423, 1
        %s563 = scalar_lea.sflag [#allocation3], %s562
        %s564 = sand.u32 %s423, 1
        %s565 = smul.addr %s564, 16
        %s566 = scalar_lea.vmem [#allocation2], %s565
        %p567 = scmp.lt.s32.totalorder %s32, 1
        %s568 = scalar_select %p567, %s32, 1
        %s569 = smul.addr %s568, 8
        %s570 = scalar_lea.vmem %s0, %s569
        %v572 = vld [vmem:[%s570] sm:$0xff]
        %v573 = vlaneseq
        %v574 = vand.u32 %v573, 127
        %v575 = vadd.s32 %v574, 128
        %576 = vset.pattern.permute.xlu0 0
        %577 = vperm.xlu0 %576, %v572
        %v578 = vpop.permute.xlu0 %577
        %vm579 = vcmp.eq.s32.totalorder %v574, %v578
        %vm580 = vcmp.eq.s32.totalorder %v575, %v578
        %v581 = vsel %vm579, 1, 0
        %v582 = vsel %vm580, 1, 0
        %v583 = vcvt.s32.f32 %v581
        %v584 = vcvt.s32.f32 %v582
        %v585 = vpack.c.bf16 %v583, %v583
        %v586 = vpack.c.bf16 %v584, %v584
        %v587 = vld [vmem:[%s1] sm:$0xf]
        %v588 = vld [vmem:[%s1 + $0x4] sm:$0xf]
        %v589 = vld [vmem:[%s1 + $0x8] sm:$0xf]
        %v590 = vld [vmem:[%s1 + $0xc] sm:$0xf]
        %v591 = vld [vmem:[%s1 + $0x10] sm:$0xf]
        %v592 = vld [vmem:[%s1 + $0x14] sm:$0xf]
        %v593 = vld [vmem:[%s1 + $0x18] sm:$0xf]
        %v594 = vld [vmem:[%s1 + $0x1c] sm:$0xf]
        %v595 = vld [vmem:[%s1 + $0x20] sm:$0xf]
        %v596 = vld [vmem:[%s1 + $0x24] sm:$0xf]
        %v597 = vld [vmem:[%s1 + $0x28] sm:$0xf]
        %v598 = vld [vmem:[%s1 + $0x2c] sm:$0xf]
        %v599 = vld [vmem:[%s1 + $0x30] sm:$0xf]
        %v600 = vld [vmem:[%s1 + $0x34] sm:$0xf]
        %v601 = vld [vmem:[%s1 + $0x38] sm:$0xf]
        %v602 = vld [vmem:[%s1 + $0x3c] sm:$0xf]
        %v603 = vld [vmem:[%s1 + $0x40] sm:$0xf]
        %v604 = vld [vmem:[%s1 + $0x44] sm:$0xf]
        %v605 = vld [vmem:[%s1 + $0x48] sm:$0xf]
        %v606 = vld [vmem:[%s1 + $0x4c] sm:$0xf]
        %v607 = vld [vmem:[%s1 + $0x50] sm:$0xf]
        %v608 = vld [vmem:[%s1 + $0x54] sm:$0xf]
        %v609 = vld [vmem:[%s1 + $0x58] sm:$0xf]
        %v610 = vld [vmem:[%s1 + $0x5c] sm:$0xf]
        %v611 = vld [vmem:[%s1 + $0x60] sm:$0xf]
        %v612 = vld [vmem:[%s1 + $0x64] sm:$0xf]
        %v613 = vld [vmem:[%s1 + $0x68] sm:$0xf]
        %v614 = vld [vmem:[%s1 + $0x6c] sm:$0xf]
        %v615 = vld [vmem:[%s1 + $0x70] sm:$0xf]
        %v616 = vld [vmem:[%s1 + $0x74] sm:$0xf]
        %v617 = vld [vmem:[%s1 + $0x78] sm:$0xf]
        %v618 = vld [vmem:[%s1 + $0x7c] sm:$0xf]
        %v619 = vld [vmem:[%s3] sm:$0xff]
        %v652 = vunpack.c.l.b16 %v587
        %v653 = vunpack.c.l.b16 %v588
        %v654 = vunpack.c.l.b16 %v589
        %v655 = vunpack.c.l.b16 %v590
        %v656 = vunpack.c.l.b16 %v591
        %v657 = vunpack.c.l.b16 %v592
        %v658 = vunpack.c.l.b16 %v593
        %v659 = vunpack.c.l.b16 %v594
        %v660 = vunpack.c.l.b16 %v595
        %v661 = vunpack.c.l.b16 %v596
        %v662 = vunpack.c.l.b16 %v597
        %v663 = vunpack.c.l.b16 %v598
        %v664 = vunpack.c.l.b16 %v599
        %v665 = vunpack.c.l.b16 %v600
        %v666 = vunpack.c.l.b16 %v601
        %v667 = vunpack.c.l.b16 %v602
        %v668 = vunpack.c.l.b16 %v603
        %v669 = vunpack.c.l.b16 %v604
        %v670 = vunpack.c.l.b16 %v605
        %v671 = vunpack.c.l.b16 %v606
        %v672 = vunpack.c.l.b16 %v607
        %v673 = vunpack.c.l.b16 %v608
        %v674 = vunpack.c.l.b16 %v609
        %v675 = vunpack.c.l.b16 %v610
        %v676 = vunpack.c.l.b16 %v611
        %v677 = vunpack.c.l.b16 %v612
        %v678 = vunpack.c.l.b16 %v613
        %v679 = vunpack.c.l.b16 %v614
        %v680 = vunpack.c.l.b16 %v615
        %v681 = vunpack.c.l.b16 %v616
        %v682 = vunpack.c.l.b16 %v617
        %v683 = vunpack.c.l.b16 %v618
        %v684 = vpack.c.b16 %v653, %v652
        %v685 = vpack.c.b16 %v655, %v654
        %v686 = vpack.c.b16 %v657, %v656
        %v687 = vpack.c.b16 %v659, %v658
        %v688 = vpack.c.b16 %v661, %v660
        %v689 = vpack.c.b16 %v663, %v662
        %v690 = vpack.c.b16 %v665, %v664
        %v691 = vpack.c.b16 %v667, %v666
        %v692 = vpack.c.b16 %v669, %v668
        %v693 = vpack.c.b16 %v671, %v670
        %v694 = vpack.c.b16 %v673, %v672
        %v695 = vpack.c.b16 %v675, %v674
        %v696 = vpack.c.b16 %v677, %v676
        %v697 = vpack.c.b16 %v679, %v678
        %v698 = vpack.c.b16 %v681, %v680
        %v699 = vpack.c.b16 %v683, %v682
        %716 = vmatprep.subr.bf16.mxu0 0
        %717 = vmatpush1.bf16.msra.mxu0 %v684
        %718 = vmatprep.subr.bf16.mxu0 0
        %719 = vmatpush1.bf16.msra.mxu0 %v685
        %720 = vmatprep.subr.bf16.mxu0 0
        %721 = vmatpush1.bf16.msra.mxu0 %v686
        %722 = vmatprep.subr.bf16.mxu0 0
        %723 = vmatpush1.bf16.msra.mxu0 %v687
        %724 = vmatprep.subr.bf16.mxu0 0
        %725 = vmatpush1.bf16.msra.mxu0 %v688
        %726 = vmatprep.subr.bf16.mxu0 0
        %727 = vmatpush1.bf16.msra.mxu0 %v689
        %728 = vmatprep.subr.bf16.mxu0 0
        %729 = vmatpush1.bf16.msra.mxu0 %v690
        %730 = vmatprep.subr.bf16.mxu0 0
        %731 = vmatpush1.bf16.msra.mxu0 %v691
        %732 = vmatprep.subr.bf16.mxu0 0
        %733 = vmatpush1.bf16.msra.mxu0 %v692
        %734 = vmatprep.subr.bf16.mxu0 0
        %735 = vmatpush1.bf16.msra.mxu0 %v693
        %736 = vmatprep.subr.bf16.mxu0 0
        %737 = vmatpush1.bf16.msra.mxu0 %v694
        %738 = vmatprep.subr.bf16.mxu0 0
        %739 = vmatpush1.bf16.msra.mxu0 %v695
        %740 = vmatprep.subr.bf16.mxu0 0
        %741 = vmatpush1.bf16.msra.mxu0 %v696
        %742 = vmatprep.subr.bf16.mxu0 0
        %743 = vmatpush1.bf16.msra.mxu0 %v697
        %744 = vmatprep.subr.bf16.mxu0 0
        %745 = vmatpush1.bf16.msra.mxu0 %v698
        %746 = vmatprep.subr.bf16.mxu0 0
        %747 = vmatpush1.bf16.msra.mxu0 %v699
        %748 = vmatprep.mubr.bf16.mxu0 %v586
        %749 = vmatmul.mubr.bf16.gmra.mrb[0].mxu0 %v585
        %v750 = vpop.f32.mrb[0].mxu0
        %v751 = vadd.f32 %v619, %v750
        %v752 = vpop.f32.mrb[0].mxu0
        %v753 = vpop.f32.mrb[0].mxu0
        %v754 = vpop.f32.mrb[0].mxu0
        %755 = vdwg.mxu0
        %v756 = vlaneseq
        %v757 = vshrl.u32 %v756, 7
        %vm758 = vcmp.le.s32.totalorder %v574, %v757
        %v759 = vsel %vm758, 0.0, -1e+30
        %v760 = vld [vmem:[%s4] sm:$0x1]
        %v761 = vld [vmem:[%s5] sm:$0x1]
        %vm762 = vcmask 523264
        %v763 = vsel %vm762, %v751, 0.0
        %764 = vadd.xlane.f32.xlu0 %v763
        %v765 = vpop.xlane.xlu0 %764
        %v766 = vrcp.pop 64.0
        %v767 = vmul.f32 %v765, %v766
        %v768 = vsub.f32 %v751, %v767
        %v769 = vmul.f32 %v768, %v768
        %v770 = vsel %vm762, %v769, 0.0
        %771 = vadd.xlane.f32.xlu0 %v770
        %v772 = vpop.xlane.xlu0 %771
        %v773 = vmul.f32 %v772, %v766
        %v774 = vadd.f32 %v773, 1e-05
        %v775 = vrsqrt.pop %v774
        %v776 = vmul.f32 %v768, %v775
        %v777 = vlaneseq
        %v778 = vshrl.u32 %v777, 7
        %v779 = vsub.s32 0, %v778
        %v780 = vrot.slane %v760, %v779
        %v781 = vmul.f32 %v776, %v780
        %v782 = vlaneseq
        %v783 = vshrl.u32 %v782, 7
        %v784 = vsub.s32 0, %v783
        %v785 = vrot.slane %v761, %v784
        %v786 = vadd.f32 %v781, %v785
        %v787 = vpack.c.bf16 %v786, %v786
        %v788 = vld [vmem:[%s6] sm:$0xff]
        %v789 = vld [vmem:[%s6 + $0x8] sm:$0xff]
        %v790 = vld [vmem:[%s6 + $0x10] sm:$0xff]
        %v791 = vld [vmem:[%s6 + $0x18] sm:$0xff]
        %v792 = vld [vmem:[%s6 + $0x20] sm:$0xff]
        %v793 = vld [vmem:[%s6 + $0x28] sm:$0xff]
        %v794 = vld [vmem:[%s6 + $0x30] sm:$0xff]
        %v795 = vld [vmem:[%s6 + $0x38] sm:$0xff]
        %v796 = vld [vmem:[%s7] ss:$2 sm:$0x3]
        %v798 = vlaneseq
        %v799 = vshrl.u32 %v798, 7
        %v800 = vsub.s32 0, %v799
        %v801 = vrot.slane %v796, %v800
        %v802 = vlaneseq
        %v803 = vshrl.u32 %v802, 7
        %v804 = vsub.s32 1, %v803
        %v805 = vrot.slane %v796, %v804
        %v816 = vunpack.c.l.b16 %v788
        %v817 = vunpack.c.h.b16 %v788
        %v818 = vunpack.c.l.b16 %v789
        %v819 = vunpack.c.h.b16 %v789
        %v820 = vunpack.c.l.b16 %v790
        %v821 = vunpack.c.h.b16 %v790
        %v822 = vunpack.c.l.b16 %v791
        %v823 = vunpack.c.h.b16 %v791
        %v824 = vunpack.c.l.b16 %v792
        %v825 = vunpack.c.h.b16 %v792
        %v826 = vunpack.c.l.b16 %v793
        %v827 = vunpack.c.h.b16 %v793
        %v828 = vunpack.c.l.b16 %v794
        %v829 = vunpack.c.h.b16 %v794
        %v830 = vunpack.c.l.b16 %v795
        %v831 = vunpack.c.h.b16 %v795
        %v832 = vpack.c.b16 %v818, %v816
        %v833 = vpack.c.b16 %v819, %v817
        %v834 = vpack.c.b16 %v822, %v820
        %v835 = vpack.c.b16 %v823, %v821
        %v836 = vpack.c.b16 %v826, %v824
        %v837 = vpack.c.b16 %v827, %v825
        %v838 = vpack.c.b16 %v830, %v828
        %v839 = vpack.c.b16 %v831, %v829
        %v849 = vsel %vm762, %v787, 0
        %851 = vmatprep.subr.bf16.mxu0 %v833
        %852 = vmatpush1.bf16.msra.mxu0 %v832
        %853 = vmatprep.subr.bf16.mxu0 %v835
        %854 = vmatpush1.bf16.msra.mxu0 %v834
        %855 = vmatprep.subr.bf16.mxu0 %v837
        %856 = vmatpush1.bf16.msra.mxu0 %v836
        %857 = vmatprep.subr.bf16.mxu0 %v839
        %858 = vmatpush1.bf16.msra.mxu0 %v838
        %859 = vmatprep.subr.bf16.mxu0 0
        %860 = vmatpush1.bf16.msra.mxu0 0
        %861 = vmatprep.subr.bf16.mxu0 0
        %862 = vmatpush1.bf16.msra.mxu0 0
        %863 = vmatprep.subr.bf16.mxu0 0
        %864 = vmatpush1.bf16.msra.mxu0 0
        %865 = vmatprep.subr.bf16.mxu0 0
        %866 = vmatpush1.bf16.msra.mxu0 0
        %867 = vmatprep.subr.bf16.mxu0 0
        %868 = vmatpush1.bf16.msra.mxu0 0
        %869 = vmatprep.subr.bf16.mxu0 0
        %870 = vmatpush1.bf16.msra.mxu0 0
        %871 = vmatprep.subr.bf16.mxu0 0
        %872 = vmatpush1.bf16.msra.mxu0 0
        %873 = vmatprep.subr.bf16.mxu0 0
        %874 = vmatpush1.bf16.msra.mxu0 0
        %875 = vmatprep.subr.bf16.mxu0 0
        %876 = vmatpush1.bf16.msra.mxu0 0
        %877 = vmatprep.subr.bf16.mxu0 0
        %878 = vmatpush1.bf16.msra.mxu0 0
        %879 = vmatprep.subr.bf16.mxu0 0
        %880 = vmatpush1.bf16.msra.mxu0 0
        %881 = vmatprep.subr.bf16.mxu0 0
        %882 = vmatpush1.bf16.msra.mxu0 0
        %883 = vmatprep.mubr.bf16.mxu0 0
        %884 = vmatmul.mubr.bf16.gmra.mrb[0].mxu0 %v849
        %v885 = vpop.f32.mrb[0].mxu0
        %v886 = vadd.f32 %v801, %v885
        %v887 = vpop.f32.mrb[0].mxu0
        %v888 = vadd.f32 %v805, %v887
        %v889 = vpop.f32.mrb[0].mxu0
        %v890 = vpop.f32.mrb[0].mxu0
        %891 = vdwg.mxu0
        %893 = vrot.lane.b32.xlu0 %v886, 112
        %v894 = vpop.permute.xlu0 %893
        %896 = vrot.lane.b32.xlu0 %v886, 96
        %v897 = vpop.permute.xlu0 %896
        %899 = vrot.lane.b32.xlu0 %v886, 80
        %v900 = vpop.permute.xlu0 %899
        %v902 = vpack.c.bf16 %v886, %v886
        %v903 = vpack.c.bf16 %v894, %v894
        %v904 = vpack.c.bf16 %v897, %v897
        %v905 = vpack.c.bf16 %v900, %v900
        %907 = vrot.lane.b32.xlu0 %v888, 112
        %v908 = vpop.permute.xlu0 %907
        %910 = vrot.lane.b32.xlu0 %v888, 96
        %v911 = vpop.permute.xlu0 %910
        %913 = vrot.lane.b32.xlu0 %v888, 80
        %v914 = vpop.permute.xlu0 %913
        %v916 = vpack.c.bf16 %v888, %v888
        %v917 = vpack.c.bf16 %v908, %v908
        %v918 = vpack.c.bf16 %v911, %v911
        %v919 = vpack.c.bf16 %v914, %v914
        %921 = vrot.lane.b32.xlu0 %v902, 64
        %v922 = vpop.permute.xlu0 %921
        %vm923 = vcmask 130048
        %v925 = vsel %vm923, %v902, 0
        %v928 = vsel %vm923, %v922, 0
        %930 = vmatprep.subr.bf16.mxu0 0
        %931 = vmatpush1.bf16.xpose.msra.mxu0 %v928
        %932 = vmatprep.subr.bf16.mxu0 0
        %933 = vmatpush1.bf16.xpose.msra.mxu0 0
        %934 = vmatprep.subr.bf16.mxu0 0
        %935 = vmatpush1.bf16.xpose.msra.mxu0 0
        %936 = vmatprep.subr.bf16.mxu0 0
        %937 = vmatpush1.bf16.xpose.msra.mxu0 0
        %938 = vmatprep.subr.bf16.mxu0 0
        %939 = vmatpush1.bf16.xpose.msra.mxu0 0
        %940 = vmatprep.subr.bf16.mxu0 0
        %941 = vmatpush1.bf16.xpose.msra.mxu0 0
        %942 = vmatprep.subr.bf16.mxu0 0
        %943 = vmatpush1.bf16.xpose.msra.mxu0 0
        %944 = vmatprep.subr.bf16.mxu0 0
        %945 = vmatpush1.bf16.xpose.msra.mxu0 0
        %946 = vmatprep.subr.bf16.mxu0 0
        %947 = vmatpush1.bf16.xpose.msra.mxu0 0
        %948 = vmatprep.subr.bf16.mxu0 0
        %949 = vmatpush1.bf16.xpose.msra.mxu0 0
        %950 = vmatprep.subr.bf16.mxu0 0
        %951 = vmatpush1.bf16.xpose.msra.mxu0 0
        %952 = vmatprep.subr.bf16.mxu0 0
        %953 = vmatpush1.bf16.xpose.msra.mxu0 0
        %954 = vmatprep.subr.bf16.mxu0 0
        %955 = vmatpush1.bf16.xpose.msra.mxu0 0
        %956 = vmatprep.subr.bf16.mxu0 0
        %957 = vmatpush1.bf16.xpose.msra.mxu0 0
        %958 = vmatprep.subr.bf16.mxu0 0
        %959 = vmatpush1.bf16.xpose.msra.mxu0 0
        %960 = vmatprep.subr.bf16.mxu0 0
        %961 = vmatpush1.bf16.xpose.msra.mxu0 0
        %962 = vmatprep.mubr.bf16.mxu0 0
        %963 = vmatmul.mubr.bf16.gmra.mrb[0].mxu0 %v925
        %v964 = vpop.f32.mrb[0].mxu0
        %v965 = vadd.f32 %v759, %v964
        %v966 = vpop.f32.mrb[0].mxu0
        %v967 = vpop.f32.mrb[0].mxu0
        %v968 = vpop.f32.mrb[0].mxu0
        %969 = vdwg.mxu0
        %971 = vrot.lane.b32.xlu0 %v903, 64
        %v972 = vpop.permute.xlu0 %971
        %v974 = vsel %vm923, %v903, 0
        %v977 = vsel %vm923, %v972, 0
        %979 = vmatprep.subr.bf16.mxu0 0
        %980 = vmatpush1.bf16.xpose.msra.mxu0 %v977
        %981 = vmatprep.subr.bf16.mxu0 0
        %982 = vmatpush1.bf16.xpose.msra.mxu0 0
        %983 = vmatprep.subr.bf16.mxu0 0
        %984 = vmatpush1.bf16.xpose.msra.mxu0 0
        %985 = vmatprep.subr.bf16.mxu0 0
        %986 = vmatpush1.bf16.xpose.msra.mxu0 0
        %987 = vmatprep.subr.bf16.mxu0 0
        %988 = vmatpush1.bf16.xpose.msra.mxu0 0
        %989 = vmatprep.subr.bf16.mxu0 0
        %990 = vmatpush1.bf16.xpose.msra.mxu0 0
        %991 = vmatprep.subr.bf16.mxu0 0
        %992 = vmatpush1.bf16.xpose.msra.mxu0 0
        %993 = vmatprep.subr.bf16.mxu0 0
        %994 = vmatpush1.bf16.xpose.msra.mxu0 0
        %995 = vmatprep.subr.bf16.mxu0 0
        %996 = vmatpush1.bf16.xpose.msra.mxu0 0
        %997 = vmatprep.subr.bf16.mxu0 0
        %998 = vmatpush1.bf16.xpose.msra.mxu0 0
        %999 = vmatprep.subr.bf16.mxu0 0
        %1000 = vmatpush1.bf16.xpose.msra.mxu0 0
        %1001 = vmatprep.subr.bf16.mxu0 0
        %1002 = vmatpush1.bf16.xpose.msra.mxu0 0
        %1003 = vmatprep.subr.bf16.mxu0 0
        %1004 = vmatpush1.bf16.xpose.msra.mxu0 0
        %1005 = vmatprep.subr.bf16.mxu0 0
        %1006 = vmatpush1.bf16.xpose.msra.mxu0 0
        %1007 = vmatprep.subr.bf16.mxu0 0
        %1008 = vmatpush1.bf16.xpose.msra.mxu0 0
        %1009 = vmatprep.subr.bf16.mxu0 0
        %1010 = vmatpush1.bf16.xpose.msra.mxu0 0
        %1011 = vmatprep.mubr.bf16.mxu0 0
        %1012 = vmatmul.mubr.bf16.gmra.mrb[0].mxu0 %v974
        %v1013 = vpop.f32.mrb[0].mxu0
        %v1014 = vadd.f32 %v759, %v1013
        %v1015 = vpop.f32.mrb[0].mxu0
        %v1016 = vpop.f32.mrb[0].mxu0
        %v1017 = vpop.f32.mrb[0].mxu0
        %1018 = vdwg.mxu0
        %1020 = vrot.lane.b32.xlu0 %v904, 64
        %v1021 = vpop.permute.xlu0 %1020
        %v1023 = vsel %vm923, %v904, 0
        %v1026 = vsel %vm923, %v1021, 0
        %1028 = vmatprep.subr.bf16.mxu0 0
        %1029 = vmatpush1.bf16.xpose.msra.mxu0 %v1026
        %1030 = vmatprep.subr.bf16.mxu0 0
        %1031 = vmatpush1.bf16.xpose.msra.mxu0 0
        %1032 = vmatprep.subr.bf16.mxu0 0
        %1033 = vmatpush1.bf16.xpose.msra.mxu0 0
        %1034 = vmatprep.subr.bf16.mxu0 0
        %1035 = vmatpush1.bf16.xpose.msra.mxu0 0
        %1036 = vmatprep.subr.bf16.mxu0 0
        %1037 = vmatpush1.bf16.xpose.msra.mxu0 0
        %1038 = vmatprep.subr.bf16.mxu0 0
        %1039 = vmatpush1.bf16.xpose.msra.mxu0 0
        %1040 = vmatprep.subr.bf16.mxu0 0
        %1041 = vmatpush1.bf16.xpose.msra.mxu0 0
        %1042 = vmatprep.subr.bf16.mxu0 0
        %1043 = vmatpush1.bf16.xpose.msra.mxu0 0
        %1044 = vmatprep.subr.bf16.mxu0 0
        %1045 = vmatpush1.bf16.xpose.msra.mxu0 0
        %1046 = vmatprep.subr.bf16.mxu0 0
        %1047 = vmatpush1.bf16.xpose.msra.mxu0 0
        %1048 = vmatprep.subr.bf16.mxu0 0
        %1049 = vmatpush1.bf16.xpose.msra.mxu0 0
        %1050 = vmatprep.subr.bf16.mxu0 0
        %1051 = vmatpush1.bf16.xpose.msra.mxu0 0
        %1052 = vmatprep.subr.bf16.mxu0 0
        %1053 = vmatpush1.bf16.xpose.msra.mxu0 0
        %1054 = vmatprep.subr.bf16.mxu0 0
        %1055 = vmatpush1.bf16.xpose.msra.mxu0 0
        %1056 = vmatprep.subr.bf16.mxu0 0
        %1057 = vmatpush1.bf16.xpose.msra.mxu0 0
        %1058 = vmatprep.subr.bf16.mxu0 0
        %1059 = vmatpush1.bf16.xpose.msra.mxu0 0
        %1060 = vmatprep.mubr.bf16.mxu0 0
        %1061 = vmatmul.mubr.bf16.gmra.mrb[0].mxu0 %v1023
        %v1062 = vpop.f32.mrb[0].mxu0
        %v1063 = vadd.f32 %v759, %v1062
        %v1064 = vpop.f32.mrb[0].mxu0
        %v1065 = vpop.f32.mrb[0].mxu0
        %v1066 = vpop.f32.mrb[0].mxu0
        %1067 = vdwg.mxu0
        %1069 = vrot.lane.b32.xlu0 %v905, 64
        %v1070 = vpop.permute.xlu0 %1069
        %v1072 = vsel %vm923, %v905, 0
        %v1075 = vsel %vm923, %v1070, 0
        %1077 = vmatprep.subr.bf16.mxu0 0
        %1078 = vmatpush1.bf16.xpose.msra.mxu0 %v1075
        %1079 = vmatprep.subr.bf16.mxu0 0
        %1080 = vmatpush1.bf16.xpose.msra.mxu0 0
        %1081 = vmatprep.subr.bf16.mxu0 0
        %1082 = vmatpush1.bf16.xpose.msra.mxu0 0
        %1083 = vmatprep.subr.bf16.mxu0 0
        %1084 = vmatpush1.bf16.xpose.msra.mxu0 0
        %1085 = vmatprep.subr.bf16.mxu0 0
        %1086 = vmatpush1.bf16.xpose.msra.mxu0 0
        %1087 = vmatprep.subr.bf16.mxu0 0
        %1088 = vmatpush1.bf16.xpose.msra.mxu0 0
        %1089 = vmatprep.subr.bf16.mxu0 0
        %1090 = vmatpush1.bf16.xpose.msra.mxu0 0
        %1091 = vmatprep.subr.bf16.mxu0 0
        %1092 = vmatpush1.bf16.xpose.msra.mxu0 0
        %1093 = vmatprep.subr.bf16.mxu0 0
        %1094 = vmatpush1.bf16.xpose.msra.mxu0 0
        %1095 = vmatprep.subr.bf16.mxu0 0
        %1096 = vmatpush1.bf16.xpose.msra.mxu0 0
        %1097 = vmatprep.subr.bf16.mxu0 0
        %1098 = vmatpush1.bf16.xpose.msra.mxu0 0
        %1099 = vmatprep.subr.bf16.mxu0 0
        %1100 = vmatpush1.bf16.xpose.msra.mxu0 0
        %1101 = vmatprep.subr.bf16.mxu0 0
        %1102 = vmatpush1.bf16.xpose.msra.mxu0 0
        %1103 = vmatprep.subr.bf16.mxu0 0
        %1104 = vmatpush1.bf16.xpose.msra.mxu0 0
        %1105 = vmatprep.subr.bf16.mxu0 0
        %1106 = vmatpush1.bf16.xpose.msra.mxu0 0
        %1107 = vmatprep.subr.bf16.mxu0 0
        %1108 = vmatpush1.bf16.xpose.msra.mxu0 0
        %1109 = vmatprep.mubr.bf16.mxu0 0
        %1110 = vmatmul.mubr.bf16.gmra.mrb[0].mxu0 %v1072
        %v1111 = vpop.f32.mrb[0].mxu0
        %v1112 = vadd.f32 %v759, %v1111
        %v1113 = vpop.f32.mrb[0].mxu0
        %v1114 = vpop.f32.mrb[0].mxu0
        %v1115 = vpop.f32.mrb[0].mxu0
        %1116 = vdwg.mxu0
        %vm1117 = vcmask 64512
        %v1118 = vsel %vm1117, %v965, -inf
        %1119 = vmax.xlane.f32.xlu0 %v1118
        %v1120 = vpop.xlane.xlu0 %1119
        %v1121 = vsel %vm1117, %v1014, -inf
        %1122 = vmax.xlane.f32.xlu0 %v1121
        %v1123 = vpop.xlane.xlu0 %1122
        %v1124 = vsel %vm1117, %v1063, -inf
        %1125 = vmax.xlane.f32.xlu0 %v1124
        %v1126 = vpop.xlane.xlu0 %1125
        %v1127 = vsel %vm1117, %v1112, -inf
        %1128 = vmax.xlane.f32.xlu0 %v1127
        %v1129 = vpop.xlane.xlu0 %1128
        %v1130 = vsub.f32 %v965, %v1120
        %v1131 = vsub.f32 %v1014, %v1123
        %v1132 = vsub.f32 %v1063, %v1126
        %v1133 = vsub.f32 %v1112, %v1129
        %v1134 = vmul.f32 %v1130, 1.442695
        %v1135 = vpow.pop %v1134
        %v1136 = vmul.f32 %v1131, 1.442695
        %v1137 = vpow.pop %v1136
        %v1138 = vmul.f32 %v1132, 1.442695
        %v1139 = vpow.pop %v1138
        %v1140 = vmul.f32 %v1133, 1.442695
        %v1141 = vpow.pop %v1140
        %v1142 = vsel %vm1117, %v1135, 0.0
        %1143 = vadd.xlane.f32.xlu0 %v1142
        %v1144 = vpop.xlane.xlu0 %1143
        %v1145 = vsel %vm1117, %v1137, 0.0
        %1146 = vadd.xlane.f32.xlu0 %v1145
        %v1147 = vpop.xlane.xlu0 %1146
        %v1148 = vsel %vm1117, %v1139, 0.0
        %1149 = vadd.xlane.f32.xlu0 %v1148
        %v1150 = vpop.xlane.xlu0 %1149
        %v1151 = vsel %vm1117, %v1141, 0.0
        %1152 = vadd.xlane.f32.xlu0 %v1151
        %v1153 = vpop.xlane.xlu0 %1152
        %v1154 = vrcp.pop %v1144
        %v1155 = vrcp.pop %v1147
        %v1156 = vrcp.pop %v1150
        %v1157 = vrcp.pop %v1153
        %v1158 = vmul.f32 %v1135, %v1154
        %v1159 = vmul.f32 %v1137, %v1155
        %v1160 = vmul.f32 %v1139, %v1156
        %v1161 = vmul.f32 %v1141, %v1157
        %v1162 = vpack.c.bf16 %v1158, %v1158
        %v1163 = vpack.c.bf16 %v1159, %v1159
        %v1164 = vpack.c.bf16 %v1160, %v1160
        %v1165 = vpack.c.bf16 %v1161, %v1161
        %v1167 = vsel %vm1117, %v1162, 0
        %vm1169 = vcmask 1043456
        %v1171 = vsel %vm1169, %v916, 0
        %1173 = vmatprep.subr.bf16.mxu0 0
        %1174 = vmatpush1.bf16.msra.mxu0 %v1171
        %1175 = vmatprep.subr.bf16.mxu0 0
        %1176 = vmatpush1.bf16.msra.mxu0 0
        %1177 = vmatprep.subr.bf16.mxu0 0
        %1178 = vmatpush1.bf16.msra.mxu0 0
        %1179 = vmatprep.subr.bf16.mxu0 0
        %1180 = vmatpush1.bf16.msra.mxu0 0
        %1181 = vmatprep.subr.bf16.mxu0 0
        %1182 = vmatpush1.bf16.msra.mxu0 0
        %1183 = vmatprep.subr.bf16.mxu0 0
        %1184 = vmatpush1.bf16.msra.mxu0 0
        %1185 = vmatprep.subr.bf16.mxu0 0
        %1186 = vmatpush1.bf16.msra.mxu0 0
        %1187 = vmatprep.subr.bf16.mxu0 0
        %1188 = vmatpush1.bf16.msra.mxu0 0
        %1189 = vmatprep.subr.bf16.mxu0 0
        %1190 = vmatpush1.bf16.msra.mxu0 0
        %1191 = vmatprep.subr.bf16.mxu0 0
        %1192 = vmatpush1.bf16.msra.mxu0 0
        %1193 = vmatprep.subr.bf16.mxu0 0
        %1194 = vmatpush1.bf16.msra.mxu0 0
        %1195 = vmatprep.subr.bf16.mxu0 0
        %1196 = vmatpush1.bf16.msra.mxu0 0
        %1197 = vmatprep.subr.bf16.mxu0 0
        %1198 = vmatpush1.bf16.msra.mxu0 0
        %1199 = vmatprep.subr.bf16.mxu0 0
        %1200 = vmatpush1.bf16.msra.mxu0 0
        %1201 = vmatprep.subr.bf16.mxu0 0
        %1202 = vmatpush1.bf16.msra.mxu0 0
        %1203 = vmatprep.subr.bf16.mxu0 0
        %1204 = vmatpush1.bf16.msra.mxu0 0
        %1205 = vmatprep.mubr.bf16.mxu0 0
        %1206 = vmatmul.mubr.bf16.gmra.mrb[0].mxu0 %v1167
        %v1207 = vpop.f32.mrb[0].mxu0
        %v1208 = vadd.f32 0.0, %v1207
        %v1209 = vpop.f32.mrb[0].mxu0
        %v1210 = vpop.f32.mrb[0].mxu0
        %v1211 = vpop.f32.mrb[0].mxu0
        %1212 = vdwg.mxu0
        %v1214 = vsel %vm1117, %v1163, 0
        %v1217 = vsel %vm1169, %v917, 0
        %1219 = vmatprep.subr.bf16.mxu0 0
        %1220 = vmatpush1.bf16.msra.mxu0 %v1217
        %1221 = vmatprep.subr.bf16.mxu0 0
        %1222 = vmatpush1.bf16.msra.mxu0 0
        %1223 = vmatprep.subr.bf16.mxu0 0
        %1224 = vmatpush1.bf16.msra.mxu0 0
        %1225 = vmatprep.subr.bf16.mxu0 0
        %1226 = vmatpush1.bf16.msra.mxu0 0
        %1227 = vmatprep.subr.bf16.mxu0 0
        %1228 = vmatpush1.bf16.msra.mxu0 0
        %1229 = vmatprep.subr.bf16.mxu0 0
        %1230 = vmatpush1.bf16.msra.mxu0 0
        %1231 = vmatprep.subr.bf16.mxu0 0
        %1232 = vmatpush1.bf16.msra.mxu0 0
        %1233 = vmatprep.subr.bf16.mxu0 0
        %1234 = vmatpush1.bf16.msra.mxu0 0
        %1235 = vmatprep.subr.bf16.mxu0 0
        %1236 = vmatpush1.bf16.msra.mxu0 0
        %1237 = vmatprep.subr.bf16.mxu0 0
        %1238 = vmatpush1.bf16.msra.mxu0 0
        %1239 = vmatprep.subr.bf16.mxu0 0
        %1240 = vmatpush1.bf16.msra.mxu0 0
        %1241 = vmatprep.subr.bf16.mxu0 0
        %1242 = vmatpush1.bf16.msra.mxu0 0
        %1243 = vmatprep.subr.bf16.mxu0 0
        %1244 = vmatpush1.bf16.msra.mxu0 0
        %1245 = vmatprep.subr.bf16.mxu0 0
        %1246 = vmatpush1.bf16.msra.mxu0 0
        %1247 = vmatprep.subr.bf16.mxu0 0
        %1248 = vmatpush1.bf16.msra.mxu0 0
        %1249 = vmatprep.subr.bf16.mxu0 0
        %1250 = vmatpush1.bf16.msra.mxu0 0
        %1251 = vmatprep.mubr.bf16.mxu0 0
        %1252 = vmatmul.mubr.bf16.gmra.mrb[0].mxu0 %v1214
        %v1253 = vpop.f32.mrb[0].mxu0
        %v1254 = vadd.f32 0.0, %v1253
        %v1255 = vpop.f32.mrb[0].mxu0
        %v1256 = vpop.f32.mrb[0].mxu0
        %v1257 = vpop.f32.mrb[0].mxu0
        %1258 = vdwg.mxu0
        %v1260 = vsel %vm1117, %v1164, 0
        %v1263 = vsel %vm1169, %v918, 0
        %1265 = vmatprep.subr.bf16.mxu0 0
        %1266 = vmatpush1.bf16.msra.mxu0 %v1263
        %1267 = vmatprep.subr.bf16.mxu0 0
        %1268 = vmatpush1.bf16.msra.mxu0 0
        %1269 = vmatprep.subr.bf16.mxu0 0
        %1270 = vmatpush1.bf16.msra.mxu0 0
        %1271 = vmatprep.subr.bf16.mxu0 0
        %1272 = vmatpush1.bf16.msra.mxu0 0
        %1273 = vmatprep.subr.bf16.mxu0 0
        %1274 = vmatpush1.bf16.msra.mxu0 0
        %1275 = vmatprep.subr.bf16.mxu0 0
        %1276 = vmatpush1.bf16.msra.mxu0 0
        %1277 = vmatprep.subr.bf16.mxu0 0
        %1278 = vmatpush1.bf16.msra.mxu0 0
        %1279 = vmatprep.subr.bf16.mxu0 0
        %1280 = vmatpush1.bf16.msra.mxu0 0
        %1281 = vmatprep.subr.bf16.mxu0 0
        %1282 = vmatpush1.bf16.msra.mxu0 0
        %1283 = vmatprep.subr.bf16.mxu0 0
        %1284 = vmatpush1.bf16.msra.mxu0 0
        %1285 = vmatprep.subr.bf16.mxu0 0
        %1286 = vmatpush1.bf16.msra.mxu0 0
        %1287 = vmatprep.subr.bf16.mxu0 0
        %1288 = vmatpush1.bf16.msra.mxu0 0
        %1289 = vmatprep.subr.bf16.mxu0 0
        %1290 = vmatpush1.bf16.msra.mxu0 0
        %1291 = vmatprep.subr.bf16.mxu0 0
        %1292 = vmatpush1.bf16.msra.mxu0 0
        %1293 = vmatprep.subr.bf16.mxu0 0
        %1294 = vmatpush1.bf16.msra.mxu0 0
        %1295 = vmatprep.subr.bf16.mxu0 0
        %1296 = vmatpush1.bf16.msra.mxu0 0
        %1297 = vmatprep.mubr.bf16.mxu0 0
        %1298 = vmatmul.mubr.bf16.gmra.mrb[0].mxu0 %v1260
        %v1299 = vpop.f32.mrb[0].mxu0
        %v1300 = vadd.f32 0.0, %v1299
        %v1301 = vpop.f32.mrb[0].mxu0
        %v1302 = vpop.f32.mrb[0].mxu0
        %v1303 = vpop.f32.mrb[0].mxu0
        %1304 = vdwg.mxu0
        %v1306 = vsel %vm1117, %v1165, 0
        %v1309 = vsel %vm1169, %v919, 0
        %1311 = vmatprep.subr.bf16.mxu0 0
        %1312 = vmatpush1.bf16.msra.mxu0 %v1309
        %1313 = vmatprep.subr.bf16.mxu0 0
        %1314 = vmatpush1.bf16.msra.mxu0 0
        %1315 = vmatprep.subr.bf16.mxu0 0
        %1316 = vmatpush1.bf16.msra.mxu0 0
        %1317 = vmatprep.subr.bf16.mxu0 0
        %1318 = vmatpush1.bf16.msra.mxu0 0
        %1319 = vmatprep.subr.bf16.mxu0 0
        %1320 = vmatpush1.bf16.msra.mxu0 0
        %1321 = vmatprep.subr.bf16.mxu0 0
        %1322 = vmatpush1.bf16.msra.mxu0 0
        %1323 = vmatprep.subr.bf16.mxu0 0
        %1324 = vmatpush1.bf16.msra.mxu0 0
        %1325 = vmatprep.subr.bf16.mxu0 0
        %1326 = vmatpush1.bf16.msra.mxu0 0
        %1327 = vmatprep.subr.bf16.mxu0 0
        %1328 = vmatpush1.bf16.msra.mxu0 0
        %1329 = vmatprep.subr.bf16.mxu0 0
        %1330 = vmatpush1.bf16.msra.mxu0 0
        %1331 = vmatprep.subr.bf16.mxu0 0
        %1332 = vmatpush1.bf16.msra.mxu0 0
        %1333 = vmatprep.subr.bf16.mxu0 0
        %1334 = vmatpush1.bf16.msra.mxu0 0
        %1335 = vmatprep.subr.bf16.mxu0 0
        %1336 = vmatpush1.bf16.msra.mxu0 0
        %1337 = vmatprep.subr.bf16.mxu0 0
        %1338 = vmatpush1.bf16.msra.mxu0 0
        %1339 = vmatprep.subr.bf16.mxu0 0
        %1340 = vmatpush1.bf16.msra.mxu0 0
        %1341 = vmatprep.subr.bf16.mxu0 0
        %1342 = vmatpush1.bf16.msra.mxu0 0
        %1343 = vmatprep.mubr.bf16.mxu0 0
        %1344 = vmatmul.mubr.bf16.gmra.mrb[0].mxu0 %v1306
        %v1345 = vpop.f32.mrb[0].mxu0
        %v1346 = vadd.f32 0.0, %v1345
        %v1347 = vpop.f32.mrb[0].mxu0
        %v1348 = vpop.f32.mrb[0].mxu0
        %v1349 = vpop.f32.mrb[0].mxu0
        %1350 = vdwg.mxu0
        %1352 = vrot.lane.b32.xlu0 %v1254, 16
        %v1353 = vpop.permute.xlu0 %1352
        %1356 = vrot.lane.b32.xlu0 %v1300, 32
        %v1357 = vpop.permute.xlu0 %1356
        %1360 = vrot.lane.b32.xlu0 %v1346, 48
        %v1361 = vpop.permute.xlu0 %1360
        %v1363 = vsel %vm923, %v1208, %v1353
        %vm1364 = vcmask 261120
        %v1365 = vsel %vm1364, %v1363, %v1357
        %vm1366 = vcmask 392192
        %v1367 = vsel %vm1366, %v1365, %v1361
        %v1368 = vpack.c.bf16 %v1367, %v1367
        %v1369 = vld [vmem:[%s8] sm:$0xf]
        %v1370 = vld [vmem:[%s8 + $0x4] sm:$0xf]
        %v1371 = vld [vmem:[%s8 + $0x8] sm:$0xf]
        %v1372 = vld [vmem:[%s8 + $0xc] sm:$0xf]
        %v1373 = vld [vmem:[%s8 + $0x10] sm:$0xf]
        %v1374 = vld [vmem:[%s8 + $0x14] sm:$0xf]
        %v1375 = vld [vmem:[%s8 + $0x18] sm:$0xf]
        %v1376 = vld [vmem:[%s8 + $0x1c] sm:$0xf]
        %v1385 = vunpack.c.l.b16 %v1369
        %v1386 = vunpack.c.l.b16 %v1370
        %v1387 = vunpack.c.l.b16 %v1371
        %v1388 = vunpack.c.l.b16 %v1372
        %v1389 = vunpack.c.l.b16 %v1373
        %v1390 = vunpack.c.l.b16 %v1374
        %v1391 = vunpack.c.l.b16 %v1375
        %v1392 = vunpack.c.l.b16 %v1376
        %v1393 = vpack.c.b16 %v1386, %v1385
        %v1394 = vpack.c.b16 %v1388, %v1387
        %v1395 = vpack.c.b16 %v1390, %v1389
        %v1396 = vpack.c.b16 %v1392, %v1391
        %v1402 = vsel %vm762, %v1368, 0
        %1404 = vmatprep.subr.bf16.mxu0 0
        %1405 = vmatpush1.bf16.msra.mxu0 %v1393
        %1406 = vmatprep.subr.bf16.mxu0 0
        %1407 = vmatpush1.bf16.msra.mxu0 %v1394
        %1408 = vmatprep.subr.bf16.mxu0 0
        %1409 = vmatpush1.bf16.msra.mxu0 %v1395
        %1410 = vmatprep.subr.bf16.mxu0 0
        %1411 = vmatpush1.bf16.msra.mxu0 %v1396
        %1412 = vmatprep.subr.bf16.mxu0 0
        %1413 = vmatpush1.bf16.msra.mxu0 0
        %1414 = vmatprep.subr.bf16.mxu0 0
        %1415 = vmatpush1.bf16.msra.mxu0 0
        %1416 = vmatprep.subr.bf16.mxu0 0
        %1417 = vmatpush1.bf16.msra.mxu0 0
        %1418 = vmatprep.subr.bf16.mxu0 0
        %1419 = vmatpush1.bf16.msra.mxu0 0
        %1420 = vmatprep.subr.bf16.mxu0 0
        %1421 = vmatpush1.bf16.msra.mxu0 0
        %1422 = vmatprep.subr.bf16.mxu0 0
        %1423 = vmatpush1.bf16.msra.mxu0 0
        %1424 = vmatprep.subr.bf16.mxu0 0
        %1425 = vmatpush1.bf16.msra.mxu0 0
        %1426 = vmatprep.subr.bf16.mxu0 0
        %1427 = vmatpush1.bf16.msra.mxu0 0
        %1428 = vmatprep.subr.bf16.mxu0 0
        %1429 = vmatpush1.bf16.msra.mxu0 0
        %1430 = vmatprep.subr.bf16.mxu0 0
        %1431 = vmatpush1.bf16.msra.mxu0 0
        %1432 = vmatprep.subr.bf16.mxu0 0
        %1433 = vmatpush1.bf16.msra.mxu0 0
        %1434 = vmatprep.subr.bf16.mxu0 0
        %1435 = vmatpush1.bf16.msra.mxu0 0
        %1436 = vmatprep.mubr.bf16.mxu0 0
        %1437 = vmatmul.mubr.bf16.gmra.mrb[0].mxu0 %v1402
        %v1438 = vpop.f32.mrb[0].mxu0
        %v1439 = vadd.f32 0.0, %v1438
        %v1440 = vpop.f32.mrb[0].mxu0
        %v1441 = vpop.f32.mrb[0].mxu0
        %v1442 = vpop.f32.mrb[0].mxu0
        %1443 = vdwg.mxu0
        %v1444 = vadd.f32 %v751, %v1439
        %v1445 = vld [vmem:[%s9] sm:$0x1]
        %v1446 = vlaneseq
        %v1447 = vshrl.u32 %v1446, 7
        %v1448 = vsub.s32 0, %v1447
        %v1449 = vrot.slane %v1445, %v1448
        %v1450 = vadd.f32 %v1444, %v1449
        %v1451 = vld [vmem:[%s10] sm:$0x1]
        %v1452 = vld [vmem:[%s11] sm:$0x1]
        %v1453 = vsel %vm762, %v1450, 0.0
        %1454 = vadd.xlane.f32.xlu0 %v1453
        %v1455 = vpop.xlane.xlu0 %1454
        %v1456 = vmul.f32 %v1455, %v766
        %v1457 = vsub.f32 %v1450, %v1456
        %v1458 = vmul.f32 %v1457, %v1457
        %v1459 = vsel %vm762, %v1458, 0.0
        %1460 = vadd.xlane.f32.xlu0 %v1459
        %v1461 = vpop.xlane.xlu0 %1460
        %v1462 = vmul.f32 %v1461, %v766
        %v1463 = vadd.f32 %v1462, 1e-05
        %v1464 = vrsqrt.pop %v1463
        %v1465 = vmul.f32 %v1457, %v1464
        %v1466 = vlaneseq
        %v1467 = vshrl.u32 %v1466, 7
        %v1468 = vsub.s32 0, %v1467
        %v1469 = vrot.slane %v1451, %v1468
        %v1470 = vmul.f32 %v1465, %v1469
        %v1471 = vlaneseq
        %v1472 = vshrl.u32 %v1471, 7
        %v1473 = vsub.s32 0, %v1472
        %v1474 = vrot.slane %v1452, %v1473
        %v1475 = vadd.f32 %v1470, %v1474
        %v1476 = vpack.c.bf16 %v1475, %v1475
        %v1477 = vld [vmem:[%s12] sm:$0xff]
        %v1478 = vld [vmem:[%s12 + $0x8] sm:$0xff]
        %v1479 = vld [vmem:[%s12 + $0x10] sm:$0xff]
        %v1480 = vld [vmem:[%s12 + $0x18] sm:$0xff]
        %v1481 = vld [vmem:[%s12 + $0x20] sm:$0xff]
        %v1482 = vld [vmem:[%s12 + $0x28] sm:$0xff]
        %v1483 = vld [vmem:[%s12 + $0x30] sm:$0xff]
        %v1484 = vld [vmem:[%s12 + $0x38] sm:$0xff]
        %v1485 = vld [vmem:[%s13] ss:$2 sm:$0x3]
        %v1487 = vlaneseq
        %v1488 = vshrl.u32 %v1487, 7
        %v1489 = vsub.s32 0, %v1488
        %v1490 = vrot.slane %v1485, %v1489
        %v1491 = vlaneseq
        %v1492 = vshrl.u32 %v1491, 7
        %v1493 = vsub.s32 1, %v1492
        %v1494 = vrot.slane %v1485, %v1493
        %v1505 = vunpack.c.l.b16 %v1477
        %v1506 = vunpack.c.h.b16 %v1477
        %v1507 = vunpack.c.l.b16 %v1478
        %v1508 = vunpack.c.h.b16 %v1478
        %v1509 = vunpack.c.l.b16 %v1479
        %v1510 = vunpack.c.h.b16 %v1479
        %v1511 = vunpack.c.l.b16 %v1480
        %v1512 = vunpack.c.h.b16 %v1480
        %v1513 = vunpack.c.l.b16 %v1481
        %v1514 = vunpack.c.h.b16 %v1481
        %v1515 = vunpack.c.l.b16 %v1482
        %v1516 = vunpack.c.h.b16 %v1482
        %v1517 = vunpack.c.l.b16 %v1483
        %v1518 = vunpack.c.h.b16 %v1483
        %v1519 = vunpack.c.l.b16 %v1484
        %v1520 = vunpack.c.h.b16 %v1484
        %v1521 = vpack.c.b16 %v1507, %v1505
        %v1522 = vpack.c.b16 %v1508, %v1506
        %v1523 = vpack.c.b16 %v1511, %v1509
        %v1524 = vpack.c.b16 %v1512, %v1510
        %v1525 = vpack.c.b16 %v1515, %v1513
        %v1526 = vpack.c.b16 %v1516, %v1514
        %v1527 = vpack.c.b16 %v1519, %v1517
        %v1528 = vpack.c.b16 %v1520, %v1518
        %v1538 = vsel %vm762, %v1476, 0
        %1540 = vmatprep.subr.bf16.mxu0 %v1522
        %1541 = vmatpush1.bf16.msra.mxu0 %v1521
        %1542 = vmatprep.subr.bf16.mxu0 %v1524
        %1543 = vmatpush1.bf16.msra.mxu0 %v1523
        %1544 = vmatprep.subr.bf16.mxu0 %v1526
        %1545 = vmatpush1.bf16.msra.mxu0 %v1525
        %1546 = vmatprep.subr.bf16.mxu0 %v1528
        %1547 = vmatpush1.bf16.msra.mxu0 %v1527
        %1548 = vmatprep.subr.bf16.mxu0 0
        %1549 = vmatpush1.bf16.msra.mxu0 0
        %1550 = vmatprep.subr.bf16.mxu0 0
        %1551 = vmatpush1.bf16.msra.mxu0 0
        %1552 = vmatprep.subr.bf16.mxu0 0
        %1553 = vmatpush1.bf16.msra.mxu0 0
        %1554 = vmatprep.subr.bf16.mxu0 0
        %1555 = vmatpush1.bf16.msra.mxu0 0
        %1556 = vmatprep.subr.bf16.mxu0 0
        %1557 = vmatpush1.bf16.msra.mxu0 0
        %1558 = vmatprep.subr.bf16.mxu0 0
        %1559 = vmatpush1.bf16.msra.mxu0 0
        %1560 = vmatprep.subr.bf16.mxu0 0
        %1561 = vmatpush1.bf16.msra.mxu0 0
        %1562 = vmatprep.subr.bf16.mxu0 0
        %1563 = vmatpush1.bf16.msra.mxu0 0
        %1564 = vmatprep.subr.bf16.mxu0 0
        %1565 = vmatpush1.bf16.msra.mxu0 0
        %1566 = vmatprep.subr.bf16.mxu0 0
        %1567 = vmatpush1.bf16.msra.mxu0 0
        %1568 = vmatprep.subr.bf16.mxu0 0
        %1569 = vmatpush1.bf16.msra.mxu0 0
        %1570 = vmatprep.subr.bf16.mxu0 0
        %1571 = vmatpush1.bf16.msra.mxu0 0
        %1572 = vmatprep.mubr.bf16.mxu0 0
        %1573 = vmatmul.mubr.bf16.gmra.mrb[0].mxu0 %v1538
        %v1574 = vpop.f32.mrb[0].mxu0
        %v1575 = vadd.f32 %v1490, %v1574
        %v1576 = vpop.f32.mrb[0].mxu0
        %v1577 = vadd.f32 %v1494, %v1576
        %v1578 = vpop.f32.mrb[0].mxu0
        %v1579 = vpop.f32.mrb[0].mxu0
        %1580 = vdwg.mxu0
        %v1581 = vmul.f32 %v1575, %v1575
        %v1582 = vmul.f32 %v1577, %v1577
        %v1583 = vmul.f32 %v1575, %v1581
        %v1584 = vmul.f32 %v1577, %v1582
        %v1585 = vmul.f32 %v1583, 0.044715
        %v1586 = vmul.f32 %v1584, 0.044715
        %v1587 = vadd.f32 %v1575, %v1585
        %v1588 = vadd.f32 %v1577, %v1586
        %v1589 = vmul.f32 %v1587, 0.7978846
        %v1590 = vmul.f32 %v1588, 0.7978846
        %v1591 = vtanh.pop %v1589
        %v1592 = vtanh.pop %v1590
        %v1593 = vadd.f32 %v1591, 1.0
        %v1594 = vadd.f32 %v1592, 1.0
        %v1595 = vmul.f32 %v1593, 0.5
        %v1596 = vmul.f32 %v1594, 0.5
        %v1597 = vmul.f32 %v1575, %v1595
        %v1598 = vmul.f32 %v1577, %v1596
        %v1599 = vpack.c.bf16 %v1597, %v1597
        %v1600 = vpack.c.bf16 %v1598, %v1598
        %v1601 = vld [vmem:[%s14] sm:$0xf]
        %v1602 = vld [vmem:[%s14 + $0x4] sm:$0xf]
        %v1603 = vld [vmem:[%s14 + $0x8] sm:$0xf]
        %v1604 = vld [vmem:[%s14 + $0xc] sm:$0xf]
        %v1605 = vld [vmem:[%s14 + $0x10] sm:$0xf]
        %v1606 = vld [vmem:[%s14 + $0x14] sm:$0xf]
        %v1607 = vld [vmem:[%s14 + $0x18] sm:$0xf]
        %v1608 = vld [vmem:[%s14 + $0x1c] sm:$0xf]
        %v1609 = vld [vmem:[%s14 + $0x20] sm:$0xf]
        %v1610 = vld [vmem:[%s14 + $0x24] sm:$0xf]
        %v1611 = vld [vmem:[%s14 + $0x28] sm:$0xf]
        %v1612 = vld [vmem:[%s14 + $0x2c] sm:$0xf]
        %v1613 = vld [vmem:[%s14 + $0x30] sm:$0xf]
        %v1614 = vld [vmem:[%s14 + $0x34] sm:$0xf]
        %v1615 = vld [vmem:[%s14 + $0x38] sm:$0xf]
        %v1616 = vld [vmem:[%s14 + $0x3c] sm:$0xf]
        %v1617 = vld [vmem:[%s14 + $0x40] sm:$0xf]
        %v1618 = vld [vmem:[%s14 + $0x44] sm:$0xf]
        %v1619 = vld [vmem:[%s14 + $0x48] sm:$0xf]
        %v1620 = vld [vmem:[%s14 + $0x4c] sm:$0xf]
        %v1621 = vld [vmem:[%s14 + $0x50] sm:$0xf]
        %v1622 = vld [vmem:[%s14 + $0x54] sm:$0xf]
        %v1623 = vld [vmem:[%s14 + $0x58] sm:$0xf]
        %v1624 = vld [vmem:[%s14 + $0x5c] sm:$0xf]
        %v1625 = vld [vmem:[%s14 + $0x60] sm:$0xf]
        %v1626 = vld [vmem:[%s14 + $0x64] sm:$0xf]
        %v1627 = vld [vmem:[%s14 + $0x68] sm:$0xf]
        %v1628 = vld [vmem:[%s14 + $0x6c] sm:$0xf]
        %v1629 = vld [vmem:[%s14 + $0x70] sm:$0xf]
        %v1630 = vld [vmem:[%s14 + $0x74] sm:$0xf]
        %v1631 = vld [vmem:[%s14 + $0x78] sm:$0xf]
        %v1632 = vld [vmem:[%s14 + $0x7c] sm:$0xf]
        %v1665 = vunpack.c.l.b16 %v1601
        %v1666 = vunpack.c.l.b16 %v1602
        %v1667 = vunpack.c.l.b16 %v1603
        %v1668 = vunpack.c.l.b16 %v1604
        %v1669 = vunpack.c.l.b16 %v1605
        %v1670 = vunpack.c.l.b16 %v1606
        %v1671 = vunpack.c.l.b16 %v1607
        %v1672 = vunpack.c.l.b16 %v1608
        %v1673 = vunpack.c.l.b16 %v1609
        %v1674 = vunpack.c.l.b16 %v1610
        %v1675 = vunpack.c.l.b16 %v1611
        %v1676 = vunpack.c.l.b16 %v1612
        %v1677 = vunpack.c.l.b16 %v1613
        %v1678 = vunpack.c.l.b16 %v1614
        %v1679 = vunpack.c.l.b16 %v1615
        %v1680 = vunpack.c.l.b16 %v1616
        %v1681 = vunpack.c.l.b16 %v1617
        %v1682 = vunpack.c.l.b16 %v1618
        %v1683 = vunpack.c.l.b16 %v1619
        %v1684 = vunpack.c.l.b16 %v1620
        %v1685 = vunpack.c.l.b16 %v1621
        %v1686 = vunpack.c.l.b16 %v1622
        %v1687 = vunpack.c.l.b16 %v1623
        %v1688 = vunpack.c.l.b16 %v1624
        %v1689 = vunpack.c.l.b16 %v1625
        %v1690 = vunpack.c.l.b16 %v1626
        %v1691 = vunpack.c.l.b16 %v1627
        %v1692 = vunpack.c.l.b16 %v1628
        %v1693 = vunpack.c.l.b16 %v1629
        %v1694 = vunpack.c.l.b16 %v1630
        %v1695 = vunpack.c.l.b16 %v1631
        %v1696 = vunpack.c.l.b16 %v1632
        %v1697 = vpack.c.b16 %v1666, %v1665
        %v1698 = vpack.c.b16 %v1668, %v1667
        %v1699 = vpack.c.b16 %v1670, %v1669
        %v1700 = vpack.c.b16 %v1672, %v1671
        %v1701 = vpack.c.b16 %v1674, %v1673
        %v1702 = vpack.c.b16 %v1676, %v1675
        %v1703 = vpack.c.b16 %v1678, %v1677
        %v1704 = vpack.c.b16 %v1680, %v1679
        %v1705 = vpack.c.b16 %v1682, %v1681
        %v1706 = vpack.c.b16 %v1684, %v1683
        %v1707 = vpack.c.b16 %v1686, %v1685
        %v1708 = vpack.c.b16 %v1688, %v1687
        %v1709 = vpack.c.b16 %v1690, %v1689
        %v1710 = vpack.c.b16 %v1692, %v1691
        %v1711 = vpack.c.b16 %v1694, %v1693
        %v1712 = vpack.c.b16 %v1696, %v1695
        %1729 = vmatprep.subr.bf16.mxu0 0
        %1730 = vmatpush1.bf16.msra.mxu0 %v1697
        %1731 = vmatprep.subr.bf16.mxu0 0
        %1732 = vmatpush1.bf16.msra.mxu0 %v1698
        %1733 = vmatprep.subr.bf16.mxu0 0
        %1734 = vmatpush1.bf16.msra.mxu0 %v1699
        %1735 = vmatprep.subr.bf16.mxu0 0
        %1736 = vmatpush1.bf16.msra.mxu0 %v1700
        %1737 = vmatprep.subr.bf16.mxu0 0
        %1738 = vmatpush1.bf16.msra.mxu0 %v1701
        %1739 = vmatprep.subr.bf16.mxu0 0
        %1740 = vmatpush1.bf16.msra.mxu0 %v1702
        %1741 = vmatprep.subr.bf16.mxu0 0
        %1742 = vmatpush1.bf16.msra.mxu0 %v1703
        %1743 = vmatprep.subr.bf16.mxu0 0
        %1744 = vmatpush1.bf16.msra.mxu0 %v1704
        %1745 = vmatprep.subr.bf16.mxu0 0
        %1746 = vmatpush1.bf16.msra.mxu0 %v1705
        %1747 = vmatprep.subr.bf16.mxu0 0
        %1748 = vmatpush1.bf16.msra.mxu0 %v1706
        %1749 = vmatprep.subr.bf16.mxu0 0
        %1750 = vmatpush1.bf16.msra.mxu0 %v1707
        %1751 = vmatprep.subr.bf16.mxu0 0
        %1752 = vmatpush1.bf16.msra.mxu0 %v1708
        %1753 = vmatprep.subr.bf16.mxu0 0
        %1754 = vmatpush1.bf16.msra.mxu0 %v1709
        %1755 = vmatprep.subr.bf16.mxu0 0
        %1756 = vmatpush1.bf16.msra.mxu0 %v1710
        %1757 = vmatprep.subr.bf16.mxu0 0
        %1758 = vmatpush1.bf16.msra.mxu0 %v1711
        %1759 = vmatprep.subr.bf16.mxu0 0
        %1760 = vmatpush1.bf16.msra.mxu0 %v1712
        %1761 = vmatprep.mubr.bf16.mxu0 %v1600
        %1762 = vmatmul.mubr.bf16.gmra.mrb[0].mxu0 %v1599
        %v1763 = vpop.f32.mrb[0].mxu0
        %v1764 = vadd.f32 0.0, %v1763
        %v1765 = vpop.f32.mrb[0].mxu0
        %v1766 = vpop.f32.mrb[0].mxu0
        %v1767 = vpop.f32.mrb[0].mxu0
        %1768 = vdwg.mxu0
        %v1769 = vadd.f32 %v1450, %v1764
        %v1770 = vld [vmem:[%s15] sm:$0x1]
        %v1771 = vlaneseq
        %v1772 = vshrl.u32 %v1771, 7
        %v1773 = vsub.s32 0, %v1772
        %v1774 = vrot.slane %v1770, %v1773
        %v1775 = vadd.f32 %v1769, %v1774
        %v1776 = vld [vmem:[%s4 + $0x1] sm:$0x1]
        %v1777 = vld [vmem:[%s5 + $0x1] sm:$0x1]
        %v1778 = vsel %vm762, %v1775, 0.0
        %1779 = vadd.xlane.f32.xlu0 %v1778
        %v1780 = vpop.xlane.xlu0 %1779
        %v1781 = vmul.f32 %v1780, %v766
        %v1782 = vsub.f32 %v1775, %v1781
        %v1783 = vmul.f32 %v1782, %v1782
        %v1784 = vsel %vm762, %v1783, 0.0
        %1785 = vadd.xlane.f32.xlu0 %v1784
        %v1786 = vpop.xlane.xlu0 %1785
        %v1787 = vmul.f32 %v1786, %v766
        %v1788 = vadd.f32 %v1787, 1e-05
        %v1789 = vrsqrt.pop %v1788
        %v1790 = vmul.f32 %v1782, %v1789
        %v1791 = vlaneseq
        %v1792 = vshrl.u32 %v1791, 7
        %v1793 = vsub.s32 0, %v1792
        %v1794 = vrot.slane %v1776, %v1793
        %v1795 = vmul.f32 %v1790, %v1794
        %v1796 = vlaneseq
        %v1797 = vshrl.u32 %v1796, 7
        %v1798 = vsub.s32 0, %v1797
        %v1799 = vrot.slane %v1777, %v1798
        %v1800 = vadd.f32 %v1795, %v1799
        %v1801 = vpack.c.bf16 %v1800, %v1800
        %s1802 = scalar_lea.vmem %s6, 64
        %v1803 = vld [vmem:[%s1802] sm:$0xff]
        %v1804 = vld [vmem:[%s1802 + $0x8] sm:$0xff]
        %v1805 = vld [vmem:[%s1802 + $0x10] sm:$0xff]
        %v1806 = vld [vmem:[%s1802 + $0x18] sm:$0xff]
        %v1807 = vld [vmem:[%s1802 + $0x20] sm:$0xff]
        %v1808 = vld [vmem:[%s1802 + $0x28] sm:$0xff]
        %v1809 = vld [vmem:[%s1802 + $0x30] sm:$0xff]
        %v1810 = vld [vmem:[%s1802 + $0x38] sm:$0xff]
        %s1811 = scalar_lea.vmem %s7, 1
        %v1812 = vld [vmem:[%s1811] ss:$2 sm:$0x3]
        %v1814 = vlaneseq
        %v1815 = vshrl.u32 %v1814, 7
        %v1816 = vsub.s32 0, %v1815
        %v1817 = vrot.slane %v1812, %v1816
        %v1818 = vlaneseq
        %v1819 = vshrl.u32 %v1818, 7
        %v1820 = vsub.s32 1, %v1819
        %v1821 = vrot.slane %v1812, %v1820
        %v1832 = vunpack.c.l.b16 %v1803
        %v1833 = vunpack.c.h.b16 %v1803
        %v1834 = vunpack.c.l.b16 %v1804
        %v1835 = vunpack.c.h.b16 %v1804
        %v1836 = vunpack.c.l.b16 %v1805
        %v1837 = vunpack.c.h.b16 %v1805
        %v1838 = vunpack.c.l.b16 %v1806
        %v1839 = vunpack.c.h.b16 %v1806
        %v1840 = vunpack.c.l.b16 %v1807
        %v1841 = vunpack.c.h.b16 %v1807
        %v1842 = vunpack.c.l.b16 %v1808
        %v1843 = vunpack.c.h.b16 %v1808
        %v1844 = vunpack.c.l.b16 %v1809
        %v1845 = vunpack.c.h.b16 %v1809
        %v1846 = vunpack.c.l.b16 %v1810
        %v1847 = vunpack.c.h.b16 %v1810
        %v1848 = vpack.c.b16 %v1834, %v1832
        %v1849 = vpack.c.b16 %v1835, %v1833
        %v1850 = vpack.c.b16 %v1838, %v1836
        %v1851 = vpack.c.b16 %v1839, %v1837
        %v1852 = vpack.c.b16 %v1842, %v1840
        %v1853 = vpack.c.b16 %v1843, %v1841
        %v1854 = vpack.c.b16 %v1846, %v1844
        %v1855 = vpack.c.b16 %v1847, %v1845
        %v1865 = vsel %vm762, %v1801, 0
        %1867 = vmatprep.subr.bf16.mxu0 %v1849
        %1868 = vmatpush1.bf16.msra.mxu0 %v1848
        %1869 = vmatprep.subr.bf16.mxu0 %v1851
        %1870 = vmatpush1.bf16.msra.mxu0 %v1850
        %1871 = vmatprep.subr.bf16.mxu0 %v1853
        %1872 = vmatpush1.bf16.msra.mxu0 %v1852
        %1873 = vmatprep.subr.bf16.mxu0 %v1855
        %1874 = vmatpush1.bf16.msra.mxu0 %v1854
        %1875 = vmatprep.subr.bf16.mxu0 0
        %1876 = vmatpush1.bf16.msra.mxu0 0
        %1877 = vmatprep.subr.bf16.mxu0 0
        %1878 = vmatpush1.bf16.msra.mxu0 0
        %1879 = vmatprep.subr.bf16.mxu0 0
        %1880 = vmatpush1.bf16.msra.mxu0 0
        %1881 = vmatprep.subr.bf16.mxu0 0
        %1882 = vmatpush1.bf16.msra.mxu0 0
        %1883 = vmatprep.subr.bf16.mxu0 0
        %1884 = vmatpush1.bf16.msra.mxu0 0
        %1885 = vmatprep.subr.bf16.mxu0 0
        %1886 = vmatpush1.bf16.msra.mxu0 0
        %1887 = vmatprep.subr.bf16.mxu0 0
        %1888 = vmatpush1.bf16.msra.mxu0 0
        %1889 = vmatprep.subr.bf16.mxu0 0
        %1890 = vmatpush1.bf16.msra.mxu0 0
        %1891 = vmatprep.subr.bf16.mxu0 0
        %1892 = vmatpush1.bf16.msra.mxu0 0
        %1893 = vmatprep.subr.bf16.mxu0 0
        %1894 = vmatpush1.bf16.msra.mxu0 0
        %1895 = vmatprep.subr.bf16.mxu0 0
        %1896 = vmatpush1.bf16.msra.mxu0 0
        %1897 = vmatprep.subr.bf16.mxu0 0
        %1898 = vmatpush1.bf16.msra.mxu0 0
        %1899 = vmatprep.mubr.bf16.mxu0 0
        %1900 = vmatmul.mubr.bf16.gmra.mrb[0].mxu0 %v1865
        %v1901 = vpop.f32.mrb[0].mxu0
        %v1902 = vadd.f32 %v1817, %v1901
        %v1903 = vpop.f32.mrb[0].mxu0
        %v1904 = vadd.f32 %v1821, %v1903
        %v1905 = vpop.f32.mrb[0].mxu0
        %v1906 = vpop.f32.mrb[0].mxu0
        %1907 = vdwg.mxu0
        %1909 = vrot.lane.b32.xlu0 %v1902, 112
        %v1910 = vpop.permute.xlu0 %1909
        %1912 = vrot.lane.b32.xlu0 %v1902, 96
        %v1913 = vpop.permute.xlu0 %1912
        %1915 = vrot.lane.b32.xlu0 %v1902, 80
        %v1916 = vpop.permute.xlu0 %1915
        %v1918 = vpack.c.bf16 %v1902, %v1902
        %v1919 = vpack.c.bf16 %v1910, %v1910
        %v1920 = vpack.c.bf16 %v1913, %v1913
        %v1921 = vpack.c.bf16 %v1916, %v1916
        %1923 = vrot.lane.b32.xlu0 %v1904, 112
        %v1924 = vpop.permute.xlu0 %1923
        %1926 = vrot.lane.b32.xlu0 %v1904, 96
        %v1927 = vpop.permute.xlu0 %1926
        %1929 = vrot.lane.b32.xlu0 %v1904, 80
        %v1930 = vpop.permute.xlu0 %1929
        %v1932 = vpack.c.bf16 %v1904, %v1904
        %v1933 = vpack.c.bf16 %v1924, %v1924
        %v1934 = vpack.c.bf16 %v1927, %v1927
        %v1935 = vpack.c.bf16 %v1930, %v1930
        %1937 = vrot.lane.b32.xlu0 %v1918, 64
        %v1938 = vpop.permute.xlu0 %1937
        %v1940 = vsel %vm923, %v1918, 0
        %v1943 = vsel %vm923, %v1938, 0
        %1945 = vmatprep.subr.bf16.mxu0 0
        %1946 = vmatpush1.bf16.xpose.msra.mxu0 %v1943
        %1947 = vmatprep.subr.bf16.mxu0 0
        %1948 = vmatpush1.bf16.xpose.msra.mxu0 0
        %1949 = vmatprep.subr.bf16.mxu0 0
        %1950 = vmatpush1.bf16.xpose.msra.mxu0 0
        %1951 = vmatprep.subr.bf16.mxu0 0
        %1952 = vmatpush1.bf16.xpose.msra.mxu0 0
        %1953 = vmatprep.subr.bf16.mxu0 0
        %1954 = vmatpush1.bf16.xpose.msra.mxu0 0
        %1955 = vmatprep.subr.bf16.mxu0 0
        %1956 = vmatpush1.bf16.xpose.msra.mxu0 0
        %1957 = vmatprep.subr.bf16.mxu0 0
        %1958 = vmatpush1.bf16.xpose.msra.mxu0 0
        %1959 = vmatprep.subr.bf16.mxu0 0
        %1960 = vmatpush1.bf16.xpose.msra.mxu0 0
        %1961 = vmatprep.subr.bf16.mxu0 0
        %1962 = vmatpush1.bf16.xpose.msra.mxu0 0
        %1963 = vmatprep.subr.bf16.mxu0 0
        %1964 = vmatpush1.bf16.xpose.msra.mxu0 0
        %1965 = vmatprep.subr.bf16.mxu0 0
        %1966 = vmatpush1.bf16.xpose.msra.mxu0 0
        %1967 = vmatprep.subr.bf16.mxu0 0
        %1968 = vmatpush1.bf16.xpose.msra.mxu0 0
        %1969 = vmatprep.subr.bf16.mxu0 0
        %1970 = vmatpush1.bf16.xpose.msra.mxu0 0
        %1971 = vmatprep.subr.bf16.mxu0 0
        %1972 = vmatpush1.bf16.xpose.msra.mxu0 0
        %1973 = vmatprep.subr.bf16.mxu0 0
        %1974 = vmatpush1.bf16.xpose.msra.mxu0 0
        %1975 = vmatprep.subr.bf16.mxu0 0
        %1976 = vmatpush1.bf16.xpose.msra.mxu0 0
        %1977 = vmatprep.mubr.bf16.mxu0 0
        %1978 = vmatmul.mubr.bf16.gmra.mrb[0].mxu0 %v1940
        %v1979 = vpop.f32.mrb[0].mxu0
        %v1980 = vadd.f32 %v759, %v1979
        %v1981 = vpop.f32.mrb[0].mxu0
        %v1982 = vpop.f32.mrb[0].mxu0
        %v1983 = vpop.f32.mrb[0].mxu0
        %1984 = vdwg.mxu0
        %1986 = vrot.lane.b32.xlu0 %v1919, 64
        %v1987 = vpop.permute.xlu0 %1986
        %v1989 = vsel %vm923, %v1919, 0
        %v1992 = vsel %vm923, %v1987, 0
        %1994 = vmatprep.subr.bf16.mxu0 0
        %1995 = vmatpush1.bf16.xpose.msra.mxu0 %v1992
        %1996 = vmatprep.subr.bf16.mxu0 0
        %1997 = vmatpush1.bf16.xpose.msra.mxu0 0
        %1998 = vmatprep.subr.bf16.mxu0 0
        %1999 = vmatpush1.bf16.xpose.msra.mxu0 0
        %2000 = vmatprep.subr.bf16.mxu0 0
        %2001 = vmatpush1.bf16.xpose.msra.mxu0 0
        %2002 = vmatprep.subr.bf16.mxu0 0
        %2003 = vmatpush1.bf16.xpose.msra.mxu0 0
        %2004 = vmatprep.subr.bf16.mxu0 0
        %2005 = vmatpush1.bf16.xpose.msra.mxu0 0
        %2006 = vmatprep.subr.bf16.mxu0 0
        %2007 = vmatpush1.bf16.xpose.msra.mxu0 0
        %2008 = vmatprep.subr.bf16.mxu0 0
        %2009 = vmatpush1.bf16.xpose.msra.mxu0 0
        %2010 = vmatprep.subr.bf16.mxu0 0
        %2011 = vmatpush1.bf16.xpose.msra.mxu0 0
        %2012 = vmatprep.subr.bf16.mxu0 0
        %2013 = vmatpush1.bf16.xpose.msra.mxu0 0
        %2014 = vmatprep.subr.bf16.mxu0 0
        %2015 = vmatpush1.bf16.xpose.msra.mxu0 0
        %2016 = vmatprep.subr.bf16.mxu0 0
        %2017 = vmatpush1.bf16.xpose.msra.mxu0 0
        %2018 = vmatprep.subr.bf16.mxu0 0
        %2019 = vmatpush1.bf16.xpose.msra.mxu0 0
        %2020 = vmatprep.subr.bf16.mxu0 0
        %2021 = vmatpush1.bf16.xpose.msra.mxu0 0
        %2022 = vmatprep.subr.bf16.mxu0 0
        %2023 = vmatpush1.bf16.xpose.msra.mxu0 0
        %2024 = vmatprep.subr.bf16.mxu0 0
        %2025 = vmatpush1.bf16.xpose.msra.mxu0 0
        %2026 = vmatprep.mubr.bf16.mxu0 0
        %2027 = vmatmul.mubr.bf16.gmra.mrb[0].mxu0 %v1989
        %v2028 = vpop.f32.mrb[0].mxu0
        %v2029 = vadd.f32 %v759, %v2028
        %v2030 = vpop.f32.mrb[0].mxu0
        %v2031 = vpop.f32.mrb[0].mxu0
        %v2032 = vpop.f32.mrb[0].mxu0
        %2033 = vdwg.mxu0
        %2035 = vrot.lane.b32.xlu0 %v1920, 64
        %v2036 = vpop.permute.xlu0 %2035
        %v2038 = vsel %vm923, %v1920, 0
        %v2041 = vsel %vm923, %v2036, 0
        %2043 = vmatprep.subr.bf16.mxu0 0
        %2044 = vmatpush1.bf16.xpose.msra.mxu0 %v2041
        %2045 = vmatprep.subr.bf16.mxu0 0
        %2046 = vmatpush1.bf16.xpose.msra.mxu0 0
        %2047 = vmatprep.subr.bf16.mxu0 0
        %2048 = vmatpush1.bf16.xpose.msra.mxu0 0
        %2049 = vmatprep.subr.bf16.mxu0 0
        %2050 = vmatpush1.bf16.xpose.msra.mxu0 0
        %2051 = vmatprep.subr.bf16.mxu0 0
        %2052 = vmatpush1.bf16.xpose.msra.mxu0 0
        %2053 = vmatprep.subr.bf16.mxu0 0
        %2054 = vmatpush1.bf16.xpose.msra.mxu0 0
        %2055 = vmatprep.subr.bf16.mxu0 0
        %2056 = vmatpush1.bf16.xpose.msra.mxu0 0
        %2057 = vmatprep.subr.bf16.mxu0 0
        %2058 = vmatpush1.bf16.xpose.msra.mxu0 0
        %2059 = vmatprep.subr.bf16.mxu0 0
        %2060 = vmatpush1.bf16.xpose.msra.mxu0 0
        %2061 = vmatprep.subr.bf16.mxu0 0
        %2062 = vmatpush1.bf16.xpose.msra.mxu0 0
        %2063 = vmatprep.subr.bf16.mxu0 0
        %2064 = vmatpush1.bf16.xpose.msra.mxu0 0
        %2065 = vmatprep.subr.bf16.mxu0 0
        %2066 = vmatpush1.bf16.xpose.msra.mxu0 0
        %2067 = vmatprep.subr.bf16.mxu0 0
        %2068 = vmatpush1.bf16.xpose.msra.mxu0 0
        %2069 = vmatprep.subr.bf16.mxu0 0
        %2070 = vmatpush1.bf16.xpose.msra.mxu0 0
        %2071 = vmatprep.subr.bf16.mxu0 0
        %2072 = vmatpush1.bf16.xpose.msra.mxu0 0
        %2073 = vmatprep.subr.bf16.mxu0 0
        %2074 = vmatpush1.bf16.xpose.msra.mxu0 0
        %2075 = vmatprep.mubr.bf16.mxu0 0
        %2076 = vmatmul.mubr.bf16.gmra.mrb[0].mxu0 %v2038
        %v2077 = vpop.f32.mrb[0].mxu0
        %v2078 = vadd.f32 %v759, %v2077
        %v2079 = vpop.f32.mrb[0].mxu0
        %v2080 = vpop.f32.mrb[0].mxu0
        %v2081 = vpop.f32.mrb[0].mxu0
        %2082 = vdwg.mxu0
        %2084 = vrot.lane.b32.xlu0 %v1921, 64
        %v2085 = vpop.permute.xlu0 %2084
        %v2087 = vsel %vm923, %v1921, 0
        %v2090 = vsel %vm923, %v2085, 0
        %2092 = vmatprep.subr.bf16.mxu0 0
        %2093 = vmatpush1.bf16.xpose.msra.mxu0 %v2090
        %2094 = vmatprep.subr.bf16.mxu0 0
        %2095 = vmatpush1.bf16.xpose.msra.mxu0 0
        %2096 = vmatprep.subr.bf16.mxu0 0
        %2097 = vmatpush1.bf16.xpose.msra.mxu0 0
        %2098 = vmatprep.subr.bf16.mxu0 0
        %2099 = vmatpush1.bf16.xpose.msra.mxu0 0
        %2100 = vmatprep.subr.bf16.mxu0 0
        %2101 = vmatpush1.bf16.xpose.msra.mxu0 0
        %2102 = vmatprep.subr.bf16.mxu0 0
        %2103 = vmatpush1.bf16.xpose.msra.mxu0 0
        %2104 = vmatprep.subr.bf16.mxu0 0
        %2105 = vmatpush1.bf16.xpose.msra.mxu0 0
        %2106 = vmatprep.subr.bf16.mxu0 0
        %2107 = vmatpush1.bf16.xpose.msra.mxu0 0
        %2108 = vmatprep.subr.bf16.mxu0 0
        %2109 = vmatpush1.bf16.xpose.msra.mxu0 0
        %2110 = vmatprep.subr.bf16.mxu0 0
        %2111 = vmatpush1.bf16.xpose.msra.mxu0 0
        %2112 = vmatprep.subr.bf16.mxu0 0
        %2113 = vmatpush1.bf16.xpose.msra.mxu0 0
        %2114 = vmatprep.subr.bf16.mxu0 0
        %2115 = vmatpush1.bf16.xpose.msra.mxu0 0
        %2116 = vmatprep.subr.bf16.mxu0 0
        %2117 = vmatpush1.bf16.xpose.msra.mxu0 0
        %2118 = vmatprep.subr.bf16.mxu0 0
        %2119 = vmatpush1.bf16.xpose.msra.mxu0 0
        %2120 = vmatprep.subr.bf16.mxu0 0
        %2121 = vmatpush1.bf16.xpose.msra.mxu0 0
        %2122 = vmatprep.subr.bf16.mxu0 0
        %2123 = vmatpush1.bf16.xpose.msra.mxu0 0
        %2124 = vmatprep.mubr.bf16.mxu0 0
        %2125 = vmatmul.mubr.bf16.gmra.mrb[0].mxu0 %v2087
        %v2126 = vpop.f32.mrb[0].mxu0
        %v2127 = vadd.f32 %v759, %v2126
        %v2128 = vpop.f32.mrb[0].mxu0
        %v2129 = vpop.f32.mrb[0].mxu0
        %v2130 = vpop.f32.mrb[0].mxu0
        %2131 = vdwg.mxu0
        %v2132 = vsel %vm1117, %v1980, -inf
        %2133 = vmax.xlane.f32.xlu0 %v2132
        %v2134 = vpop.xlane.xlu0 %2133
        %v2135 = vsel %vm1117, %v2029, -inf
        %2136 = vmax.xlane.f32.xlu0 %v2135
        %v2137 = vpop.xlane.xlu0 %2136
        %v2138 = vsel %vm1117, %v2078, -inf
        %2139 = vmax.xlane.f32.xlu0 %v2138
        %v2140 = vpop.xlane.xlu0 %2139
        %v2141 = vsel %vm1117, %v2127, -inf
        %2142 = vmax.xlane.f32.xlu0 %v2141
        %v2143 = vpop.xlane.xlu0 %2142
        %v2144 = vsub.f32 %v1980, %v2134
        %v2145 = vsub.f32 %v2029, %v2137
        %v2146 = vsub.f32 %v2078, %v2140
        %v2147 = vsub.f32 %v2127, %v2143
        %v2148 = vmul.f32 %v2144, 1.442695
        %v2149 = vpow.pop %v2148
        %v2150 = vmul.f32 %v2145, 1.442695
        %v2151 = vpow.pop %v2150
        %v2152 = vmul.f32 %v2146, 1.442695
        %v2153 = vpow.pop %v2152
        %v2154 = vmul.f32 %v2147, 1.442695
        %v2155 = vpow.pop %v2154
        %v2156 = vsel %vm1117, %v2149, 0.0
        %2157 = vadd.xlane.f32.xlu0 %v2156
        %v2158 = vpop.xlane.xlu0 %2157
        %v2159 = vsel %vm1117, %v2151, 0.0
        %2160 = vadd.xlane.f32.xlu0 %v2159
        %v2161 = vpop.xlane.xlu0 %2160
        %v2162 = vsel %vm1117, %v2153, 0.0
        %2163 = vadd.xlane.f32.xlu0 %v2162
        %v2164 = vpop.xlane.xlu0 %2163
        %v2165 = vsel %vm1117, %v2155, 0.0
        %2166 = vadd.xlane.f32.xlu0 %v2165
        %v2167 = vpop.xlane.xlu0 %2166
        %v2168 = vrcp.pop %v2158
        %v2169 = vrcp.pop %v2161
        %v2170 = vrcp.pop %v2164
        %v2171 = vrcp.pop %v2167
        %v2172 = vmul.f32 %v2149, %v2168
        %v2173 = vmul.f32 %v2151, %v2169
        %v2174 = vmul.f32 %v2153, %v2170
        %v2175 = vmul.f32 %v2155, %v2171
        %v2176 = vpack.c.bf16 %v2172, %v2172
        %v2177 = vpack.c.bf16 %v2173, %v2173
        %v2178 = vpack.c.bf16 %v2174, %v2174
        %v2179 = vpack.c.bf16 %v2175, %v2175
        %v2181 = vsel %vm1117, %v2176, 0
        %v2184 = vsel %vm1169, %v1932, 0
        %2186 = vmatprep.subr.bf16.mxu0 0
        %2187 = vmatpush1.bf16.msra.mxu0 %v2184
        %2188 = vmatprep.subr.bf16.mxu0 0
        %2189 = vmatpush1.bf16.msra.mxu0 0
        %2190 = vmatprep.subr.bf16.mxu0 0
        %2191 = vmatpush1.bf16.msra.mxu0 0
        %2192 = vmatprep.subr.bf16.mxu0 0
        %2193 = vmatpush1.bf16.msra.mxu0 0
        %2194 = vmatprep.subr.bf16.mxu0 0
        %2195 = vmatpush1.bf16.msra.mxu0 0
        %2196 = vmatprep.subr.bf16.mxu0 0
        %2197 = vmatpush1.bf16.msra.mxu0 0
        %2198 = vmatprep.subr.bf16.mxu0 0
        %2199 = vmatpush1.bf16.msra.mxu0 0
        %2200 = vmatprep.subr.bf16.mxu0 0
        %2201 = vmatpush1.bf16.msra.mxu0 0
        %2202 = vmatprep.subr.bf16.mxu0 0
        %2203 = vmatpush1.bf16.msra.mxu0 0
        %2204 = vmatprep.subr.bf16.mxu0 0
        %2205 = vmatpush1.bf16.msra.mxu0 0
        %2206 = vmatprep.subr.bf16.mxu0 0
        %2207 = vmatpush1.bf16.msra.mxu0 0
        %2208 = vmatprep.subr.bf16.mxu0 0
        %2209 = vmatpush1.bf16.msra.mxu0 0
        %2210 = vmatprep.subr.bf16.mxu0 0
        %2211 = vmatpush1.bf16.msra.mxu0 0
        %2212 = vmatprep.subr.bf16.mxu0 0
        %2213 = vmatpush1.bf16.msra.mxu0 0
        %2214 = vmatprep.subr.bf16.mxu0 0
        %2215 = vmatpush1.bf16.msra.mxu0 0
        %2216 = vmatprep.subr.bf16.mxu0 0
        %2217 = vmatpush1.bf16.msra.mxu0 0
        %2218 = vmatprep.mubr.bf16.mxu0 0
        %2219 = vmatmul.mubr.bf16.gmra.mrb[0].mxu0 %v2181
        %v2220 = vpop.f32.mrb[0].mxu0
        %v2221 = vadd.f32 0.0, %v2220
        %v2222 = vpop.f32.mrb[0].mxu0
        %v2223 = vpop.f32.mrb[0].mxu0
        %v2224 = vpop.f32.mrb[0].mxu0
        %2225 = vdwg.mxu0
        %v2227 = vsel %vm1117, %v2177, 0
        %v2230 = vsel %vm1169, %v1933, 0
        %2232 = vmatprep.subr.bf16.mxu0 0
        %2233 = vmatpush1.bf16.msra.mxu0 %v2230
        %2234 = vmatprep.subr.bf16.mxu0 0
        %2235 = vmatpush1.bf16.msra.mxu0 0
        %2236 = vmatprep.subr.bf16.mxu0 0
        %2237 = vmatpush1.bf16.msra.mxu0 0
        %2238 = vmatprep.subr.bf16.mxu0 0
        %2239 = vmatpush1.bf16.msra.mxu0 0
        %2240 = vmatprep.subr.bf16.mxu0 0
        %2241 = vmatpush1.bf16.msra.mxu0 0
        %2242 = vmatprep.subr.bf16.mxu0 0
        %2243 = vmatpush1.bf16.msra.mxu0 0
        %2244 = vmatprep.subr.bf16.mxu0 0
        %2245 = vmatpush1.bf16.msra.mxu0 0
        %2246 = vmatprep.subr.bf16.mxu0 0
        %2247 = vmatpush1.bf16.msra.mxu0 0
        %2248 = vmatprep.subr.bf16.mxu0 0
        %2249 = vmatpush1.bf16.msra.mxu0 0
        %2250 = vmatprep.subr.bf16.mxu0 0
        %2251 = vmatpush1.bf16.msra.mxu0 0
        %2252 = vmatprep.subr.bf16.mxu0 0
        %2253 = vmatpush1.bf16.msra.mxu0 0
        %2254 = vmatprep.subr.bf16.mxu0 0
        %2255 = vmatpush1.bf16.msra.mxu0 0
        %2256 = vmatprep.subr.bf16.mxu0 0
        %2257 = vmatpush1.bf16.msra.mxu0 0
        %2258 = vmatprep.subr.bf16.mxu0 0
        %2259 = vmatpush1.bf16.msra.mxu0 0
        %2260 = vmatprep.subr.bf16.mxu0 0
        %2261 = vmatpush1.bf16.msra.mxu0 0
        %2262 = vmatprep.subr.bf16.mxu0 0
        %2263 = vmatpush1.bf16.msra.mxu0 0
        %2264 = vmatprep.mubr.bf16.mxu0 0
        %2265 = vmatmul.mubr.bf16.gmra.mrb[0].mxu0 %v2227
        %v2266 = vpop.f32.mrb[0].mxu0
        %v2267 = vadd.f32 0.0, %v2266
        %v2268 = vpop.f32.mrb[0].mxu0
        %v2269 = vpop.f32.mrb[0].mxu0
        %v2270 = vpop.f32.mrb[0].mxu0
        %2271 = vdwg.mxu0
        %v2273 = vsel %vm1117, %v2178, 0
        %v2276 = vsel %vm1169, %v1934, 0
        %2278 = vmatprep.subr.bf16.mxu0 0
        %2279 = vmatpush1.bf16.msra.mxu0 %v2276
        %2280 = vmatprep.subr.bf16.mxu0 0
        %2281 = vmatpush1.bf16.msra.mxu0 0
        %2282 = vmatprep.subr.bf16.mxu0 0
        %2283 = vmatpush1.bf16.msra.mxu0 0
        %2284 = vmatprep.subr.bf16.mxu0 0
        %2285 = vmatpush1.bf16.msra.mxu0 0
        %2286 = vmatprep.subr.bf16.mxu0 0
        %2287 = vmatpush1.bf16.msra.mxu0 0
        %2288 = vmatprep.subr.bf16.mxu0 0
        %2289 = vmatpush1.bf16.msra.mxu0 0
        %2290 = vmatprep.subr.bf16.mxu0 0
        %2291 = vmatpush1.bf16.msra.mxu0 0
        %2292 = vmatprep.subr.bf16.mxu0 0
        %2293 = vmatpush1.bf16.msra.mxu0 0
        %2294 = vmatprep.subr.bf16.mxu0 0
        %2295 = vmatpush1.bf16.msra.mxu0 0
        %2296 = vmatprep.subr.bf16.mxu0 0
        %2297 = vmatpush1.bf16.msra.mxu0 0
        %2298 = vmatprep.subr.bf16.mxu0 0
        %2299 = vmatpush1.bf16.msra.mxu0 0
        %2300 = vmatprep.subr.bf16.mxu0 0
        %2301 = vmatpush1.bf16.msra.mxu0 0
        %2302 = vmatprep.subr.bf16.mxu0 0
        %2303 = vmatpush1.bf16.msra.mxu0 0
        %2304 = vmatprep.subr.bf16.mxu0 0
        %2305 = vmatpush1.bf16.msra.mxu0 0
        %2306 = vmatprep.subr.bf16.mxu0 0
        %2307 = vmatpush1.bf16.msra.mxu0 0
        %2308 = vmatprep.subr.bf16.mxu0 0
        %2309 = vmatpush1.bf16.msra.mxu0 0
        %2310 = vmatprep.mubr.bf16.mxu0 0
        %2311 = vmatmul.mubr.bf16.gmra.mrb[0].mxu0 %v2273
        %v2312 = vpop.f32.mrb[0].mxu0
        %v2313 = vadd.f32 0.0, %v2312
        %v2314 = vpop.f32.mrb[0].mxu0
        %v2315 = vpop.f32.mrb[0].mxu0
        %v2316 = vpop.f32.mrb[0].mxu0
        %2317 = vdwg.mxu0
        %v2319 = vsel %vm1117, %v2179, 0
        %v2322 = vsel %vm1169, %v1935, 0
        %2324 = vmatprep.subr.bf16.mxu0 0
        %2325 = vmatpush1.bf16.msra.mxu0 %v2322
        %2326 = vmatprep.subr.bf16.mxu0 0
        %2327 = vmatpush1.bf16.msra.mxu0 0
        %2328 = vmatprep.subr.bf16.mxu0 0
        %2329 = vmatpush1.bf16.msra.mxu0 0
        %2330 = vmatprep.subr.bf16.mxu0 0
        %2331 = vmatpush1.bf16.msra.mxu0 0
        %2332 = vmatprep.subr.bf16.mxu0 0
        %2333 = vmatpush1.bf16.msra.mxu0 0
        %2334 = vmatprep.subr.bf16.mxu0 0
        %2335 = vmatpush1.bf16.msra.mxu0 0
        %2336 = vmatprep.subr.bf16.mxu0 0
        %2337 = vmatpush1.bf16.msra.mxu0 0
        %2338 = vmatprep.subr.bf16.mxu0 0
        %2339 = vmatpush1.bf16.msra.mxu0 0
        %2340 = vmatprep.subr.bf16.mxu0 0
        %2341 = vmatpush1.bf16.msra.mxu0 0
        %2342 = vmatprep.subr.bf16.mxu0 0
        %2343 = vmatpush1.bf16.msra.mxu0 0
        %2344 = vmatprep.subr.bf16.mxu0 0
        %2345 = vmatpush1.bf16.msra.mxu0 0
        %2346 = vmatprep.subr.bf16.mxu0 0
        %2347 = vmatpush1.bf16.msra.mxu0 0
        %2348 = vmatprep.subr.bf16.mxu0 0
        %2349 = vmatpush1.bf16.msra.mxu0 0
        %2350 = vmatprep.subr.bf16.mxu0 0
        %2351 = vmatpush1.bf16.msra.mxu0 0
        %2352 = vmatprep.subr.bf16.mxu0 0
        %2353 = vmatpush1.bf16.msra.mxu0 0
        %2354 = vmatprep.subr.bf16.mxu0 0
        %2355 = vmatpush1.bf16.msra.mxu0 0
        %2356 = vmatprep.mubr.bf16.mxu0 0
        %2357 = vmatmul.mubr.bf16.gmra.mrb[0].mxu0 %v2319
        %v2358 = vpop.f32.mrb[0].mxu0
        %v2359 = vadd.f32 0.0, %v2358
        %v2360 = vpop.f32.mrb[0].mxu0
        %v2361 = vpop.f32.mrb[0].mxu0
        %v2362 = vpop.f32.mrb[0].mxu0
        %2363 = vdwg.mxu0
        %2365 = vrot.lane.b32.xlu0 %v2267, 16
        %v2366 = vpop.permute.xlu0 %2365
        %2369 = vrot.lane.b32.xlu0 %v2313, 32
        %v2370 = vpop.permute.xlu0 %2369
        %2373 = vrot.lane.b32.xlu0 %v2359, 48
        %v2374 = vpop.permute.xlu0 %2373
        %v2376 = vsel %vm923, %v2221, %v2366
        %v2377 = vsel %vm1364, %v2376, %v2370
        %v2378 = vsel %vm1366, %v2377, %v2374
        %v2379 = vpack.c.bf16 %v2378, %v2378
        %s2380 = scalar_lea.vmem %s8, 32
        %v2381 = vld [vmem:[%s2380] sm:$0xf]
        %v2382 = vld [vmem:[%s2380 + $0x4] sm:$0xf]
        %v2383 = vld [vmem:[%s2380 + $0x8] sm:$0xf]
        %v2384 = vld [vmem:[%s2380 + $0xc] sm:$0xf]
        %v2385 = vld [vmem:[%s2380 + $0x10] sm:$0xf]
        %v2386 = vld [vmem:[%s2380 + $0x14] sm:$0xf]
        %v2387 = vld [vmem:[%s2380 + $0x18] sm:$0xf]
        %v2388 = vld [vmem:[%s2380 + $0x1c] sm:$0xf]
        %v2397 = vunpack.c.l.b16 %v2381
        %v2398 = vunpack.c.l.b16 %v2382
        %v2399 = vunpack.c.l.b16 %v2383
        %v2400 = vunpack.c.l.b16 %v2384
        %v2401 = vunpack.c.l.b16 %v2385
        %v2402 = vunpack.c.l.b16 %v2386
        %v2403 = vunpack.c.l.b16 %v2387
        %v2404 = vunpack.c.l.b16 %v2388
        %v2405 = vpack.c.b16 %v2398, %v2397
        %v2406 = vpack.c.b16 %v2400, %v2399
        %v2407 = vpack.c.b16 %v2402, %v2401
        %v2408 = vpack.c.b16 %v2404, %v2403
        %v2414 = vsel %vm762, %v2379, 0
        %2416 = vmatprep.subr.bf16.mxu0 0
        %2417 = vmatpush1.bf16.msra.mxu0 %v2405
        %2418 = vmatprep.subr.bf16.mxu0 0
        %2419 = vmatpush1.bf16.msra.mxu0 %v2406
        %2420 = vmatprep.subr.bf16.mxu0 0
        %2421 = vmatpush1.bf16.msra.mxu0 %v2407
        %2422 = vmatprep.subr.bf16.mxu0 0
        %2423 = vmatpush1.bf16.msra.mxu0 %v2408
        %2424 = vmatprep.subr.bf16.mxu0 0
        %2425 = vmatpush1.bf16.msra.mxu0 0
        %2426 = vmatprep.subr.bf16.mxu0 0
        %2427 = vmatpush1.bf16.msra.mxu0 0
        %2428 = vmatprep.subr.bf16.mxu0 0
        %2429 = vmatpush1.bf16.msra.mxu0 0
        %2430 = vmatprep.subr.bf16.mxu0 0
        %2431 = vmatpush1.bf16.msra.mxu0 0
        %2432 = vmatprep.subr.bf16.mxu0 0
        %2433 = vmatpush1.bf16.msra.mxu0 0
        %2434 = vmatprep.subr.bf16.mxu0 0
        %2435 = vmatpush1.bf16.msra.mxu0 0
        %2436 = vmatprep.subr.bf16.mxu0 0
        %2437 = vmatpush1.bf16.msra.mxu0 0
        %2438 = vmatprep.subr.bf16.mxu0 0
        %2439 = vmatpush1.bf16.msra.mxu0 0
        %2440 = vmatprep.subr.bf16.mxu0 0
        %2441 = vmatpush1.bf16.msra.mxu0 0
        %2442 = vmatprep.subr.bf16.mxu0 0
        %2443 = vmatpush1.bf16.msra.mxu0 0
        %2444 = vmatprep.subr.bf16.mxu0 0
        %2445 = vmatpush1.bf16.msra.mxu0 0
        %2446 = vmatprep.subr.bf16.mxu0 0
        %2447 = vmatpush1.bf16.msra.mxu0 0
        %2448 = vmatprep.mubr.bf16.mxu0 0
        %2449 = vmatmul.mubr.bf16.gmra.mrb[0].mxu0 %v2414
        %v2450 = vpop.f32.mrb[0].mxu0
        %v2451 = vadd.f32 0.0, %v2450
        %v2452 = vpop.f32.mrb[0].mxu0
        %v2453 = vpop.f32.mrb[0].mxu0
        %v2454 = vpop.f32.mrb[0].mxu0
        %2455 = vdwg.mxu0
        %v2456 = vadd.f32 %v1775, %v2451
        %v2457 = vld [vmem:[%s9 + $0x1] sm:$0x1]
        %v2458 = vlaneseq
        %v2459 = vshrl.u32 %v2458, 7
        %v2460 = vsub.s32 0, %v2459
        %v2461 = vrot.slane %v2457, %v2460
        %v2462 = vadd.f32 %v2456, %v2461
        %v2463 = vld [vmem:[%s10 + $0x1] sm:$0x1]
        %v2464 = vld [vmem:[%s11 + $0x1] sm:$0x1]
        %v2465 = vsel %vm762, %v2462, 0.0
        %2466 = vadd.xlane.f32.xlu0 %v2465
        %v2467 = vpop.xlane.xlu0 %2466
        %v2468 = vmul.f32 %v2467, %v766
        %v2469 = vsub.f32 %v2462, %v2468
        %v2470 = vmul.f32 %v2469, %v2469
        %v2471 = vsel %vm762, %v2470, 0.0
        %2472 = vadd.xlane.f32.xlu0 %v2471
        %v2473 = vpop.xlane.xlu0 %2472
        %v2474 = vmul.f32 %v2473, %v766
        %v2475 = vadd.f32 %v2474, 1e-05
        %v2476 = vrsqrt.pop %v2475
        %v2477 = vmul.f32 %v2469, %v2476
        %v2478 = vlaneseq
        %v2479 = vshrl.u32 %v2478, 7
        %v2480 = vsub.s32 0, %v2479
        %v2481 = vrot.slane %v2463, %v2480
        %v2482 = vmul.f32 %v2477, %v2481
        %v2483 = vlaneseq
        %v2484 = vshrl.u32 %v2483, 7
        %v2485 = vsub.s32 0, %v2484
        %v2486 = vrot.slane %v2464, %v2485
        %v2487 = vadd.f32 %v2482, %v2486
        %v2488 = vpack.c.bf16 %v2487, %v2487
        %s2489 = scalar_lea.vmem %s12, 64
        %v2490 = vld [vmem:[%s2489] sm:$0xff]
        %v2491 = vld [vmem:[%s2489 + $0x8] sm:$0xff]
        %v2492 = vld [vmem:[%s2489 + $0x10] sm:$0xff]
        %v2493 = vld [vmem:[%s2489 + $0x18] sm:$0xff]
        %v2494 = vld [vmem:[%s2489 + $0x20] sm:$0xff]
        %v2495 = vld [vmem:[%s2489 + $0x28] sm:$0xff]
        %v2496 = vld [vmem:[%s2489 + $0x30] sm:$0xff]
        %v2497 = vld [vmem:[%s2489 + $0x38] sm:$0xff]
        %s2498 = scalar_lea.vmem %s13, 1
        %v2499 = vld [vmem:[%s2498] ss:$2 sm:$0x3]
        %v2501 = vlaneseq
        %v2502 = vshrl.u32 %v2501, 7
        %v2503 = vsub.s32 0, %v2502
        %v2504 = vrot.slane %v2499, %v2503
        %v2505 = vlaneseq
        %v2506 = vshrl.u32 %v2505, 7
        %v2507 = vsub.s32 1, %v2506
        %v2508 = vrot.slane %v2499, %v2507
        %v2519 = vunpack.c.l.b16 %v2490
        %v2520 = vunpack.c.h.b16 %v2490
        %v2521 = vunpack.c.l.b16 %v2491
        %v2522 = vunpack.c.h.b16 %v2491
        %v2523 = vunpack.c.l.b16 %v2492
        %v2524 = vunpack.c.h.b16 %v2492
        %v2525 = vunpack.c.l.b16 %v2493
        %v2526 = vunpack.c.h.b16 %v2493
        %v2527 = vunpack.c.l.b16 %v2494
        %v2528 = vunpack.c.h.b16 %v2494
        %v2529 = vunpack.c.l.b16 %v2495
        %v2530 = vunpack.c.h.b16 %v2495
        %v2531 = vunpack.c.l.b16 %v2496
        %v2532 = vunpack.c.h.b16 %v2496
        %v2533 = vunpack.c.l.b16 %v2497
        %v2534 = vunpack.c.h.b16 %v2497
        %v2535 = vpack.c.b16 %v2521, %v2519
        %v2536 = vpack.c.b16 %v2522, %v2520
        %v2537 = vpack.c.b16 %v2525, %v2523
        %v2538 = vpack.c.b16 %v2526, %v2524
        %v2539 = vpack.c.b16 %v2529, %v2527
        %v2540 = vpack.c.b16 %v2530, %v2528
        %v2541 = vpack.c.b16 %v2533, %v2531
        %v2542 = vpack.c.b16 %v2534, %v2532
        %v2552 = vsel %vm762, %v2488, 0
        %2554 = vmatprep.subr.bf16.mxu0 %v2536
        %2555 = vmatpush1.bf16.msra.mxu0 %v2535
        %2556 = vmatprep.subr.bf16.mxu0 %v2538
        %2557 = vmatpush1.bf16.msra.mxu0 %v2537
        %2558 = vmatprep.subr.bf16.mxu0 %v2540
        %2559 = vmatpush1.bf16.msra.mxu0 %v2539
        %2560 = vmatprep.subr.bf16.mxu0 %v2542
        %2561 = vmatpush1.bf16.msra.mxu0 %v2541
        %2562 = vmatprep.subr.bf16.mxu0 0
        %2563 = vmatpush1.bf16.msra.mxu0 0
        %2564 = vmatprep.subr.bf16.mxu0 0
        %2565 = vmatpush1.bf16.msra.mxu0 0
        %2566 = vmatprep.subr.bf16.mxu0 0
        %2567 = vmatpush1.bf16.msra.mxu0 0
        %2568 = vmatprep.subr.bf16.mxu0 0
        %2569 = vmatpush1.bf16.msra.mxu0 0
        %2570 = vmatprep.subr.bf16.mxu0 0
        %2571 = vmatpush1.bf16.msra.mxu0 0
        %2572 = vmatprep.subr.bf16.mxu0 0
        %2573 = vmatpush1.bf16.msra.mxu0 0
        %2574 = vmatprep.subr.bf16.mxu0 0
        %2575 = vmatpush1.bf16.msra.mxu0 0
        %2576 = vmatprep.subr.bf16.mxu0 0
        %2577 = vmatpush1.bf16.msra.mxu0 0
        %2578 = vmatprep.subr.bf16.mxu0 0
        %2579 = vmatpush1.bf16.msra.mxu0 0
        %2580 = vmatprep.subr.bf16.mxu0 0
        %2581 = vmatpush1.bf16.msra.mxu0 0
        %2582 = vmatprep.subr.bf16.mxu0 0
        %2583 = vmatpush1.bf16.msra.mxu0 0
        %2584 = vmatprep.subr.bf16.mxu0 0
        %2585 = vmatpush1.bf16.msra.mxu0 0
        %2586 = vmatprep.mubr.bf16.mxu0 0
        %2587 = vmatmul.mubr.bf16.gmra.mrb[0].mxu0 %v2552
        %v2588 = vpop.f32.mrb[0].mxu0
        %v2589 = vadd.f32 %v2504, %v2588
        %v2590 = vpop.f32.mrb[0].mxu0
        %v2591 = vadd.f32 %v2508, %v2590
        %v2592 = vpop.f32.mrb[0].mxu0
        %v2593 = vpop.f32.mrb[0].mxu0
        %2594 = vdwg.mxu0
        %v2595 = vmul.f32 %v2589, %v2589
        %v2596 = vmul.f32 %v2591, %v2591
        %v2597 = vmul.f32 %v2589, %v2595
        %v2598 = vmul.f32 %v2591, %v2596
        %v2599 = vmul.f32 %v2597, 0.044715
        %v2600 = vmul.f32 %v2598, 0.044715
        %v2601 = vadd.f32 %v2589, %v2599
        %v2602 = vadd.f32 %v2591, %v2600
        %v2603 = vmul.f32 %v2601, 0.7978846
        %v2604 = vmul.f32 %v2602, 0.7978846
        %v2605 = vtanh.pop %v2603
        %v2606 = vtanh.pop %v2604
        %v2607 = vadd.f32 %v2605, 1.0
        %v2608 = vadd.f32 %v2606, 1.0
        %v2609 = vmul.f32 %v2607, 0.5
        %v2610 = vmul.f32 %v2608, 0.5
        %v2611 = vmul.f32 %v2589, %v2609
        %v2612 = vmul.f32 %v2591, %v2610
        %v2613 = vpack.c.bf16 %v2611, %v2611
        %v2614 = vpack.c.bf16 %v2612, %v2612
        %s2615 = scalar_lea.vmem %s14, 128
        %v2616 = vld [vmem:[%s2615] sm:$0xf]
        %v2617 = vld [vmem:[%s2615 + $0x4] sm:$0xf]
        %v2618 = vld [vmem:[%s2615 + $0x8] sm:$0xf]
        %v2619 = vld [vmem:[%s2615 + $0xc] sm:$0xf]
        %v2620 = vld [vmem:[%s2615 + $0x10] sm:$0xf]
        %v2621 = vld [vmem:[%s2615 + $0x14] sm:$0xf]
        %v2622 = vld [vmem:[%s2615 + $0x18] sm:$0xf]
        %v2623 = vld [vmem:[%s2615 + $0x1c] sm:$0xf]
        %v2624 = vld [vmem:[%s2615 + $0x20] sm:$0xf]
        %v2625 = vld [vmem:[%s2615 + $0x24] sm:$0xf]
        %v2626 = vld [vmem:[%s2615 + $0x28] sm:$0xf]
        %v2627 = vld [vmem:[%s2615 + $0x2c] sm:$0xf]
        %v2628 = vld [vmem:[%s2615 + $0x30] sm:$0xf]
        %v2629 = vld [vmem:[%s2615 + $0x34] sm:$0xf]
        %v2630 = vld [vmem:[%s2615 + $0x38] sm:$0xf]
        %v2631 = vld [vmem:[%s2615 + $0x3c] sm:$0xf]
        %v2632 = vld [vmem:[%s2615 + $0x40] sm:$0xf]
        %v2633 = vld [vmem:[%s2615 + $0x44] sm:$0xf]
        %v2634 = vld [vmem:[%s2615 + $0x48] sm:$0xf]
        %v2635 = vld [vmem:[%s2615 + $0x4c] sm:$0xf]
        %v2636 = vld [vmem:[%s2615 + $0x50] sm:$0xf]
        %v2637 = vld [vmem:[%s2615 + $0x54] sm:$0xf]
        %v2638 = vld [vmem:[%s2615 + $0x58] sm:$0xf]
        %v2639 = vld [vmem:[%s2615 + $0x5c] sm:$0xf]
        %v2640 = vld [vmem:[%s2615 + $0x60] sm:$0xf]
        %v2641 = vld [vmem:[%s2615 + $0x64] sm:$0xf]
        %v2642 = vld [vmem:[%s2615 + $0x68] sm:$0xf]
        %v2643 = vld [vmem:[%s2615 + $0x6c] sm:$0xf]
        %v2644 = vld [vmem:[%s2615 + $0x70] sm:$0xf]
        %v2645 = vld [vmem:[%s2615 + $0x74] sm:$0xf]
        %v2646 = vld [vmem:[%s2615 + $0x78] sm:$0xf]
        %v2647 = vld [vmem:[%s2615 + $0x7c] sm:$0xf]
        %v2680 = vunpack.c.l.b16 %v2616
        %v2681 = vunpack.c.l.b16 %v2617
        %v2682 = vunpack.c.l.b16 %v2618
        %v2683 = vunpack.c.l.b16 %v2619
        %v2684 = vunpack.c.l.b16 %v2620
        %v2685 = vunpack.c.l.b16 %v2621
        %v2686 = vunpack.c.l.b16 %v2622
        %v2687 = vunpack.c.l.b16 %v2623
        %v2688 = vunpack.c.l.b16 %v2624
        %v2689 = vunpack.c.l.b16 %v2625
        %v2690 = vunpack.c.l.b16 %v2626
        %v2691 = vunpack.c.l.b16 %v2627
        %v2692 = vunpack.c.l.b16 %v2628
        %v2693 = vunpack.c.l.b16 %v2629
        %v2694 = vunpack.c.l.b16 %v2630
        %v2695 = vunpack.c.l.b16 %v2631
        %v2696 = vunpack.c.l.b16 %v2632
        %v2697 = vunpack.c.l.b16 %v2633
        %v2698 = vunpack.c.l.b16 %v2634
        %v2699 = vunpack.c.l.b16 %v2635
        %v2700 = vunpack.c.l.b16 %v2636
        %v2701 = vunpack.c.l.b16 %v2637
        %v2702 = vunpack.c.l.b16 %v2638
        %v2703 = vunpack.c.l.b16 %v2639
        %v2704 = vunpack.c.l.b16 %v2640
        %v2705 = vunpack.c.l.b16 %v2641
        %v2706 = vunpack.c.l.b16 %v2642
        %v2707 = vunpack.c.l.b16 %v2643
        %v2708 = vunpack.c.l.b16 %v2644
        %v2709 = vunpack.c.l.b16 %v2645
        %v2710 = vunpack.c.l.b16 %v2646
        %v2711 = vunpack.c.l.b16 %v2647
        %v2712 = vpack.c.b16 %v2681, %v2680
        %v2713 = vpack.c.b16 %v2683, %v2682
        %v2714 = vpack.c.b16 %v2685, %v2684
        %v2715 = vpack.c.b16 %v2687, %v2686
        %v2716 = vpack.c.b16 %v2689, %v2688
        %v2717 = vpack.c.b16 %v2691, %v2690
        %v2718 = vpack.c.b16 %v2693, %v2692
        %v2719 = vpack.c.b16 %v2695, %v2694
        %v2720 = vpack.c.b16 %v2697, %v2696
        %v2721 = vpack.c.b16 %v2699, %v2698
        %v2722 = vpack.c.b16 %v2701, %v2700
        %v2723 = vpack.c.b16 %v2703, %v2702
        %v2724 = vpack.c.b16 %v2705, %v2704
        %v2725 = vpack.c.b16 %v2707, %v2706
        %v2726 = vpack.c.b16 %v2709, %v2708
        %v2727 = vpack.c.b16 %v2711, %v2710
        %2744 = vmatprep.subr.bf16.mxu0 0
        %2745 = vmatpush1.bf16.msra.mxu0 %v2712
        %2746 = vmatprep.subr.bf16.mxu0 0
        %2747 = vmatpush1.bf16.msra.mxu0 %v2713
        %2748 = vmatprep.subr.bf16.mxu0 0
        %2749 = vmatpush1.bf16.msra.mxu0 %v2714
        %2750 = vmatprep.subr.bf16.mxu0 0
        %2751 = vmatpush1.bf16.msra.mxu0 %v2715
        %2752 = vmatprep.subr.bf16.mxu0 0
        %2753 = vmatpush1.bf16.msra.mxu0 %v2716
        %2754 = vmatprep.subr.bf16.mxu0 0
        %2755 = vmatpush1.bf16.msra.mxu0 %v2717
        %2756 = vmatprep.subr.bf16.mxu0 0
        %2757 = vmatpush1.bf16.msra.mxu0 %v2718
        %2758 = vmatprep.subr.bf16.mxu0 0
        %2759 = vmatpush1.bf16.msra.mxu0 %v2719
        %2760 = vmatprep.subr.bf16.mxu0 0
        %2761 = vmatpush1.bf16.msra.mxu0 %v2720
        %2762 = vmatprep.subr.bf16.mxu0 0
        %2763 = vmatpush1.bf16.msra.mxu0 %v2721
        %2764 = vmatprep.subr.bf16.mxu0 0
        %2765 = vmatpush1.bf16.msra.mxu0 %v2722
        %2766 = vmatprep.subr.bf16.mxu0 0
        %2767 = vmatpush1.bf16.msra.mxu0 %v2723
        %2768 = vmatprep.subr.bf16.mxu0 0
        %2769 = vmatpush1.bf16.msra.mxu0 %v2724
        %2770 = vmatprep.subr.bf16.mxu0 0
        %2771 = vmatpush1.bf16.msra.mxu0 %v2725
        %2772 = vmatprep.subr.bf16.mxu0 0
        %2773 = vmatpush1.bf16.msra.mxu0 %v2726
        %2774 = vmatprep.subr.bf16.mxu0 0
        %2775 = vmatpush1.bf16.msra.mxu0 %v2727
        %2776 = vmatprep.mubr.bf16.mxu0 %v2614
        %2777 = vmatmul.mubr.bf16.gmra.mrb[0].mxu0 %v2613
        %v2778 = vpop.f32.mrb[0].mxu0
        %v2779 = vadd.f32 0.0, %v2778
        %v2780 = vpop.f32.mrb[0].mxu0
        %v2781 = vpop.f32.mrb[0].mxu0
        %v2782 = vpop.f32.mrb[0].mxu0
        %2783 = vdwg.mxu0
        %v2784 = vadd.f32 %v2462, %v2779
        %v2785 = vld [vmem:[%s15 + $0x1] sm:$0x1]
        %v2786 = vlaneseq
        %v2787 = vshrl.u32 %v2786, 7
        %v2788 = vsub.s32 0, %v2787
        %v2789 = vrot.slane %v2785, %v2788
        %v2790 = vadd.f32 %v2784, %v2789
        %v2791 = vld [vmem:[%s16] sm:$0x1]
        %v2792 = vld [vmem:[%s17] sm:$0x1]
        %v2793 = vsel %vm762, %v2790, 0.0
        %2794 = vadd.xlane.f32.xlu0 %v2793
        %v2795 = vpop.xlane.xlu0 %2794
        %v2796 = vmul.f32 %v2795, %v766
        %v2797 = vsub.f32 %v2790, %v2796
        %v2798 = vmul.f32 %v2797, %v2797
        %v2799 = vsel %vm762, %v2798, 0.0
        %2800 = vadd.xlane.f32.xlu0 %v2799
        %v2801 = vpop.xlane.xlu0 %2800
        %v2802 = vmul.f32 %v2801, %v766
        %v2803 = vadd.f32 %v2802, 1e-05
        %v2804 = vrsqrt.pop %v2803
        %v2805 = vmul.f32 %v2797, %v2804
        %v2807 = vlaneseq
        %v2808 = vshrl.u32 %v2807, 7
        %v2809 = vsub.s32 0, %v2808
        %v2810 = vrot.slane %v2791, %v2809
        %v2812 = vmul.f32 %v2805, %v2810
        %v2814 = vlaneseq
        %v2815 = vshrl.u32 %v2814, 7
        %v2816 = vsub.s32 0, %v2815
        %v2817 = vrot.slane %v2792, %v2816
        %v2819 = vadd.f32 %v2812, %v2817
        %v2820 = vpack.c.bf16 %v2819, %v2819
        %v2821 = vld [vmem:[%s2] sm:$0xff]
        %v2822 = vld [vmem:[%s2 + $0x8] sm:$0xff]
        %v2823 = vld [vmem:[%s2 + $0x10] sm:$0xff]
        %v2824 = vld [vmem:[%s2 + $0x18] sm:$0xff]
        %v2825 = vld [vmem:[%s2 + $0x20] sm:$0xff]
        %v2826 = vld [vmem:[%s2 + $0x28] sm:$0xff]
        %v2827 = vld [vmem:[%s2 + $0x30] sm:$0xff]
        %v2828 = vld [vmem:[%s2 + $0x38] sm:$0xff]
        %v2837 = vunpack.c.l.b16 %v2821
        %v2838 = vunpack.c.h.b16 %v2821
        %v2839 = vunpack.c.l.b16 %v2822
        %v2840 = vunpack.c.h.b16 %v2822
        %v2841 = vunpack.c.l.b16 %v2823
        %v2842 = vunpack.c.h.b16 %v2823
        %v2843 = vunpack.c.l.b16 %v2824
        %v2844 = vunpack.c.h.b16 %v2824
        %v2845 = vunpack.c.l.b16 %v2825
        %v2846 = vunpack.c.h.b16 %v2825
        %v2847 = vunpack.c.l.b16 %v2826
        %v2848 = vunpack.c.h.b16 %v2826
        %v2849 = vunpack.c.l.b16 %v2827
        %v2850 = vunpack.c.h.b16 %v2827
        %v2851 = vunpack.c.l.b16 %v2828
        %v2852 = vunpack.c.h.b16 %v2828
        %v2853 = vpack.c.b16 %v2839, %v2837
        %v2854 = vpack.c.b16 %v2840, %v2838
        %v2855 = vpack.c.b16 %v2843, %v2841
        %v2856 = vpack.c.b16 %v2844, %v2842
        %v2857 = vpack.c.b16 %v2847, %v2845
        %v2858 = vpack.c.b16 %v2848, %v2846
        %v2859 = vpack.c.b16 %v2851, %v2849
        %v2860 = vpack.c.b16 %v2852, %v2850
        %v2870 = vsel %vm762, %v2820, 0
        %2872 = vmatprep.subr.bf16.mxu0 %v2854
        %2873 = vmatpush1.bf16.msra.mxu0 %v2853
        %2874 = vmatprep.subr.bf16.mxu0 %v2856
        %2875 = vmatpush1.bf16.msra.mxu0 %v2855
        %2876 = vmatprep.subr.bf16.mxu0 %v2858
        %2877 = vmatpush1.bf16.msra.mxu0 %v2857
        %2878 = vmatprep.subr.bf16.mxu0 %v2860
        %2879 = vmatpush1.bf16.msra.mxu0 %v2859
        %2880 = vmatprep.subr.bf16.mxu0 0
        %2881 = vmatpush1.bf16.msra.mxu0 0
        %2882 = vmatprep.subr.bf16.mxu0 0
        %2883 = vmatpush1.bf16.msra.mxu0 0
        %2884 = vmatprep.subr.bf16.mxu0 0
        %2885 = vmatpush1.bf16.msra.mxu0 0
        %2886 = vmatprep.subr.bf16.mxu0 0
        %2887 = vmatpush1.bf16.msra.mxu0 0
        %2888 = vmatprep.subr.bf16.mxu0 0
        %2889 = vmatpush1.bf16.msra.mxu0 0
        %2890 = vmatprep.subr.bf16.mxu0 0
        %2891 = vmatpush1.bf16.msra.mxu0 0
        %2892 = vmatprep.subr.bf16.mxu0 0
        %2893 = vmatpush1.bf16.msra.mxu0 0
        %2894 = vmatprep.subr.bf16.mxu0 0
        %2895 = vmatpush1.bf16.msra.mxu0 0
        %2896 = vmatprep.subr.bf16.mxu0 0
        %2897 = vmatpush1.bf16.msra.mxu0 0
        %2898 = vmatprep.subr.bf16.mxu0 0
        %2899 = vmatpush1.bf16.msra.mxu0 0
        %2900 = vmatprep.subr.bf16.mxu0 0
        %2901 = vmatpush1.bf16.msra.mxu0 0
        %2902 = vmatprep.subr.bf16.mxu0 0
        %2903 = vmatpush1.bf16.msra.mxu0 0
        %2904 = vmatprep.mubr.bf16.mxu0 0
        %2905 = vmatmul.mubr.bf16.gmra.mrb[0].mxu0 %v2870
        %v2906 = vpop.f32.mrb[0].mxu0
        %v2907 = vadd.f32 0.0, %v2906
        %v2908 = vpop.f32.mrb[0].mxu0
        %v2909 = vadd.f32 0.0, %v2908
        %v2910 = vpop.f32.mrb[0].mxu0
        %v2911 = vpop.f32.mrb[0].mxu0
        %2912 = vdwg.mxu0
        %2913 = vst [vmem:[%s566] sm:$0xff] %v2907
        %2914 = vst [vmem:[%s566 + $0x8] sm:$0xff] %v2909
        %s2915 = sand.u32 %s423, 1
        %s2916 = scalar_lea.sflag [#allocation3], %s2915
        %s2917 = sand.u32 %s423, 1
        %s2918 = smul.addr %s2917, 16
        %s2919 = scalar_lea.vmem [#allocation2], %s2918
        // Predicated region
        $region93: #{gpt2_forward.1} parent=91 // pred_check
          %p2920 = pneg %p433
        $region94: #{gpt2_forward.1} parent=91 // pred_check_branch
          %2922 = sbr.rel (%p2920) target = $region96
        $region95: #{gpt2_forward.1} parent=91 // pred_region
          %s2924 = ssub.s32 256, 256
          %2925 = vsyncadd %s2916, %s2924
          %s2926 = smul.addr %s32, 2
          %s2927 = smul.addr %s2926, 128
          %s2928 = scalar_lea.hbm %s18, %s2927
          %s2930 = sshll.u32 %s2919, 4
          %s2931 = int_to_ptr.vmem [resolvable:$true] %s2930
          %2933 = dma.vmem_to_hbm [thread:$0]  %s2931, 256, %s2928, %s2916
        $region96: #{gpt2_forward.1} parent=91 // pred_fallthru
          _
      $region92: #{gpt2_forward.1} parent=5 // pred_fallthru
        _
      %p2934 = scmp.le.s32.totalorder 2, %s27
      // Predicated region
      $region97: #{gpt2_forward.1} parent=5 // pred_check
        %p2935 = pneg %p2934
      $region98: #{gpt2_forward.1} parent=5 // pred_check_branch
        %2937 = sbr.rel (%p2935) target = $region100
      $region99: #{gpt2_forward.1} parent=5 // pred_region
        %s2938 = ssub.s32 %s27, 2
        // Predicated region
        $region101: #{gpt2_forward.1} parent=99 // pred_check
          %p2939 = pneg %p439
        $region102: #{gpt2_forward.1} parent=99 // pred_check_branch
          %2941 = sbr.rel (%p2939) target = $region104
        $region103: #{gpt2_forward.1} parent=99 // pred_region
          %s2942 = sand.u32 %s424, 1
          %s2943 = scalar_lea.sflag [#allocation3], %s2942
          %s2944 = sand.u32 %s424, 1
          %s2945 = smul.addr %s2944, 16
          %s2946 = scalar_lea.vmem [#allocation2], %s2945
          %2947 = dma.done %s2943, 256
        $region104: #{gpt2_forward.1} parent=99 // pred_fallthru
          _
      $region100: #{gpt2_forward.1} parent=5 // pred_fallthru
        _
    $region6: #{gpt2_forward.1} parent=1 // loop_footer
      %s31 = sadd.s32 1, %s27
    $region7: #{gpt2_forward.1} parent=1 // loop_footer_branch
      %26 = sbr.rel target = $region3
    $region8: #{gpt2_forward.1} parent=1 // loop_exit
      _
    %2948 = vsyncpa [#allocation3], 1
    %s2949 = scalar_lea.sflag [#allocation3], 1
    %2950 = vsyncpa %s2949, 1

</llo_original>
